<compile_context>
chip_gen: v6e
topology: v6e:2x2x1
jax: 0.10.0
libtpu: 0.0.40
codegen_flags: <defaults>
</compile_context>

<pallas_src>
import functools

import jax
import jax.numpy as jnp
import numpy as np
from jax.experimental import pallas as pl
from jax.experimental.pallas import tpu as pltpu


def _bipartite_attn_kernel(*refs, num_heads, depth, mxu_dtype,
                           approx_recip, write_attn):
    (q_ref, k_ref, v_ref,
     wq_ref, bq_ref, wk_ref, bk_ref, wv_ref, bv_ref,
     wfc_ref, bfc_ref, ln_g_ref, ln_b_ref) = refs[:13]
    n_out = 2 if write_attn else 1
    ua_ref = refs[13]
    attn_ref = refs[14] if write_attn else None
    qh_s, kh_s, vh_s = refs[13 + n_out:]

    H, d = num_heads, depth
    S, E = q_ref.shape                      # squeezed full-sequence block
    T = v_ref.shape[0]                      # this step's score-row tile
    r = pl.program_id(1)

    # ---- once per batch (r is "arbitrary"): project + head-split Q and K
    #      into VMEM scratch; later row tiles of this batch reuse them. ----
    @pl.when(r == 0)
    def _():
        q_all = q_ref[...].astype(mxu_dtype)            # (S, E), loaded once
        k_all = k_ref[...].astype(mxu_dtype)
        for h in range(H):                              # unrolled, H is small
            qh = jnp.dot(q_all, wq_ref[h],
                         preferred_element_type=jnp.float32) + bq_ref[h]
            kh = jnp.dot(k_all, wk_ref[h],
                         preferred_element_type=jnp.float32) + bk_ref[h]
            qh_s[h] = qh.astype(qh_s.dtype)
            kh_s[h] = kh.astype(kh_s.dtype)

    # ---- per tile: project this tile's V rows (no (H,T,E) broadcast). ----
    v_rows = v_ref[...].astype(mxu_dtype)               # (T, E)
    for h in range(H):
        vh = jnp.dot(v_rows, wv_ref[h],
                     preferred_element_type=jnp.float32) + bv_ref[h]
        vh_s[h] = vh.astype(vh_s.dtype)

    Qh = qh_s[...]                                      # (H, S, d)
    Kh = kh_s[...]                                      # (H, S, d)
    Vh = vh_s[...]                                      # (H, T, d)

    # NOTE the argument swap in the reference code: scores use V as the
    # "query" and the output aggregates Q as the "value".
    dn_scores = (((2,), (2,)), ((0,), (0,)))   # (H,T,d) x (H,S,d) -> (H,T,S)
    scores = jax.lax.dot_general(Vh, Kh, dn_scores,
                                 preferred_element_type=jnp.float32)
    scores = scores * jnp.float32(1.0 / np.sqrt(d))

    m = jnp.max(scores, axis=-1, keepdims=True)
    e = jnp.exp(scores - m)
    denom = jnp.sum(e, axis=-1, keepdims=True)
    probs = e * pl.reciprocal(denom, approx=approx_recip)   # EUP slot
    if write_attn:
        attn_ref[...] = probs.astype(attn_ref.dtype)        # (H, T, S) block

    dn_ctx = (((2,), (1,)), ((0,), (0,)))      # (H,T,S) x (H,S,d) -> (H,T,d)
    ctx = jax.lax.dot_general(probs.astype(mxu_dtype), Qh, dn_ctx,
                              preferred_element_type=jnp.float32)

    # fc(concat_h ctx_h) == sum_h ctx_h @ wfc[h*d:(h+1)*d, :]  (no concat).
    # TODO(synk): a single (T,D)@(D,D) fc would fill the MXU depth better but
    #             needs a (H,T,d)->(T,D) in-kernel relayout; fc is a minor
    #             FLOPs term next to the S^2 attention matmuls.
    dn_fc = (((2,), (1,)), ((0,), (0,)))       # (H,T,d) x (H,d,D) -> (H,T,D)
    out_h = jax.lax.dot_general(ctx.astype(mxu_dtype), wfc_ref[...], dn_fc,
                                preferred_element_type=jnp.float32)
    out = jnp.sum(out_h, axis=0) + bfc_ref[...]             # (T, D)

    # Residual rows for this tile + LayerNorm (biased variance, eps = 1e-5).
    if T == S:
        q_rows = q_ref[...]
    else:
        start = pl.multiple_of(r * T, T)
        q_rows = q_ref[pl.ds(start, T), :]
    resid = q_rows.astype(jnp.float32) + out
    mean = jnp.mean(resid, axis=-1, keepdims=True)
    var = jnp.mean(jnp.square(resid - mean), axis=-1, keepdims=True)
    normed = (resid - mean) * jax.lax.rsqrt(var + 1e-5)
    ua_ref[...] = (normed * ln_g_ref[...] + ln_b_ref[...]).astype(ua_ref.dtype)


def _pick_vmem_limit():
    """~48 MiB on v7x (64 MiB physical), ~96-100 MiB on v5e/v6e (128 MiB)."""
    try:
        cap = pltpu.get_tpu_info().vmem_capacity_bytes
    except Exception:
        cap = 64 * 1024 * 1024
    return int(max(32 * 1024 * 1024, min((cap * 3) // 4, 100 * 1024 * 1024)))


def bipartite_attention(query, key, value, params, *, num_heads,
                        mxu_dtype=jnp.float32, return_attn=True,
                        attn_dtype=jnp.float32):
    B, S, E = query.shape
    D = params["wq_t"].shape[1]
    assert D % num_heads == 0
    depth = D // num_heads
    assert E == D, "residual (query + attn) requires d_embed == d_model"

    # Row tile over the score-row axis; softmax reduces over the key axis so
    # row tiling is safe.  Prefer 256, fall back to 128, then whole-S.
    # TODO(synk): pad S to a multiple of 128 before relying on this at scale.
    if S % 256 == 0:
        T = 256
    elif S % 128 == 0:
        T = 128
    else:
        T = S
    R = S // T

    # Host-side, one-time: head-major weight split + cast to the MXU operand
    # dtype at the HBM boundary (bf16 path halves weight DMA/VMEM residency).
    def head_split(w):   # (E, D) -> (H, E, depth)
        return jnp.transpose(w.reshape(E, num_heads, depth),
                             (1, 0, 2)).astype(mxu_dtype)

    def bias_split(b):   # (1, D) -> (H, 1, depth), kept f32
        return jnp.transpose(b.reshape(1, num_heads, depth), (1, 0, 2))

    wq_h = head_split(params["wq_t"])
    wk_h = head_split(params["wk_t"])
    wv_h = head_split(params["wv_t"])
    bq_h = bias_split(params["bq"])
    bk_h = bias_split(params["bk"])
    bv_h = bias_split(params["bv"])
    wfc_h = params["wfc_t"].reshape(num_heads, depth, D).astype(mxu_dtype)

    approx_recip = bool(np.dtype(mxu_dtype) != np.dtype(jnp.float32))
    kernel = functools.partial(
        _bipartite_attn_kernel, num_heads=num_heads, depth=depth,
        mxu_dtype=mxu_dtype, approx_recip=approx_recip, write_attn=return_attn)

    full_seq = pl.BlockSpec((None, S, E), lambda b, r: (b, 0, 0))
    row_seq = pl.BlockSpec((None, T, E), lambda b, r: (b, r, 0))

    def whole(shape):
        zeros = (0,) * len(shape)
        return pl.BlockSpec(shape, lambda b, r: zeros)

    out_shapes = [jax.ShapeDtypeStruct((B, S, D), jnp.float32)]           # u_a
    out_specs = [pl.BlockSpec((None, T, D), lambda b, r: (b, r, 0))]
    if return_attn:
        out_shapes.append(jax.ShapeDtypeStruct((B, num_heads, S, S),
                                               attn_dtype))               # probs
        out_specs.append(
            pl.BlockSpec((None, num_heads, T, S), lambda b, r: (b, 0, r, 0)))

    # Advisory cost estimate (no Q/K recompute term any more).
    mxu_bytes = np.dtype(mxu_dtype).itemsize
    flops = int(B * (6 * S * E * D + 4 * S * S * D + 2 * S * D * D))
    transcendentals = int(B * (num_heads * S * S + num_heads * S + S))
    bytes_accessed = int(
        4 * B * (3 * S * E + S * D)
        + mxu_bytes * (3 * E * D + D * D) + 4 * 6 * D
        + (B * num_heads * S * S * np.dtype(attn_dtype).itemsize
           if return_attn else 0))

    results = pl.pallas_call(
        kernel,
        out_shape=out_shapes,
        grid_spec=pltpu.PrefetchScalarGridSpec(
            num_scalar_prefetch=0,
            grid=(B, R),
            in_specs=[
                full_seq, full_seq, row_seq,                         # q, k, v
                whole((num_heads, E, depth)), whole((num_heads, 1, depth)),
                whole((num_heads, E, depth)), whole((num_heads, 1, depth)),
                whole((num_heads, E, depth)), whole((num_heads, 1, depth)),
                whole((num_heads, depth, D)), whole((1, D)),         # fc
                whole((1, D)), whole((1, D)),                        # layernorm
            ],
            out_specs=out_specs,
            scratch_shapes=[
                pltpu.VMEM((num_heads, S, depth), mxu_dtype),   # Qh cache
                pltpu.VMEM((num_heads, S, depth), mxu_dtype),   # Kh cache
                pltpu.VMEM((num_heads, T, depth), mxu_dtype),   # Vh staging
            ]),
        compiler_params=pltpu.CompilerParams(
            # batch carries the megacore split; r carries the per-batch Q/K
            # cache so it must stay sequential ("arbitrary").
            dimension_semantics=("parallel", "arbitrary"),
            vmem_limit_bytes=_pick_vmem_limit()),
        cost_estimate=pl.CostEstimate(flops=flops,
                                      transcendentals=transcendentals,
                                      bytes_accessed=bytes_accessed),
    )(query, key, value,
      wq_h, bq_h, wk_h, bk_h, wv_h, bv_h,
      wfc_h, params["bfc"], params["ln_g"], params["ln_b"])

    u_a = results[0]
    attn_w = results[1] if return_attn else None
    return u_a, attn_w


def _reference(query, key, value, params, *, num_heads):
    """Pure-JAX reference mirroring the PyTorch semantics (for validation)."""
    B, S, E = query.shape
    D = params["wq_t"].shape[1]
    depth = D // num_heads

    Q = query @ params["wq_t"] + params["bq"]
    K = key @ params["wk_t"] + params["bk"]
    V = value @ params["wv_t"] + params["bv"]

    def split(x):  # (B, S, D) -> (B, H, S, depth)
        return x.reshape(B, S, num_heads, depth).transpose(0, 2, 1, 3)

    Qh, Kh, Vh = split(Q), split(K), split(V)
    scores = jnp.einsum("bhqd,bhkd->bhqk", Vh, Kh) / np.sqrt(depth)
    prob = jax.nn.softmax(scores, axis=-1)
    ctx = jnp.einsum("bhqk,bhkd->bhqd", prob, Qh)
    ctx = ctx.transpose(0, 2, 1, 3).reshape(B, S, D)
    out = ctx @ params["wfc_t"] + params["bfc"]

    resid = query + out
    mean = jnp.mean(resid, axis=-1, keepdims=True)
    var = jnp.mean((resid - mean) ** 2, axis=-1, keepdims=True)
    u_a = (resid - mean) / jnp.sqrt(var + 1e-5) * params["ln_g"] + params["ln_b"]
    return u_a, prob


def init_params(key, d_embed, d_model):
    """Deterministic init mimicking nn.Linear defaults (U(-1/sqrt(in), 1/sqrt(in)))."""
    ks = jax.random.split(key, 8)
    bound = 1.0 / np.sqrt(d_embed)
    bound_fc = 1.0 / np.sqrt(d_model)

    def u(k, shape, b):
        return jax.random.uniform(k, shape, jnp.float32, minval=-b, maxval=b)

    return {
        "wq_t": u(ks[0], (d_embed, d_model), bound),
        "bq": u(ks[1], (1, d_model), bound),
        "wk_t": u(ks[2], (d_embed, d_model), bound),
        "bk": u(ks[3], (1, d_model), bound),
        "wv_t": u(ks[4], (d_embed, d_model), bound),
        "bv": u(ks[5], (1, d_model), bound),
        "wfc_t": u(ks[6], (d_model, d_model), bound_fc),
        "bfc": u(ks[7], (1, d_model), bound_fc),
        "ln_g": jnp.ones((1, d_model), jnp.float32),
        "ln_b": jnp.zeros((1, d_model), jnp.float32),
    }


if __name__ == "__main__":
    B, S = 2, 8
    d_model = d_embed = 32
    num_heads = 4

    root = jax.random.PRNGKey(0)
    k_q, k_k, k_v, k_p = jax.random.split(root, 4)
    query = jax.random.normal(k_q, (B, S, d_embed), jnp.float32)
    key = jax.random.normal(k_k, (B, S, d_embed), jnp.float32)
    value = jax.random.normal(k_v, (B, S, d_embed), jnp.float32)
    params = init_params(k_p, d_embed, d_model)

    ref_u, ref_w = _reference(query, key, value, params, num_heads=num_heads)

    # 1) f32 MXU operands + exact reciprocal: strict validation path.
    u_a, attn_w = bipartite_attention(query, key, value, params,
                                      num_heads=num_heads)
    jax.block_until_ready((u_a, attn_w))
    np.testing.assert_allclose(np.asarray(u_a), np.asarray(ref_u),
                               rtol=1e-5, atol=1e-5)
    np.testing.assert_allclose(np.asarray(attn_w), np.asarray(ref_w),
                               rtol=1e-5, atol=1e-5)

    # 2) Production option: skip the (B,H,S,S) attention-probs output/writeback.
    u_na, attn_none = bipartite_attention(query, key, value, params,
                                          num_heads=num_heads,
                                          return_attn=False)
    jax.block_until_ready(u_na)
    assert attn_none is None
    np.testing.assert_allclose(np.asarray(u_na), np.asarray(ref_u),
                               rtol=1e-5, atol=1e-5)

    # 3) bf16 MXU operands (weights pre-cast in the wrapper), f32 accumulation,
    #    approx reciprocal: throughput path, loose-tolerance smoke test.
    u_b, attn_b = bipartite_attention(query, key, value, params,
                                      num_heads=num_heads,
                                      mxu_dtype=jnp.bfloat16)
    jax.block_until_ready((u_b, attn_b))
    np.testing.assert_allclose(np.asarray(u_b), np.asarray(ref_u),
                               rtol=0.0, atol=0.2)
    np.testing.assert_allclose(np.asarray(attn_b), np.asarray(ref_w),
                               rtol=0.0, atol=0.1)
    print("KERNEL_OK")
</pallas_src>

<mosaic_0001>
module attributes {stable_mosaic.version = 11 : i64} {
  func.func @_bipartite_attn_kernel(%arg0: i32, %arg1: i32, %arg2: memref<1x8x32xf32, #tpu.memory_space<vmem>>, %arg3: memref<1x8x32xf32, #tpu.memory_space<vmem>>, %arg4: memref<1x8x32xf32, #tpu.memory_space<vmem>>, %arg5: memref<4x32x8xf32, #tpu.memory_space<vmem>>, %arg6: memref<4x1x8xf32, #tpu.memory_space<vmem>>, %arg7: memref<4x32x8xf32, #tpu.memory_space<vmem>>, %arg8: memref<4x1x8xf32, #tpu.memory_space<vmem>>, %arg9: memref<4x32x8xf32, #tpu.memory_space<vmem>>, %arg10: memref<4x1x8xf32, #tpu.memory_space<vmem>>, %arg11: memref<4x8x32xf32, #tpu.memory_space<vmem>>, %arg12: memref<1x32xf32, #tpu.memory_space<vmem>>, %arg13: memref<1x32xf32, #tpu.memory_space<vmem>>, %arg14: memref<1x32xf32, #tpu.memory_space<vmem>>, %arg15: memref<1x8x32xf32, #tpu.memory_space<vmem>>, %arg16: memref<1x4x8x8xf32, #tpu.memory_space<vmem>>, %arg17: memref<4x8x8xf32, #tpu.memory_space<vmem>>, %arg18: memref<4x8x8xf32, #tpu.memory_space<vmem>>, %arg19: memref<4x8x8xf32, #tpu.memory_space<vmem>>) attributes {dimension_semantics = [#tpu.dimension_semantics<parallel>, #tpu.dimension_semantics<arbitrary>], iteration_bounds = array<i64: 2, 1>, scalar_prefetch = 0 : i64, scratch_operands = 3 : i64, tpu.core_type = #tpu.core_type<tc>, window_params = [{transform_indices = @transform_0, window_bounds = array<i64: 1, 8, 32>}, {transform_indices = @transform_1, window_bounds = array<i64: 1, 8, 32>}, {transform_indices = @transform_2, window_bounds = array<i64: 1, 8, 32>}, {pipeline_mode = #tpu.pipeline_mode<synchronous>, transform_indices = @transform_3, window_bounds = array<i64: 4, 32, 8>}, {pipeline_mode = #tpu.pipeline_mode<synchronous>, transform_indices = @transform_4, window_bounds = array<i64: 4, 1, 8>}, {pipeline_mode = #tpu.pipeline_mode<synchronous>, transform_indices = @transform_5, window_bounds = array<i64: 4, 32, 8>}, {pipeline_mode = #tpu.pipeline_mode<synchronous>, transform_indices = @transform_6, window_bounds = array<i64: 4, 1, 8>}, {pipeline_mode = #tpu.pipeline_mode<synchronous>, transform_indices = @transform_7, window_bounds = array<i64: 4, 32, 8>}, {pipeline_mode = #tpu.pipeline_mode<synchronous>, transform_indices = @transform_8, window_bounds = array<i64: 4, 1, 8>}, {pipeline_mode = #tpu.pipeline_mode<synchronous>, transform_indices = @transform_9, window_bounds = array<i64: 4, 8, 32>}, {pipeline_mode = #tpu.pipeline_mode<synchronous>, transform_indices = @transform_10, window_bounds = array<i64: 1, 32>}, {pipeline_mode = #tpu.pipeline_mode<synchronous>, transform_indices = @transform_11, window_bounds = array<i64: 1, 32>}, {pipeline_mode = #tpu.pipeline_mode<synchronous>, transform_indices = @transform_12, window_bounds = array<i64: 1, 32>}, {transform_indices = @transform_13, window_bounds = array<i64: 1, 8, 32>}, {transform_indices = @transform_14, window_bounds = array<i64: 1, 4, 8, 8>}]} {
    %c0_i32 = arith.constant 0 : i32
    %0 = arith.cmpi eq, %arg1, %c0_i32 : i32
    %1 = arith.extui %0 : i1 to i32
    %c0_i32_0 = arith.constant 0 : i32
    %2 = arith.cmpi ne, %1, %c0_i32_0 : i32
    scf.if %2 {
      %c0_79 = arith.constant 0 : index
      %c0_80 = arith.constant 0 : index
      %c0_81 = arith.constant 0 : index
      %101 = vector.load %arg2[%c0_79, %c0_80, %c0_81] : memref<1x8x32xf32, #tpu.memory_space<vmem>>, vector<1x8x32xf32>
      %102 = vector.shape_cast %101 : vector<1x8x32xf32> to vector<8x32xf32>
      %c0_82 = arith.constant 0 : index
      %c0_83 = arith.constant 0 : index
      %c0_84 = arith.constant 0 : index
      %103 = vector.load %arg3[%c0_82, %c0_83, %c0_84] : memref<1x8x32xf32, #tpu.memory_space<vmem>>, vector<1x8x32xf32>
      %104 = vector.shape_cast %103 : vector<1x8x32xf32> to vector<8x32xf32>
      %c0_85 = arith.constant 0 : index
      %c0_86 = arith.constant 0 : index
      %c0_87 = arith.constant 0 : index
      %105 = vector.load %arg5[%c0_85, %c0_86, %c0_87] : memref<4x32x8xf32, #tpu.memory_space<vmem>>, vector<1x32x8xf32>
      %106 = vector.shape_cast %105 : vector<1x32x8xf32> to vector<32x8xf32>
      %cst_88 = arith.constant dense<0.000000e+00> : vector<8x8xf32>
      %107 = tpu.matmul %102, %106, %cst_88 {dimension_numbers = #tpu.dot_dimension_numbers<[1], [0], [0], [1], [0, 0, 1, 1], [], []>} : vector<8x32xf32>, vector<32x8xf32>, vector<8x8xf32> -> vector<8x8xf32>
      %c0_89 = arith.constant 0 : index
      %c0_90 = arith.constant 0 : index
      %c0_91 = arith.constant 0 : index
      %108 = vector.load %arg6[%c0_89, %c0_90, %c0_91] : memref<4x1x8xf32, #tpu.memory_space<vmem>>, vector<1x1x8xf32>
      %109 = vector.shape_cast %108 : vector<1x1x8xf32> to vector<1x8xf32>
      %110 = vector.broadcast %109 : vector<1x8xf32> to vector<8x8xf32>
      %111 = arith.addf %107, %110 : vector<8x8xf32>
      %c0_92 = arith.constant 0 : index
      %c0_93 = arith.constant 0 : index
      %c0_94 = arith.constant 0 : index
      %112 = vector.load %arg7[%c0_92, %c0_93, %c0_94] : memref<4x32x8xf32, #tpu.memory_space<vmem>>, vector<1x32x8xf32>
      %113 = vector.shape_cast %112 : vector<1x32x8xf32> to vector<32x8xf32>
      %cst_95 = arith.constant dense<0.000000e+00> : vector<8x8xf32>
      %114 = tpu.matmul %104, %113, %cst_95 {dimension_numbers = #tpu.dot_dimension_numbers<[1], [0], [0], [1], [0, 0, 1, 1], [], []>} : vector<8x32xf32>, vector<32x8xf32>, vector<8x8xf32> -> vector<8x8xf32>
      %c0_96 = arith.constant 0 : index
      %c0_97 = arith.constant 0 : index
      %c0_98 = arith.constant 0 : index
      %115 = vector.load %arg8[%c0_96, %c0_97, %c0_98] : memref<4x1x8xf32, #tpu.memory_space<vmem>>, vector<1x1x8xf32>
      %116 = vector.shape_cast %115 : vector<1x1x8xf32> to vector<1x8xf32>
      %117 = vector.broadcast %116 : vector<1x8xf32> to vector<8x8xf32>
      %118 = arith.addf %114, %117 : vector<8x8xf32>
      %c0_99 = arith.constant 0 : index
      %c0_100 = arith.constant 0 : index
      %c0_101 = arith.constant 0 : index
      %119 = vector.load %arg17[%c0_99, %c0_100, %c0_101] : memref<4x8x8xf32, #tpu.memory_space<vmem>>, vector<1x8x8xf32>
      %120 = vector.shape_cast %119 : vector<1x8x8xf32> to vector<8x8xf32>
      %121 = vector.shape_cast %111 : vector<8x8xf32> to vector<1x8x8xf32>
      tpu.vector_store %arg17[%c0_99, %c0_100, %c0_101], %121 {strides = array<i32>} : memref<4x8x8xf32, #tpu.memory_space<vmem>>, vector<1x8x8xf32>,
      %c0_102 = arith.constant 0 : index
      %c0_103 = arith.constant 0 : index
      %c0_104 = arith.constant 0 : index
      %122 = vector.load %arg18[%c0_102, %c0_103, %c0_104] : memref<4x8x8xf32, #tpu.memory_space<vmem>>, vector<1x8x8xf32>
      %123 = vector.shape_cast %122 : vector<1x8x8xf32> to vector<8x8xf32>
      %124 = vector.shape_cast %118 : vector<8x8xf32> to vector<1x8x8xf32>
      tpu.vector_store %arg18[%c0_102, %c0_103, %c0_104], %124 {strides = array<i32>} : memref<4x8x8xf32, #tpu.memory_space<vmem>>, vector<1x8x8xf32>,
      %c1_105 = arith.constant 1 : index
      %c0_106 = arith.constant 0 : index
      %c0_107 = arith.constant 0 : index
      %125 = vector.load %arg5[%c1_105, %c0_106, %c0_107] : memref<4x32x8xf32, #tpu.memory_space<vmem>>, vector<1x32x8xf32>
      %126 = vector.shape_cast %125 : vector<1x32x8xf32> to vector<32x8xf32>
      %cst_108 = arith.constant dense<0.000000e+00> : vector<8x8xf32>
      %127 = tpu.matmul %102, %126, %cst_108 {dimension_numbers = #tpu.dot_dimension_numbers<[1], [0], [0], [1], [0, 0, 1, 1], [], []>} : vector<8x32xf32>, vector<32x8xf32>, vector<8x8xf32> -> vector<8x8xf32>
      %c1_109 = arith.constant 1 : index
      %c0_110 = arith.constant 0 : index
      %c0_111 = arith.constant 0 : index
      %128 = vector.load %arg6[%c1_109, %c0_110, %c0_111] : memref<4x1x8xf32, #tpu.memory_space<vmem>>, vector<1x1x8xf32>
      %129 = vector.shape_cast %128 : vector<1x1x8xf32> to vector<1x8xf32>
      %130 = vector.broadcast %129 : vector<1x8xf32> to vector<8x8xf32>
      %131 = arith.addf %127, %130 : vector<8x8xf32>
      %c1_112 = arith.constant 1 : index
      %c0_113 = arith.constant 0 : index
      %c0_114 = arith.constant 0 : index
      %132 = vector.load %arg7[%c1_112, %c0_113, %c0_114] : memref<4x32x8xf32, #tpu.memory_space<vmem>>, vector<1x32x8xf32>
      %133 = vector.shape_cast %132 : vector<1x32x8xf32> to vector<32x8xf32>
      %cst_115 = arith.constant dense<0.000000e+00> : vector<8x8xf32>
      %134 = tpu.matmul %104, %133, %cst_115 {dimension_numbers = #tpu.dot_dimension_numbers<[1], [0], [0], [1], [0, 0, 1, 1], [], []>} : vector<8x32xf32>, vector<32x8xf32>, vector<8x8xf32> -> vector<8x8xf32>
      %c1_116 = arith.constant 1 : index
      %c0_117 = arith.constant 0 : index
      %c0_118 = arith.constant 0 : index
      %135 = vector.load %arg8[%c1_116, %c0_117, %c0_118] : memref<4x1x8xf32, #tpu.memory_space<vmem>>, vector<1x1x8xf32>
      %136 = vector.shape_cast %135 : vector<1x1x8xf32> to vector<1x8xf32>
      %137 = vector.broadcast %136 : vector<1x8xf32> to vector<8x8xf32>
      %138 = arith.addf %134, %137 : vector<8x8xf32>
      %c1_119 = arith.constant 1 : index
      %c0_120 = arith.constant 0 : index
      %c0_121 = arith.constant 0 : index
      %139 = vector.load %arg17[%c1_119, %c0_120, %c0_121] : memref<4x8x8xf32, #tpu.memory_space<vmem>>, vector<1x8x8xf32>
      %140 = vector.shape_cast %139 : vector<1x8x8xf32> to vector<8x8xf32>
      %141 = vector.shape_cast %131 : vector<8x8xf32> to vector<1x8x8xf32>
      tpu.vector_store %arg17[%c1_119, %c0_120, %c0_121], %141 {strides = array<i32>} : memref<4x8x8xf32, #tpu.memory_space<vmem>>, vector<1x8x8xf32>,
      %c1_122 = arith.constant 1 : index
      %c0_123 = arith.constant 0 : index
      %c0_124 = arith.constant 0 : index
      %142 = vector.load %arg18[%c1_122, %c0_123, %c0_124] : memref<4x8x8xf32, #tpu.memory_space<vmem>>, vector<1x8x8xf32>
      %143 = vector.shape_cast %142 : vector<1x8x8xf32> to vector<8x8xf32>
      %144 = vector.shape_cast %138 : vector<8x8xf32> to vector<1x8x8xf32>
      tpu.vector_store %arg18[%c1_122, %c0_123, %c0_124], %144 {strides = array<i32>} : memref<4x8x8xf32, #tpu.memory_space<vmem>>, vector<1x8x8xf32>,
      %c2_125 = arith.constant 2 : index
      %c0_126 = arith.constant 0 : index
      %c0_127 = arith.constant 0 : index
      %145 = vector.load %arg5[%c2_125, %c0_126, %c0_127] : memref<4x32x8xf32, #tpu.memory_space<vmem>>, vector<1x32x8xf32>
      %146 = vector.shape_cast %145 : vector<1x32x8xf32> to vector<32x8xf32>
      %cst_128 = arith.constant dense<0.000000e+00> : vector<8x8xf32>
      %147 = tpu.matmul %102, %146, %cst_128 {dimension_numbers = #tpu.dot_dimension_numbers<[1], [0], [0], [1], [0, 0, 1, 1], [], []>} : vector<8x32xf32>, vector<32x8xf32>, vector<8x8xf32> -> vector<8x8xf32>
      %c2_129 = arith.constant 2 : index
      %c0_130 = arith.constant 0 : index
      %c0_131 = arith.constant 0 : index
      %148 = vector.load %arg6[%c2_129, %c0_130, %c0_131] : memref<4x1x8xf32, #tpu.memory_space<vmem>>, vector<1x1x8xf32>
      %149 = vector.shape_cast %148 : vector<1x1x8xf32> to vector<1x8xf32>
      %150 = vector.broadcast %149 : vector<1x8xf32> to vector<8x8xf32>
      %151 = arith.addf %147, %150 : vector<8x8xf32>
      %c2_132 = arith.constant 2 : index
      %c0_133 = arith.constant 0 : index
      %c0_134 = arith.constant 0 : index
      %152 = vector.load %arg7[%c2_132, %c0_133, %c0_134] : memref<4x32x8xf32, #tpu.memory_space<vmem>>, vector<1x32x8xf32>
      %153 = vector.shape_cast %152 : vector<1x32x8xf32> to vector<32x8xf32>
      %cst_135 = arith.constant dense<0.000000e+00> : vector<8x8xf32>
      %154 = tpu.matmul %104, %153, %cst_135 {dimension_numbers = #tpu.dot_dimension_numbers<[1], [0], [0], [1], [0, 0, 1, 1], [], []>} : vector<8x32xf32>, vector<32x8xf32>, vector<8x8xf32> -> vector<8x8xf32>
      %c2_136 = arith.constant 2 : index
      %c0_137 = arith.constant 0 : index
      %c0_138 = arith.constant 0 : index
      %155 = vector.load %arg8[%c2_136, %c0_137, %c0_138] : memref<4x1x8xf32, #tpu.memory_space<vmem>>, vector<1x1x8xf32>
      %156 = vector.shape_cast %155 : vector<1x1x8xf32> to vector<1x8xf32>
      %157 = vector.broadcast %156 : vector<1x8xf32> to vector<8x8xf32>
      %158 = arith.addf %154, %157 : vector<8x8xf32>
      %c2_139 = arith.constant 2 : index
      %c0_140 = arith.constant 0 : index
      %c0_141 = arith.constant 0 : index
      %159 = vector.load %arg17[%c2_139, %c0_140, %c0_141] : memref<4x8x8xf32, #tpu.memory_space<vmem>>, vector<1x8x8xf32>
      %160 = vector.shape_cast %159 : vector<1x8x8xf32> to vector<8x8xf32>
      %161 = vector.shape_cast %151 : vector<8x8xf32> to vector<1x8x8xf32>
      tpu.vector_store %arg17[%c2_139, %c0_140, %c0_141], %161 {strides = array<i32>} : memref<4x8x8xf32, #tpu.memory_space<vmem>>, vector<1x8x8xf32>,
      %c2_142 = arith.constant 2 : index
      %c0_143 = arith.constant 0 : index
      %c0_144 = arith.constant 0 : index
      %162 = vector.load %arg18[%c2_142, %c0_143, %c0_144] : memref<4x8x8xf32, #tpu.memory_space<vmem>>, vector<1x8x8xf32>
      %163 = vector.shape_cast %162 : vector<1x8x8xf32> to vector<8x8xf32>
      %164 = vector.shape_cast %158 : vector<8x8xf32> to vector<1x8x8xf32>
      tpu.vector_store %arg18[%c2_142, %c0_143, %c0_144], %164 {strides = array<i32>} : memref<4x8x8xf32, #tpu.memory_space<vmem>>, vector<1x8x8xf32>,
      %c3_145 = arith.constant 3 : index
      %c0_146 = arith.constant 0 : index
      %c0_147 = arith.constant 0 : index
      %165 = vector.load %arg5[%c3_145, %c0_146, %c0_147] : memref<4x32x8xf32, #tpu.memory_space<vmem>>, vector<1x32x8xf32>
      %166 = vector.shape_cast %165 : vector<1x32x8xf32> to vector<32x8xf32>
      %cst_148 = arith.constant dense<0.000000e+00> : vector<8x8xf32>
      %167 = tpu.matmul %102, %166, %cst_148 {dimension_numbers = #tpu.dot_dimension_numbers<[1], [0], [0], [1], [0, 0, 1, 1], [], []>} : vector<8x32xf32>, vector<32x8xf32>, vector<8x8xf32> -> vector<8x8xf32>
      %c3_149 = arith.constant 3 : index
      %c0_150 = arith.constant 0 : index
      %c0_151 = arith.constant 0 : index
      %168 = vector.load %arg6[%c3_149, %c0_150, %c0_151] : memref<4x1x8xf32, #tpu.memory_space<vmem>>, vector<1x1x8xf32>
      %169 = vector.shape_cast %168 : vector<1x1x8xf32> to vector<1x8xf32>
      %170 = vector.broadcast %169 : vector<1x8xf32> to vector<8x8xf32>
      %171 = arith.addf %167, %170 : vector<8x8xf32>
      %c3_152 = arith.constant 3 : index
      %c0_153 = arith.constant 0 : index
      %c0_154 = arith.constant 0 : index
      %172 = vector.load %arg7[%c3_152, %c0_153, %c0_154] : memref<4x32x8xf32, #tpu.memory_space<vmem>>, vector<1x32x8xf32>
      %173 = vector.shape_cast %172 : vector<1x32x8xf32> to vector<32x8xf32>
      %cst_155 = arith.constant dense<0.000000e+00> : vector<8x8xf32>
      %174 = tpu.matmul %104, %173, %cst_155 {dimension_numbers = #tpu.dot_dimension_numbers<[1], [0], [0], [1], [0, 0, 1, 1], [], []>} : vector<8x32xf32>, vector<32x8xf32>, vector<8x8xf32> -> vector<8x8xf32>
      %c3_156 = arith.constant 3 : index
      %c0_157 = arith.constant 0 : index
      %c0_158 = arith.constant 0 : index
      %175 = vector.load %arg8[%c3_156, %c0_157, %c0_158] : memref<4x1x8xf32, #tpu.memory_space<vmem>>, vector<1x1x8xf32>
      %176 = vector.shape_cast %175 : vector<1x1x8xf32> to vector<1x8xf32>
      %177 = vector.broadcast %176 : vector<1x8xf32> to vector<8x8xf32>
      %178 = arith.addf %174, %177 : vector<8x8xf32>
      %c3_159 = arith.constant 3 : index
      %c0_160 = arith.constant 0 : index
      %c0_161 = arith.constant 0 : index
      %179 = vector.load %arg17[%c3_159, %c0_160, %c0_161] : memref<4x8x8xf32, #tpu.memory_space<vmem>>, vector<1x8x8xf32>
      %180 = vector.shape_cast %179 : vector<1x8x8xf32> to vector<8x8xf32>
      %181 = vector.shape_cast %171 : vector<8x8xf32> to vector<1x8x8xf32>
      tpu.vector_store %arg17[%c3_159, %c0_160, %c0_161], %181 {strides = array<i32>} : memref<4x8x8xf32, #tpu.memory_space<vmem>>, vector<1x8x8xf32>,
      %c3_162 = arith.constant 3 : index
      %c0_163 = arith.constant 0 : index
      %c0_164 = arith.constant 0 : index
      %182 = vector.load %arg18[%c3_162, %c0_163, %c0_164] : memref<4x8x8xf32, #tpu.memory_space<vmem>>, vector<1x8x8xf32>
      %183 = vector.shape_cast %182 : vector<1x8x8xf32> to vector<8x8xf32>
      %184 = vector.shape_cast %178 : vector<8x8xf32> to vector<1x8x8xf32>
      tpu.vector_store %arg18[%c3_162, %c0_163, %c0_164], %184 {strides = array<i32>} : memref<4x8x8xf32, #tpu.memory_space<vmem>>, vector<1x8x8xf32>,
    } else {
    }
    %c0 = arith.constant 0 : index
    %c0_1 = arith.constant 0 : index
    %c0_2 = arith.constant 0 : index
    %3 = vector.load %arg4[%c0, %c0_1, %c0_2] : memref<1x8x32xf32, #tpu.memory_space<vmem>>, vector<1x8x32xf32>
    %4 = vector.shape_cast %3 : vector<1x8x32xf32> to vector<8x32xf32>
    %c0_3 = arith.constant 0 : index
    %c0_4 = arith.constant 0 : index
    %c0_5 = arith.constant 0 : index
    %5 = vector.load %arg9[%c0_3, %c0_4, %c0_5] : memref<4x32x8xf32, #tpu.memory_space<vmem>>, vector<1x32x8xf32>
    %6 = vector.shape_cast %5 : vector<1x32x8xf32> to vector<32x8xf32>
    %cst = arith.constant dense<0.000000e+00> : vector<8x8xf32>
    %7 = tpu.matmul %4, %6, %cst {dimension_numbers = #tpu.dot_dimension_numbers<[1], [0], [0], [1], [0, 0, 1, 1], [], []>} : vector<8x32xf32>, vector<32x8xf32>, vector<8x8xf32> -> vector<8x8xf32>
    %c0_6 = arith.constant 0 : index
    %c0_7 = arith.constant 0 : index
    %c0_8 = arith.constant 0 : index
    %8 = vector.load %arg10[%c0_6, %c0_7, %c0_8] : memref<4x1x8xf32, #tpu.memory_space<vmem>>, vector<1x1x8xf32>
    %9 = vector.shape_cast %8 : vector<1x1x8xf32> to vector<1x8xf32>
    %10 = vector.broadcast %9 : vector<1x8xf32> to vector<8x8xf32>
    %11 = arith.addf %7, %10 : vector<8x8xf32>
    %c0_9 = arith.constant 0 : index
    %c0_10 = arith.constant 0 : index
    %c0_11 = arith.constant 0 : index
    %12 = vector.load %arg19[%c0_9, %c0_10, %c0_11] : memref<4x8x8xf32, #tpu.memory_space<vmem>>, vector<1x8x8xf32>
    %13 = vector.shape_cast %12 : vector<1x8x8xf32> to vector<8x8xf32>
    %14 = vector.shape_cast %11 : vector<8x8xf32> to vector<1x8x8xf32>
    tpu.vector_store %arg19[%c0_9, %c0_10, %c0_11], %14 {strides = array<i32>} : memref<4x8x8xf32, #tpu.memory_space<vmem>>, vector<1x8x8xf32>,
    %c1 = arith.constant 1 : index
    %c0_12 = arith.constant 0 : index
    %c0_13 = arith.constant 0 : index
    %15 = vector.load %arg9[%c1, %c0_12, %c0_13] : memref<4x32x8xf32, #tpu.memory_space<vmem>>, vector<1x32x8xf32>
    %16 = vector.shape_cast %15 : vector<1x32x8xf32> to vector<32x8xf32>
    %cst_14 = arith.constant dense<0.000000e+00> : vector<8x8xf32>
    %17 = tpu.matmul %4, %16, %cst_14 {dimension_numbers = #tpu.dot_dimension_numbers<[1], [0], [0], [1], [0, 0, 1, 1], [], []>} : vector<8x32xf32>, vector<32x8xf32>, vector<8x8xf32> -> vector<8x8xf32>
    %c1_15 = arith.constant 1 : index
    %c0_16 = arith.constant 0 : index
    %c0_17 = arith.constant 0 : index
    %18 = vector.load %arg10[%c1_15, %c0_16, %c0_17] : memref<4x1x8xf32, #tpu.memory_space<vmem>>, vector<1x1x8xf32>
    %19 = vector.shape_cast %18 : vector<1x1x8xf32> to vector<1x8xf32>
    %20 = vector.broadcast %19 : vector<1x8xf32> to vector<8x8xf32>
    %21 = arith.addf %17, %20 : vector<8x8xf32>
    %c1_18 = arith.constant 1 : index
    %c0_19 = arith.constant 0 : index
    %c0_20 = arith.constant 0 : index
    %22 = vector.load %arg19[%c1_18, %c0_19, %c0_20] : memref<4x8x8xf32, #tpu.memory_space<vmem>>, vector<1x8x8xf32>
    %23 = vector.shape_cast %22 : vector<1x8x8xf32> to vector<8x8xf32>
    %24 = vector.shape_cast %21 : vector<8x8xf32> to vector<1x8x8xf32>
    tpu.vector_store %arg19[%c1_18, %c0_19, %c0_20], %24 {strides = array<i32>} : memref<4x8x8xf32, #tpu.memory_space<vmem>>, vector<1x8x8xf32>,
    %c2 = arith.constant 2 : index
    %c0_21 = arith.constant 0 : index
    %c0_22 = arith.constant 0 : index
    %25 = vector.load %arg9[%c2, %c0_21, %c0_22] : memref<4x32x8xf32, #tpu.memory_space<vmem>>, vector<1x32x8xf32>
    %26 = vector.shape_cast %25 : vector<1x32x8xf32> to vector<32x8xf32>
    %cst_23 = arith.constant dense<0.000000e+00> : vector<8x8xf32>
    %27 = tpu.matmul %4, %26, %cst_23 {dimension_numbers = #tpu.dot_dimension_numbers<[1], [0], [0], [1], [0, 0, 1, 1], [], []>} : vector<8x32xf32>, vector<32x8xf32>, vector<8x8xf32> -> vector<8x8xf32>
    %c2_24 = arith.constant 2 : index
    %c0_25 = arith.constant 0 : index
    %c0_26 = arith.constant 0 : index
    %28 = vector.load %arg10[%c2_24, %c0_25, %c0_26] : memref<4x1x8xf32, #tpu.memory_space<vmem>>, vector<1x1x8xf32>
    %29 = vector.shape_cast %28 : vector<1x1x8xf32> to vector<1x8xf32>
    %30 = vector.broadcast %29 : vector<1x8xf32> to vector<8x8xf32>
    %31 = arith.addf %27, %30 : vector<8x8xf32>
    %c2_27 = arith.constant 2 : index
    %c0_28 = arith.constant 0 : index
    %c0_29 = arith.constant 0 : index
    %32 = vector.load %arg19[%c2_27, %c0_28, %c0_29] : memref<4x8x8xf32, #tpu.memory_space<vmem>>, vector<1x8x8xf32>
    %33 = vector.shape_cast %32 : vector<1x8x8xf32> to vector<8x8xf32>
    %34 = vector.shape_cast %31 : vector<8x8xf32> to vector<1x8x8xf32>
    tpu.vector_store %arg19[%c2_27, %c0_28, %c0_29], %34 {strides = array<i32>} : memref<4x8x8xf32, #tpu.memory_space<vmem>>, vector<1x8x8xf32>,
    %c3 = arith.constant 3 : index
    %c0_30 = arith.constant 0 : index
    %c0_31 = arith.constant 0 : index
    %35 = vector.load %arg9[%c3, %c0_30, %c0_31] : memref<4x32x8xf32, #tpu.memory_space<vmem>>, vector<1x32x8xf32>
    %36 = vector.shape_cast %35 : vector<1x32x8xf32> to vector<32x8xf32>
    %cst_32 = arith.constant dense<0.000000e+00> : vector<8x8xf32>
    %37 = tpu.matmul %4, %36, %cst_32 {dimension_numbers = #tpu.dot_dimension_numbers<[1], [0], [0], [1], [0, 0, 1, 1], [], []>} : vector<8x32xf32>, vector<32x8xf32>, vector<8x8xf32> -> vector<8x8xf32>
    %c3_33 = arith.constant 3 : index
    %c0_34 = arith.constant 0 : index
    %c0_35 = arith.constant 0 : index
    %38 = vector.load %arg10[%c3_33, %c0_34, %c0_35] : memref<4x1x8xf32, #tpu.memory_space<vmem>>, vector<1x1x8xf32>
    %39 = vector.shape_cast %38 : vector<1x1x8xf32> to vector<1x8xf32>
    %40 = vector.broadcast %39 : vector<1x8xf32> to vector<8x8xf32>
    %41 = arith.addf %37, %40 : vector<8x8xf32>
    %c3_36 = arith.constant 3 : index
    %c0_37 = arith.constant 0 : index
    %c0_38 = arith.constant 0 : index
    %42 = vector.load %arg19[%c3_36, %c0_37, %c0_38] : memref<4x8x8xf32, #tpu.memory_space<vmem>>, vector<1x8x8xf32>
    %43 = vector.shape_cast %42 : vector<1x8x8xf32> to vector<8x8xf32>
    %44 = vector.shape_cast %41 : vector<8x8xf32> to vector<1x8x8xf32>
    tpu.vector_store %arg19[%c3_36, %c0_37, %c0_38], %44 {strides = array<i32>} : memref<4x8x8xf32, #tpu.memory_space<vmem>>, vector<1x8x8xf32>,
    %c0_39 = arith.constant 0 : index
    %c0_40 = arith.constant 0 : index
    %c0_41 = arith.constant 0 : index
    %45 = vector.load %arg17[%c0_39, %c0_40, %c0_41] : memref<4x8x8xf32, #tpu.memory_space<vmem>>, vector<4x8x8xf32>
    %c0_42 = arith.constant 0 : index
    %c0_43 = arith.constant 0 : index
    %c0_44 = arith.constant 0 : index
    %46 = vector.load %arg18[%c0_42, %c0_43, %c0_44] : memref<4x8x8xf32, #tpu.memory_space<vmem>>, vector<4x8x8xf32>
    %c0_45 = arith.constant 0 : index
    %c0_46 = arith.constant 0 : index
    %c0_47 = arith.constant 0 : index
    %47 = vector.load %arg19[%c0_45, %c0_46, %c0_47] : memref<4x8x8xf32, #tpu.memory_space<vmem>>, vector<4x8x8xf32>
    %cst_48 = arith.constant dense<0.000000e+00> : vector<4x8x8xf32>
    %48 = tpu.matmul %47, %46, %cst_48 {dimension_numbers = #tpu.dot_dimension_numbers<[2], [2], [1], [1], [0, 0, 0, 1, 1, 1], [0], [0]>} : vector<4x8x8xf32>, vector<4x8x8xf32>, vector<4x8x8xf32> -> vector<4x8x8xf32>
    %cst_49 = arith.constant 0.353553385 : f32
    %49 = vector.broadcast %cst_49 : f32 to vector<4x8x8xf32>
    %50 = arith.mulf %48, %49 : vector<4x8x8xf32>
    %cst_50 = arith.constant dense<0xFF800000> : vector<4x8xf32>
    %51 = vector.multi_reduction <maximumf>, %50, %cst_50 [2] : vector<4x8x8xf32> to vector<4x8xf32>
    %52 = vector.shape_cast %51 : vector<4x8xf32> to vector<4x8x1xf32>
    %53 = vector.broadcast %52 : vector<4x8x1xf32> to vector<4x8x8xf32>
    %54 = arith.subf %50, %53 : vector<4x8x8xf32>
    %55 = math.exp %54 : vector<4x8x8xf32>
    %cst_51 = arith.constant dense<0.000000e+00> : vector<4x8xf32>
    %56 = vector.multi_reduction <add>, %55, %cst_51 [2] : vector<4x8x8xf32> to vector<4x8xf32>
    %57 = vector.shape_cast %56 : vector<4x8xf32> to vector<4x8x1xf32>
    %58 = tpu.reciprocal %57 : vector<4x8x1xf32> -> vector<4x8x1xf32>
    %59 = vector.broadcast %58 : vector<4x8x1xf32> to vector<4x8x8xf32>
    %60 = arith.mulf %55, %59 : vector<4x8x8xf32>
    %c0_52 = arith.constant 0 : index
    %c0_53 = arith.constant 0 : index
    %c0_54 = arith.constant 0 : index
    %c0_55 = arith.constant 0 : index
    %61 = vector.load %arg16[%c0_52, %c0_53, %c0_54, %c0_55] : memref<1x4x8x8xf32, #tpu.memory_space<vmem>>, vector<1x4x8x8xf32>
    %62 = vector.shape_cast %61 : vector<1x4x8x8xf32> to vector<4x8x8xf32>
    %63 = vector.shape_cast %60 : vector<4x8x8xf32> to vector<1x4x8x8xf32>
    tpu.vector_store %arg16[%c0_52, %c0_53, %c0_54, %c0_55], %63 {strides = array<i32>} : memref<1x4x8x8xf32, #tpu.memory_space<vmem>>, vector<1x4x8x8xf32>,
    %cst_56 = arith.constant dense<0.000000e+00> : vector<4x8x8xf32>
    %64 = tpu.matmul %60, %45, %cst_56 {dimension_numbers = #tpu.dot_dimension_numbers<[2], [1], [1], [2], [0, 0, 0, 1, 1, 2], [0], [0]>} : vector<4x8x8xf32>, vector<4x8x8xf32>, vector<4x8x8xf32> -> vector<4x8x8xf32>
    %c0_57 = arith.constant 0 : index
    %c0_58 = arith.constant 0 : index
    %c0_59 = arith.constant 0 : index
    %65 = vector.load %arg11[%c0_57, %c0_58, %c0_59] : memref<4x8x32xf32, #tpu.memory_space<vmem>>, vector<4x8x32xf32>
    %cst_60 = arith.constant dense<0.000000e+00> : vector<4x8x32xf32>
    %66 = tpu.matmul %64, %65, %cst_60 {dimension_numbers = #tpu.dot_dimension_numbers<[2], [1], [1], [2], [0, 0, 0, 1, 1, 2], [0], [0]>} : vector<4x8x8xf32>, vector<4x8x32xf32>, vector<4x8x32xf32> -> vector<4x8x32xf32>
    %cst_61 = arith.constant dense<0.000000e+00> : vector<8x32xf32>
    %67 = vector.multi_reduction <add>, %66, %cst_61 [0] : vector<4x8x32xf32> to vector<8x32xf32>
    %c0_62 = arith.constant 0 : index
    %c0_63 = arith.constant 0 : index
    %68 = vector.load %arg12[%c0_62, %c0_63] : memref<1x32xf32, #tpu.memory_space<vmem>>, vector<1x32xf32>
    %69 = vector.broadcast %68 : vector<1x32xf32> to vector<8x32xf32>
    %70 = arith.addf %67, %69 : vector<8x32xf32>
    %c0_64 = arith.constant 0 : index
    %c0_65 = arith.constant 0 : index
    %c0_66 = arith.constant 0 : index
    %71 = vector.load %arg2[%c0_64, %c0_65, %c0_66] : memref<1x8x32xf32, #tpu.memory_space<vmem>>, vector<1x8x32xf32>
    %72 = vector.shape_cast %71 : vector<1x8x32xf32> to vector<8x32xf32>
    %73 = arith.addf %72, %70 : vector<8x32xf32>
    %cst_67 = arith.constant dense<0.000000e+00> : vector<8xf32>
    %74 = vector.multi_reduction <add>, %73, %cst_67 [1] : vector<8x32xf32> to vector<8xf32>
    %75 = vector.shape_cast %74 : vector<8xf32> to vector<8x1xf32>
    %cst_68 = arith.constant 3.200000e+01 : f32
    %76 = vector.broadcast %cst_68 : f32 to vector<8x1xf32>
    %77 = arith.divf %75, %76 : vector<8x1xf32>
    %78 = vector.broadcast %77 : vector<8x1xf32> to vector<8x32xf32>
    %79 = arith.subf %73, %78 : vector<8x32xf32>
    %80 = arith.mulf %79, %79 : vector<8x32xf32>
    %cst_69 = arith.constant dense<0.000000e+00> : vector<8xf32>
    %81 = vector.multi_reduction <add>, %80, %cst_69 [1] : vector<8x32xf32> to vector<8xf32>
    %82 = vector.shape_cast %81 : vector<8xf32> to vector<8x1xf32>
    %cst_70 = arith.constant 3.200000e+01 : f32
    %83 = vector.broadcast %cst_70 : f32 to vector<8x1xf32>
    %84 = arith.divf %82, %83 : vector<8x1xf32>
    %85 = vector.broadcast %77 : vector<8x1xf32> to vector<8x32xf32>
    %86 = arith.subf %73, %85 : vector<8x32xf32>
    %cst_71 = arith.constant 9.99999974E-6 : f32
    %87 = vector.broadcast %cst_71 : f32 to vector<8x1xf32>
    %88 = arith.addf %84, %87 : vector<8x1xf32>
    %89 = math.rsqrt %88 : vector<8x1xf32>
    %90 = vector.broadcast %89 : vector<8x1xf32> to vector<8x32xf32>
    %91 = arith.mulf %86, %90 : vector<8x32xf32>
    %c0_72 = arith.constant 0 : index
    %c0_73 = arith.constant 0 : index
    %92 = vector.load %arg13[%c0_72, %c0_73] : memref<1x32xf32, #tpu.memory_space<vmem>>, vector<1x32xf32>
    %93 = vector.broadcast %92 : vector<1x32xf32> to vector<8x32xf32>
    %94 = arith.mulf %91, %93 : vector<8x32xf32>
    %c0_74 = arith.constant 0 : index
    %c0_75 = arith.constant 0 : index
    %95 = vector.load %arg14[%c0_74, %c0_75] : memref<1x32xf32, #tpu.memory_space<vmem>>, vector<1x32xf32>
    %96 = vector.broadcast %95 : vector<1x32xf32> to vector<8x32xf32>
    %97 = arith.addf %94, %96 : vector<8x32xf32>
    %c0_76 = arith.constant 0 : index
    %c0_77 = arith.constant 0 : index
    %c0_78 = arith.constant 0 : index
    %98 = vector.load %arg15[%c0_76, %c0_77, %c0_78] : memref<1x8x32xf32, #tpu.memory_space<vmem>>, vector<1x8x32xf32>
    %99 = vector.shape_cast %98 : vector<1x8x32xf32> to vector<8x32xf32>
    %100 = vector.shape_cast %97 : vector<8x32xf32> to vector<1x8x32xf32>
    tpu.vector_store %arg15[%c0_76, %c0_77, %c0_78], %100 {strides = array<i32>} : memref<1x8x32xf32, #tpu.memory_space<vmem>>, vector<1x8x32xf32>,
    return
  }
  func.func @transform_0(%arg0: i32, %arg1: i32) -> (i32, i32, i32) {
    %c0_i32 = arith.constant 0 : i32
    %c0_i32_0 = arith.constant 0 : i32
    %c0_i32_1 = arith.constant 0 : i32
    return %arg0, %c0_i32, %c0_i32_0 : i32, i32, i32
  }
  func.func @transform_1(%arg0: i32, %arg1: i32) -> (i32, i32, i32) {
    %c0_i32 = arith.constant 0 : i32
    %c0_i32_0 = arith.constant 0 : i32
    %c0_i32_1 = arith.constant 0 : i32
    return %arg0, %c0_i32, %c0_i32_0 : i32, i32, i32
  }
  func.func @transform_2(%arg0: i32, %arg1: i32) -> (i32, i32, i32) {
    %c0_i32 = arith.constant 0 : i32
    %c0_i32_0 = arith.constant 0 : i32
    return %arg0, %arg1, %c0_i32 : i32, i32, i32
  }
  func.func @transform_3(%arg0: i32, %arg1: i32) -> (i32, i32, i32) {
    %c0_i32 = arith.constant 0 : i32
    %c0_i32_0 = arith.constant 0 : i32
    %c0_i32_1 = arith.constant 0 : i32
    %c0_i32_2 = arith.constant 0 : i32
    return %c0_i32, %c0_i32_0, %c0_i32_1 : i32, i32, i32
  }
  func.func @transform_4(%arg0: i32, %arg1: i32) -> (i32, i32, i32) {
    %c0_i32 = arith.constant 0 : i32
    %c0_i32_0 = arith.constant 0 : i32
    %c0_i32_1 = arith.constant 0 : i32
    %c0_i32_2 = arith.constant 0 : i32
    return %c0_i32, %c0_i32_0, %c0_i32_1 : i32, i32, i32
  }
  func.func @transform_5(%arg0: i32, %arg1: i32) -> (i32, i32, i32) {
    %c0_i32 = arith.constant 0 : i32
    %c0_i32_0 = arith.constant 0 : i32
    %c0_i32_1 = arith.constant 0 : i32
    %c0_i32_2 = arith.constant 0 : i32
    return %c0_i32, %c0_i32_0, %c0_i32_1 : i32, i32, i32
  }
  func.func @transform_6(%arg0: i32, %arg1: i32) -> (i32, i32, i32) {
    %c0_i32 = arith.constant 0 : i32
    %c0_i32_0 = arith.constant 0 : i32
    %c0_i32_1 = arith.constant 0 : i32
    %c0_i32_2 = arith.constant 0 : i32
    return %c0_i32, %c0_i32_0, %c0_i32_1 : i32, i32, i32
  }
  func.func @transform_7(%arg0: i32, %arg1: i32) -> (i32, i32, i32) {
    %c0_i32 = arith.constant 0 : i32
    %c0_i32_0 = arith.constant 0 : i32
    %c0_i32_1 = arith.constant 0 : i32
    %c0_i32_2 = arith.constant 0 : i32
    return %c0_i32, %c0_i32_0, %c0_i32_1 : i32, i32, i32
  }
  func.func @transform_8(%arg0: i32, %arg1: i32) -> (i32, i32, i32) {
    %c0_i32 = arith.constant 0 : i32
    %c0_i32_0 = arith.constant 0 : i32
    %c0_i32_1 = arith.constant 0 : i32
    %c0_i32_2 = arith.constant 0 : i32
    return %c0_i32, %c0_i32_0, %c0_i32_1 : i32, i32, i32
  }
  func.func @transform_9(%arg0: i32, %arg1: i32) -> (i32, i32, i32) {
    %c0_i32 = arith.constant 0 : i32
    %c0_i32_0 = arith.constant 0 : i32
    %c0_i32_1 = arith.constant 0 : i32
    %c0_i32_2 = arith.constant 0 : i32
    return %c0_i32, %c0_i32_0, %c0_i32_1 : i32, i32, i32
  }
  func.func @transform_10(%arg0: i32, %arg1: i32) -> (i32, i32) {
    %c0_i32 = arith.constant 0 : i32
    %c0_i32_0 = arith.constant 0 : i32
    %c0_i32_1 = arith.constant 0 : i32
    return %c0_i32, %c0_i32_0 : i32, i32
  }
  func.func @transform_11(%arg0: i32, %arg1: i32) -> (i32, i32) {
    %c0_i32 = arith.constant 0 : i32
    %c0_i32_0 = arith.constant 0 : i32
    %c0_i32_1 = arith.constant 0 : i32
    return %c0_i32, %c0_i32_0 : i32, i32
  }
  func.func @transform_12(%arg0: i32, %arg1: i32) -> (i32, i32) {
    %c0_i32 = arith.constant 0 : i32
    %c0_i32_0 = arith.constant 0 : i32
    %c0_i32_1 = arith.constant 0 : i32
    return %c0_i32, %c0_i32_0 : i32, i32
  }
  func.func @transform_13(%arg0: i32, %arg1: i32) -> (i32, i32, i32) {
    %c0_i32 = arith.constant 0 : i32
    %c0_i32_0 = arith.constant 0 : i32
    return %arg0, %arg1, %c0_i32 : i32, i32, i32
  }
  func.func @transform_14(%arg0: i32, %arg1: i32) -> (i32, i32, i32, i32) {
    %c0_i32 = arith.constant 0 : i32
    %c0_i32_0 = arith.constant 0 : i32
    %c0_i32_1 = arith.constant 0 : i32
    return %arg0, %c0_i32, %arg1, %c0_i32_0 : i32, i32, i32, i32
  }
}

</mosaic_0001>

<llo_original>
// kernel: tpu_custom_call.1
$region0: #{tpu_custom_call.1}
  #allocation0 [shape = 'u32[]', space=smem, size = 0x4, offset = 0x4, fixed_abs, tag = 'smem constant byte address 0x4 - core index']
  #allocation1 [shape = 'u32[144,128]{1,0:T(1,128)}', space=vmem, size = 0x12000, scoped, tag = 'internal scratch']
  #allocation2 [shape = 'f32[4,8,8]{2,1,0:T(8,128)}', space=vmem, size = 0x4000, scoped, tag = 'scratch operand']
  #allocation3 [shape = 'f32[4,8,8]{2,1,0:T(8,128)}', space=vmem, size = 0x4000, scoped, tag = 'scratch operand']
  #allocation4 [shape = 'f32[4,8,8]{2,1,0:T(8,128)}', space=vmem, size = 0x4000, scoped, tag = 'scratch operand']
  %s0 = inlined_call_operand.vmem [shape: f32[2,8,32], index: 0, kind: input, shape index: {}]
  %s1 = inlined_call_operand.vmem [shape: f32[2,8,32], index: 1, kind: input, shape index: {}]
  %s2 = inlined_call_operand.vmem [shape: f32[2,8,32], index: 2, kind: input, shape index: {}]
  %s3 = inlined_call_operand.vmem [shape: f32[4,32,8], index: 3, kind: input, shape index: {}]
  %s4 = inlined_call_operand.vmem [shape: f32[4,1,8], index: 4, kind: input, shape index: {}]
  %s5 = inlined_call_operand.vmem [shape: f32[4,32,8], index: 5, kind: input, shape index: {}]
  %s6 = inlined_call_operand.vmem [shape: f32[4,1,8], index: 6, kind: input, shape index: {}]
  %s7 = inlined_call_operand.vmem [shape: f32[4,32,8], index: 7, kind: input, shape index: {}]
  %s8 = inlined_call_operand.vmem [shape: f32[4,1,8], index: 8, kind: input, shape index: {}]
  %s9 = inlined_call_operand.vmem [shape: f32[4,8,32], index: 9, kind: input, shape index: {}]
  %s10 = inlined_call_operand.vmem [shape: f32[1,32], index: 10, kind: input, shape index: {}]
  %s11 = inlined_call_operand.vmem [shape: f32[1,32], index: 11, kind: input, shape index: {}]
  %s12 = inlined_call_operand.vmem [shape: f32[1,32], index: 12, kind: input, shape index: {}]
  %s13 = inlined_call_operand.hbm [shape: f32[2,8,32], index: 13, kind: output, shape index: {0}]
  %s14 = inlined_call_operand.hbm [shape: f32[2,4,8,8], index: 14, kind: output, shape index: {1}]
  %15 = xla_tuple %s13, %s14
  %s16 = sld [smem:[#allocation0]]
  $region97: #{tpu_custom_call.1} parent=0
    _
  %s18 = ssub.s32 1, %s16
  %s19 = scalar_select 0, %s18, %s16
  $region1: #{tpu_custom_call.1} parent=0
    #allocation5 [shape = 'u8[8192]{0}', space=vmem, size = 0x2000, scoped, tag = 'output window, operand 0']
    #allocation6 [shape = 's32[2]{0}', space=sflag, size = 0x8, scoped, tag = 'scoped memory for tpu_custom_call.1']
    #allocation7 [shape = 'u8[32768]{0}', space=vmem, size = 0x8000, scoped, tag = 'output window, operand 1']
    #allocation8 [shape = 's32[2]{0}', space=sflag, size = 0x8, scoped, tag = 'scoped memory for tpu_custom_call.1']
    %20 = vsyncpa [#allocation6], 0
    %s21 = scalar_lea.sflag [#allocation6], 1
    %22 = vsyncpa %s21, 0
    %23 = vsyncpa [#allocation8], 0
    %s24 = scalar_lea.sflag [#allocation8], 1
    %25 = vsyncpa %s24, 0
    loop: start=0, step=1, limit=4
    $region2: #{tpu_custom_call.1} parent=1 // loop_pre_header
      _
    $region3: #{tpu_custom_call.1} parent=1 // loop_header
      %s27 = sphi 0, %s31
      %p28 = scmp.ge.s32.totalorder %s27, 4
      %s34 = sphi 0, %s46
      %s35 = sphi 0, %s42
      %s36 = sphi 0, %s34
      %s37 = sphi 0, %s35
      %s38 = sphi 0, %s36
      %s39 = sphi 0, %s37
      %s49 = sphi 0, %s51
      %s52 = sphi 0, %s49
      %s53 = sphi 0, %s52
      %s69 = sphi 0, %s53
      %s75 = sphi 0, %s77
      %s78 = sphi 0, %s75
      %s79 = sphi 0, %s78
      %s95 = sphi 0, %s79
      %s103 = sphi 0, %s105
      %s106 = sphi 0, %s103
      %s107 = sphi 0, %s106
      %s123 = sphi 0, %s107
      %s127 = sphi 0, %s127
      %s129 = sphi 0, %s127
      %s130 = sphi 0, %s129
      %s144 = sphi 0, %s130
      %s148 = sphi 0, %s148
      %s150 = sphi 0, %s148
      %s151 = sphi 0, %s150
      %s165 = sphi 0, %s151
      %s169 = sphi 0, %s169
      %s171 = sphi 0, %s169
      %s172 = sphi 0, %s171
      %s186 = sphi 0, %s172
      %s190 = sphi 0, %s190
      %s192 = sphi 0, %s190
      %s193 = sphi 0, %s192
      %s207 = sphi 0, %s193
      %s211 = sphi 0, %s211
      %s213 = sphi 0, %s211
      %s214 = sphi 0, %s213
      %s228 = sphi 0, %s214
      %s232 = sphi 0, %s232
      %s234 = sphi 0, %s232
      %s235 = sphi 0, %s234
      %s249 = sphi 0, %s235
      %s253 = sphi 0, %s253
      %s255 = sphi 0, %s253
      %s256 = sphi 0, %s255
      %s270 = sphi 0, %s256
      %s274 = sphi 0, %s274
      %s276 = sphi 0, %s274
      %s277 = sphi 0, %s276
      %s291 = sphi 0, %s277
      %s295 = sphi 0, %s295
      %s297 = sphi 0, %s295
      %s298 = sphi 0, %s297
      %s312 = sphi 0, %s298
      %s316 = sphi 0, %s316
      %s318 = sphi 0, %s316
      %s319 = sphi 0, %s318
      %s333 = sphi 0, %s319
      %s341 = sphi 0, %s343
      %s344 = sphi 0, %s341
      %s345 = sphi 0, %s344
      %s361 = sphi 0, %s345
      %s369 = sphi 0, %s371
      %s372 = sphi 0, %s369
      %s373 = sphi 0, %s372
      %s389 = sphi 0, %s373
    $region4: #{tpu_custom_call.1} parent=1 // loop_header_branch
      %30 = sbr.rel (%p28) target = $region8
    $region5: #{tpu_custom_call.1} parent=1 // loop_body
      %s32 = ssub.s32 %s27, 1
      %s33 = ssub.s32 %s27, 2
      %s40 = sadd.s32 1, %s35
      %p41 = scmp.ge.s32.totalorder %s40, 1
      %s42 = scalar_select %p41, 0, %s40
      %s43 = sadd.s32 1, %s34
      %s44 = scalar_select %p41, %s43, %s34
      %p45 = scmp.ge.s32.totalorder %s44, 2
      %s46 = scalar_select %p45, 0, %s44
      %s47 = ssub.s32 %s34, %s46
      %p48 = scmp.eq.s32.totalorder %s47, 0
      %s50 = sadd.s32 %s49, 1
      %s51 = scalar_select %p48, %s49, %s50
      %p54 = pneg %p48
      %p55 = scmp.eq.s32.totalorder %s27, 1
      %p56 = por %p54, %p55
      %p57 = scmp.ne.s32.totalorder %s49, %s52
      %p58 = scmp.eq.s32.totalorder %s27, 0
      %p59 = por %p57, %p58
      %p60 = scmp.ne.s32.totalorder %s49, %s52
      %p61 = scmp.eq.s32.totalorder %s32, 1
      %p62 = por %p60, %p61
      %p63 = scmp.ne.s32.totalorder %s52, %s53
      %p64 = scmp.eq.s32.totalorder %s32, 0
      %p65 = por %p63, %p64
      %p66 = scmp.ne.s32.totalorder %s52, %s53
      %p67 = scmp.eq.s32.totalorder %s33, 1
      %p68 = por %p66, %p67
      %p70 = scmp.ne.s32.totalorder %s53, %s69
      %p71 = scmp.eq.s32.totalorder %s33, 0
      %p72 = por %p70, %p71
      %s73 = ssub.s32 %s34, %s46
      %p74 = scmp.eq.s32.totalorder %s73, 0
      %s76 = sadd.s32 %s75, 1
      %s77 = scalar_select %p74, %s75, %s76
      %p80 = pneg %p74
      %p81 = scmp.eq.s32.totalorder %s27, 1
      %p82 = por %p80, %p81
      %p83 = scmp.ne.s32.totalorder %s75, %s78
      %p84 = scmp.eq.s32.totalorder %s27, 0
      %p85 = por %p83, %p84
      %p86 = scmp.ne.s32.totalorder %s75, %s78
      %p87 = scmp.eq.s32.totalorder %s32, 1
      %p88 = por %p86, %p87
      %p89 = scmp.ne.s32.totalorder %s78, %s79
      %p90 = scmp.eq.s32.totalorder %s32, 0
      %p91 = por %p89, %p90
      %p92 = scmp.ne.s32.totalorder %s78, %s79
      %p93 = scmp.eq.s32.totalorder %s33, 1
      %p94 = por %p92, %p93
      %p96 = scmp.ne.s32.totalorder %s79, %s95
      %p97 = scmp.eq.s32.totalorder %s33, 0
      %p98 = por %p96, %p97
      %s99 = ssub.s32 %s34, %s46
      %s100 = ssub.s32 %s35, %s42
      %s101 = sor.u32 %s99, %s100
      %p102 = scmp.eq.s32.totalorder %s101, 0
      %s104 = sadd.s32 %s103, 1
      %s105 = scalar_select %p102, %s103, %s104
      %p108 = pneg %p102
      %p109 = scmp.eq.s32.totalorder %s27, 1
      %p110 = por %p108, %p109
      %p111 = scmp.ne.s32.totalorder %s103, %s106
      %p112 = scmp.eq.s32.totalorder %s27, 0
      %p113 = por %p111, %p112
      %p114 = scmp.ne.s32.totalorder %s103, %s106
      %p115 = scmp.eq.s32.totalorder %s32, 1
      %p116 = por %p114, %p115
      %p117 = scmp.ne.s32.totalorder %s106, %s107
      %p118 = scmp.eq.s32.totalorder %s32, 0
      %p119 = por %p117, %p118
      %p120 = scmp.ne.s32.totalorder %s106, %s107
      %p121 = scmp.eq.s32.totalorder %s33, 1
      %p122 = por %p120, %p121
      %p124 = scmp.ne.s32.totalorder %s107, %s123
      %p125 = scmp.eq.s32.totalorder %s33, 0
      %p126 = por %p124, %p125
      %s128 = sadd.s32 %s127, 1
      %p131 = scmp.eq.s32.totalorder %s27, 1
      %p132 = scmp.ne.s32.totalorder %s127, %s129
      %p133 = scmp.eq.s32.totalorder %s27, 0
      %p134 = por %p132, %p133
      %p135 = scmp.ne.s32.totalorder %s127, %s129
      %p136 = scmp.eq.s32.totalorder %s32, 1
      %p137 = por %p135, %p136
      %p138 = scmp.ne.s32.totalorder %s129, %s130
      %p139 = scmp.eq.s32.totalorder %s32, 0
      %p140 = por %p138, %p139
      %p141 = scmp.ne.s32.totalorder %s129, %s130
      %p142 = scmp.eq.s32.totalorder %s33, 1
      %p143 = por %p141, %p142
      %p145 = scmp.ne.s32.totalorder %s130, %s144
      %p146 = scmp.eq.s32.totalorder %s33, 0
      %p147 = por %p145, %p146
      %s149 = sadd.s32 %s148, 1
      %p152 = scmp.eq.s32.totalorder %s27, 1
      %p153 = scmp.ne.s32.totalorder %s148, %s150
      %p154 = scmp.eq.s32.totalorder %s27, 0
      %p155 = por %p153, %p154
      %p156 = scmp.ne.s32.totalorder %s148, %s150
      %p157 = scmp.eq.s32.totalorder %s32, 1
      %p158 = por %p156, %p157
      %p159 = scmp.ne.s32.totalorder %s150, %s151
      %p160 = scmp.eq.s32.totalorder %s32, 0
      %p161 = por %p159, %p160
      %p162 = scmp.ne.s32.totalorder %s150, %s151
      %p163 = scmp.eq.s32.totalorder %s33, 1
      %p164 = por %p162, %p163
      %p166 = scmp.ne.s32.totalorder %s151, %s165
      %p167 = scmp.eq.s32.totalorder %s33, 0
      %p168 = por %p166, %p167
      %s170 = sadd.s32 %s169, 1
      %p173 = scmp.eq.s32.totalorder %s27, 1
      %p174 = scmp.ne.s32.totalorder %s169, %s171
      %p175 = scmp.eq.s32.totalorder %s27, 0
      %p176 = por %p174, %p175
      %p177 = scmp.ne.s32.totalorder %s169, %s171
      %p178 = scmp.eq.s32.totalorder %s32, 1
      %p179 = por %p177, %p178
      %p180 = scmp.ne.s32.totalorder %s171, %s172
      %p181 = scmp.eq.s32.totalorder %s32, 0
      %p182 = por %p180, %p181
      %p183 = scmp.ne.s32.totalorder %s171, %s172
      %p184 = scmp.eq.s32.totalorder %s33, 1
      %p185 = por %p183, %p184
      %p187 = scmp.ne.s32.totalorder %s172, %s186
      %p188 = scmp.eq.s32.totalorder %s33, 0
      %p189 = por %p187, %p188
      %s191 = sadd.s32 %s190, 1
      %p194 = scmp.eq.s32.totalorder %s27, 1
      %p195 = scmp.ne.s32.totalorder %s190, %s192
      %p196 = scmp.eq.s32.totalorder %s27, 0
      %p197 = por %p195, %p196
      %p198 = scmp.ne.s32.totalorder %s190, %s192
      %p199 = scmp.eq.s32.totalorder %s32, 1
      %p200 = por %p198, %p199
      %p201 = scmp.ne.s32.totalorder %s192, %s193
      %p202 = scmp.eq.s32.totalorder %s32, 0
      %p203 = por %p201, %p202
      %p204 = scmp.ne.s32.totalorder %s192, %s193
      %p205 = scmp.eq.s32.totalorder %s33, 1
      %p206 = por %p204, %p205
      %p208 = scmp.ne.s32.totalorder %s193, %s207
      %p209 = scmp.eq.s32.totalorder %s33, 0
      %p210 = por %p208, %p209
      %s212 = sadd.s32 %s211, 1
      %p215 = scmp.eq.s32.totalorder %s27, 1
      %p216 = scmp.ne.s32.totalorder %s211, %s213
      %p217 = scmp.eq.s32.totalorder %s27, 0
      %p218 = por %p216, %p217
      %p219 = scmp.ne.s32.totalorder %s211, %s213
      %p220 = scmp.eq.s32.totalorder %s32, 1
      %p221 = por %p219, %p220
      %p222 = scmp.ne.s32.totalorder %s213, %s214
      %p223 = scmp.eq.s32.totalorder %s32, 0
      %p224 = por %p222, %p223
      %p225 = scmp.ne.s32.totalorder %s213, %s214
      %p226 = scmp.eq.s32.totalorder %s33, 1
      %p227 = por %p225, %p226
      %p229 = scmp.ne.s32.totalorder %s214, %s228
      %p230 = scmp.eq.s32.totalorder %s33, 0
      %p231 = por %p229, %p230
      %s233 = sadd.s32 %s232, 1
      %p236 = scmp.eq.s32.totalorder %s27, 1
      %p237 = scmp.ne.s32.totalorder %s232, %s234
      %p238 = scmp.eq.s32.totalorder %s27, 0
      %p239 = por %p237, %p238
      %p240 = scmp.ne.s32.totalorder %s232, %s234
      %p241 = scmp.eq.s32.totalorder %s32, 1
      %p242 = por %p240, %p241
      %p243 = scmp.ne.s32.totalorder %s234, %s235
      %p244 = scmp.eq.s32.totalorder %s32, 0
      %p245 = por %p243, %p244
      %p246 = scmp.ne.s32.totalorder %s234, %s235
      %p247 = scmp.eq.s32.totalorder %s33, 1
      %p248 = por %p246, %p247
      %p250 = scmp.ne.s32.totalorder %s235, %s249
      %p251 = scmp.eq.s32.totalorder %s33, 0
      %p252 = por %p250, %p251
      %s254 = sadd.s32 %s253, 1
      %p257 = scmp.eq.s32.totalorder %s27, 1
      %p258 = scmp.ne.s32.totalorder %s253, %s255
      %p259 = scmp.eq.s32.totalorder %s27, 0
      %p260 = por %p258, %p259
      %p261 = scmp.ne.s32.totalorder %s253, %s255
      %p262 = scmp.eq.s32.totalorder %s32, 1
      %p263 = por %p261, %p262
      %p264 = scmp.ne.s32.totalorder %s255, %s256
      %p265 = scmp.eq.s32.totalorder %s32, 0
      %p266 = por %p264, %p265
      %p267 = scmp.ne.s32.totalorder %s255, %s256
      %p268 = scmp.eq.s32.totalorder %s33, 1
      %p269 = por %p267, %p268
      %p271 = scmp.ne.s32.totalorder %s256, %s270
      %p272 = scmp.eq.s32.totalorder %s33, 0
      %p273 = por %p271, %p272
      %s275 = sadd.s32 %s274, 1
      %p278 = scmp.eq.s32.totalorder %s27, 1
      %p279 = scmp.ne.s32.totalorder %s274, %s276
      %p280 = scmp.eq.s32.totalorder %s27, 0
      %p281 = por %p279, %p280
      %p282 = scmp.ne.s32.totalorder %s274, %s276
      %p283 = scmp.eq.s32.totalorder %s32, 1
      %p284 = por %p282, %p283
      %p285 = scmp.ne.s32.totalorder %s276, %s277
      %p286 = scmp.eq.s32.totalorder %s32, 0
      %p287 = por %p285, %p286
      %p288 = scmp.ne.s32.totalorder %s276, %s277
      %p289 = scmp.eq.s32.totalorder %s33, 1
      %p290 = por %p288, %p289
      %p292 = scmp.ne.s32.totalorder %s277, %s291
      %p293 = scmp.eq.s32.totalorder %s33, 0
      %p294 = por %p292, %p293
      %s296 = sadd.s32 %s295, 1
      %p299 = scmp.eq.s32.totalorder %s27, 1
      %p300 = scmp.ne.s32.totalorder %s295, %s297
      %p301 = scmp.eq.s32.totalorder %s27, 0
      %p302 = por %p300, %p301
      %p303 = scmp.ne.s32.totalorder %s295, %s297
      %p304 = scmp.eq.s32.totalorder %s32, 1
      %p305 = por %p303, %p304
      %p306 = scmp.ne.s32.totalorder %s297, %s298
      %p307 = scmp.eq.s32.totalorder %s32, 0
      %p308 = por %p306, %p307
      %p309 = scmp.ne.s32.totalorder %s297, %s298
      %p310 = scmp.eq.s32.totalorder %s33, 1
      %p311 = por %p309, %p310
      %p313 = scmp.ne.s32.totalorder %s298, %s312
      %p314 = scmp.eq.s32.totalorder %s33, 0
      %p315 = por %p313, %p314
      %s317 = sadd.s32 %s316, 1
      %p320 = scmp.eq.s32.totalorder %s27, 1
      %p321 = scmp.ne.s32.totalorder %s316, %s318
      %p322 = scmp.eq.s32.totalorder %s27, 0
      %p323 = por %p321, %p322
      %p324 = scmp.ne.s32.totalorder %s316, %s318
      %p325 = scmp.eq.s32.totalorder %s32, 1
      %p326 = por %p324, %p325
      %p327 = scmp.ne.s32.totalorder %s318, %s319
      %p328 = scmp.eq.s32.totalorder %s32, 0
      %p329 = por %p327, %p328
      %p330 = scmp.ne.s32.totalorder %s318, %s319
      %p331 = scmp.eq.s32.totalorder %s33, 1
      %p332 = por %p330, %p331
      %p334 = scmp.ne.s32.totalorder %s319, %s333
      %p335 = scmp.eq.s32.totalorder %s33, 0
      %p336 = por %p334, %p335
      %s337 = ssub.s32 %s34, %s46
      %s338 = ssub.s32 %s35, %s42
      %s339 = sor.u32 %s337, %s338
      %p340 = scmp.eq.s32.totalorder %s339, 0
      %s342 = sadd.s32 %s341, 1
      %s343 = scalar_select %p340, %s341, %s342
      %p346 = pneg %p340
      %p347 = scmp.eq.s32.totalorder %s27, 1
      %p348 = por %p346, %p347
      %p349 = scmp.ne.s32.totalorder %s341, %s344
      %p350 = scmp.eq.s32.totalorder %s27, 0
      %p351 = por %p349, %p350
      %p352 = scmp.ne.s32.totalorder %s341, %s344
      %p353 = scmp.eq.s32.totalorder %s32, 1
      %p354 = por %p352, %p353
      %p355 = scmp.ne.s32.totalorder %s344, %s345
      %p356 = scmp.eq.s32.totalorder %s32, 0
      %p357 = por %p355, %p356
      %p358 = scmp.ne.s32.totalorder %s344, %s345
      %p359 = scmp.eq.s32.totalorder %s33, 1
      %p360 = por %p358, %p359
      %p362 = scmp.ne.s32.totalorder %s345, %s361
      %p363 = scmp.eq.s32.totalorder %s33, 0
      %p364 = por %p362, %p363
      %s365 = ssub.s32 %s34, %s46
      %s366 = ssub.s32 %s35, %s42
      %s367 = sor.u32 %s365, %s366
      %p368 = scmp.eq.s32.totalorder %s367, 0
      %s370 = sadd.s32 %s369, 1
      %s371 = scalar_select %p368, %s369, %s370
      %p374 = pneg %p368
      %p375 = scmp.eq.s32.totalorder %s27, 1
      %p376 = por %p374, %p375
      %p377 = scmp.ne.s32.totalorder %s369, %s372
      %p378 = scmp.eq.s32.totalorder %s27, 0
      %p379 = por %p377, %p378
      %p380 = scmp.ne.s32.totalorder %s369, %s372
      %p381 = scmp.eq.s32.totalorder %s32, 1
      %p382 = por %p380, %p381
      %p383 = scmp.ne.s32.totalorder %s372, %s373
      %p384 = scmp.eq.s32.totalorder %s32, 0
      %p385 = por %p383, %p384
      %p386 = scmp.ne.s32.totalorder %s372, %s373
      %p387 = scmp.eq.s32.totalorder %s33, 1
      %p388 = por %p386, %p387
      %p390 = scmp.ne.s32.totalorder %s373, %s389
      %p391 = scmp.eq.s32.totalorder %s33, 0
      %p392 = por %p390, %p391
      %p393 = scmp.le.s32.totalorder 1, %s27
      %p394 = scmp.lt.s32.totalorder %s27, 3
      %p395 = pnand %p393, %p394
      %p396 = pneg %p395
      // Predicated region
      $region9: #{tpu_custom_call.1} parent=5 // pred_check
        _
      $region10: #{tpu_custom_call.1} parent=5 // pred_check_branch
        %398 = sbr.rel (%p395) target = $region12
      $region11: #{tpu_custom_call.1} parent=5 // pred_region
        %s399 = ssub.s32 %s27, 1
        // Predicated region
        $region13: #{tpu_custom_call.1} parent=11 // pred_check
          %p400 = pneg %p140
        $region14: #{tpu_custom_call.1} parent=11 // pred_check_branch
          %402 = sbr.rel (%p400) target = $region16
        $region15: #{tpu_custom_call.1} parent=11 // pred_region
          _
        $region16: #{tpu_custom_call.1} parent=11 // pred_fallthru
          _
        // Predicated region
        $region17: #{tpu_custom_call.1} parent=11 // pred_check
          %p403 = pneg %p161
        $region18: #{tpu_custom_call.1} parent=11 // pred_check_branch
          %405 = sbr.rel (%p403) target = $region20
        $region19: #{tpu_custom_call.1} parent=11 // pred_region
          _
        $region20: #{tpu_custom_call.1} parent=11 // pred_fallthru
          _
        // Predicated region
        $region21: #{tpu_custom_call.1} parent=11 // pred_check
          %p406 = pneg %p182
        $region22: #{tpu_custom_call.1} parent=11 // pred_check_branch
          %408 = sbr.rel (%p406) target = $region24
        $region23: #{tpu_custom_call.1} parent=11 // pred_region
          _
        $region24: #{tpu_custom_call.1} parent=11 // pred_fallthru
          _
        // Predicated region
        $region25: #{tpu_custom_call.1} parent=11 // pred_check
          %p409 = pneg %p203
        $region26: #{tpu_custom_call.1} parent=11 // pred_check_branch
          %411 = sbr.rel (%p409) target = $region28
        $region27: #{tpu_custom_call.1} parent=11 // pred_region
          _
        $region28: #{tpu_custom_call.1} parent=11 // pred_fallthru
          _
        // Predicated region
        $region29: #{tpu_custom_call.1} parent=11 // pred_check
          %p412 = pneg %p224
        $region30: #{tpu_custom_call.1} parent=11 // pred_check_branch
          %414 = sbr.rel (%p412) target = $region32
        $region31: #{tpu_custom_call.1} parent=11 // pred_region
          _
        $region32: #{tpu_custom_call.1} parent=11 // pred_fallthru
          _
        // Predicated region
        $region33: #{tpu_custom_call.1} parent=11 // pred_check
          %p415 = pneg %p245
        $region34: #{tpu_custom_call.1} parent=11 // pred_check_branch
          %417 = sbr.rel (%p415) target = $region36
        $region35: #{tpu_custom_call.1} parent=11 // pred_region
          _
        $region36: #{tpu_custom_call.1} parent=11 // pred_fallthru
          _
        // Predicated region
        $region37: #{tpu_custom_call.1} parent=11 // pred_check
          %p418 = pneg %p266
        $region38: #{tpu_custom_call.1} parent=11 // pred_check_branch
          %420 = sbr.rel (%p418) target = $region40
        $region39: #{tpu_custom_call.1} parent=11 // pred_region
          _
        $region40: #{tpu_custom_call.1} parent=11 // pred_fallthru
          _
        // Predicated region
        $region41: #{tpu_custom_call.1} parent=11 // pred_check
          %p421 = pneg %p287
        $region42: #{tpu_custom_call.1} parent=11 // pred_check_branch
          %423 = sbr.rel (%p421) target = $region44
        $region43: #{tpu_custom_call.1} parent=11 // pred_region
          _
        $region44: #{tpu_custom_call.1} parent=11 // pred_fallthru
          _
        // Predicated region
        $region45: #{tpu_custom_call.1} parent=11 // pred_check
          %p424 = pneg %p308
        $region46: #{tpu_custom_call.1} parent=11 // pred_check_branch
          %426 = sbr.rel (%p424) target = $region48
        $region47: #{tpu_custom_call.1} parent=11 // pred_region
          _
        $region48: #{tpu_custom_call.1} parent=11 // pred_fallthru
          _
        // Predicated region
        $region49: #{tpu_custom_call.1} parent=11 // pred_check
          %p427 = pneg %p329
        $region50: #{tpu_custom_call.1} parent=11 // pred_check_branch
          %429 = sbr.rel (%p427) target = $region52
        $region51: #{tpu_custom_call.1} parent=11 // pred_region
          _
        $region52: #{tpu_custom_call.1} parent=11 // pred_fallthru
          _
      $region12: #{tpu_custom_call.1} parent=5 // pred_fallthru
        _
      %p430 = scmp.lt.s32.totalorder %s27, 2
      // Predicated region
      $region53: #{tpu_custom_call.1} parent=5 // pred_check
        %p431 = pneg %p430
      $region54: #{tpu_custom_call.1} parent=5 // pred_check_branch
        %433 = sbr.rel (%p431) target = $region56
      $region55: #{tpu_custom_call.1} parent=5 // pred_region
        // Predicated region
        $region57: #{tpu_custom_call.1} parent=55 // pred_check
          %p434 = pneg %p59
        $region58: #{tpu_custom_call.1} parent=55 // pred_check_branch
          %436 = sbr.rel (%p434) target = $region60
        $region59: #{tpu_custom_call.1} parent=55 // pred_region
          %p437 = scmp.lt.s32.totalorder %s34, 1
          %s438 = scalar_select %p437, %s34, 1
          %s439 = smul.addr %s438, 8
          %s440 = scalar_lea.vmem %s0, %s439
        $region60: #{tpu_custom_call.1} parent=55 // pred_fallthru
          _
        // Predicated region
        $region61: #{tpu_custom_call.1} parent=55 // pred_check
          %p441 = pneg %p85
        $region62: #{tpu_custom_call.1} parent=55 // pred_check_branch
          %443 = sbr.rel (%p441) target = $region64
        $region63: #{tpu_custom_call.1} parent=55 // pred_region
          %p444 = scmp.lt.s32.totalorder %s34, 1
          %s445 = scalar_select %p444, %s34, 1
          %s446 = smul.addr %s445, 8
          %s447 = scalar_lea.vmem %s1, %s446
        $region64: #{tpu_custom_call.1} parent=55 // pred_fallthru
          _
        // Predicated region
        $region65: #{tpu_custom_call.1} parent=55 // pred_check
          %p448 = pneg %p113
        $region66: #{tpu_custom_call.1} parent=55 // pred_check_branch
          %450 = sbr.rel (%p448) target = $region68
        $region67: #{tpu_custom_call.1} parent=55 // pred_region
          %p451 = scmp.lt.s32.totalorder %s34, 1
          %s452 = scalar_select %p451, %s34, 1
          %p453 = scmp.lt.s32.totalorder %s35, 0
          %s454 = scalar_select %p453, %s35, 0
          %s455 = sadd.s32 %s454, %s452
          %s456 = smul.addr %s455, 8
          %s457 = scalar_lea.vmem %s2, %s456
        $region68: #{tpu_custom_call.1} parent=55 // pred_fallthru
          _
      $region56: #{tpu_custom_call.1} parent=5 // pred_fallthru
        _
      %p458 = scmp.le.s32.totalorder 1, %s27
      %p459 = scmp.lt.s32.totalorder %s27, 3
      %p460 = pnand %p458, %p459
      %p461 = pneg %p460
      // Predicated region
      $region69: #{tpu_custom_call.1} parent=5 // pred_check
        _
      $region70: #{tpu_custom_call.1} parent=5 // pred_check_branch
        %463 = sbr.rel (%p460) target = $region72
      $region71: #{tpu_custom_call.1} parent=5 // pred_region
        %s464 = ssub.s32 %s27, 1
        %p465 = scmp.lt.s32.totalorder %s36, 1
        %s466 = scalar_select %p465, %s36, 1
        %s467 = smul.addr %s466, 8
        %s468 = scalar_lea.vmem %s0, %s467
        %p469 = pneg %p65
        %p470 = pneg %p62
        %p471 = scmp.lt.s32.totalorder %s36, 1
        %s472 = scalar_select %p471, %s36, 1
        %s473 = smul.addr %s472, 8
        %s474 = scalar_lea.vmem %s1, %s473
        %p475 = pneg %p91
        %p476 = pneg %p88
        %p477 = scmp.lt.s32.totalorder %s36, 1
        %s478 = scalar_select %p477, %s36, 1
        %p479 = scmp.lt.s32.totalorder %s37, 0
        %s480 = scalar_select %p479, %s37, 0
        %s481 = sadd.s32 %s480, %s478
        %s482 = smul.addr %s481, 8
        %s483 = scalar_lea.vmem %s2, %s482
        %p484 = pneg %p119
        %p485 = pneg %p116
        %p486 = pneg %p140
        %p487 = pneg %p137
        %p488 = pneg %p161
        %p489 = pneg %p158
        %p490 = pneg %p182
        %p491 = pneg %p179
        %p492 = pneg %p203
        %p493 = pneg %p200
        %p494 = pneg %p224
        %p495 = pneg %p221
        %p496 = pneg %p245
        %p497 = pneg %p242
        %p498 = pneg %p266
        %p499 = pneg %p263
        %p500 = pneg %p287
        %p501 = pneg %p284
        %p502 = pneg %p308
        %p503 = pneg %p305
        %p504 = pneg %p329
        %p505 = pneg %p326
        %p506 = pneg %p357
        %p507 = pneg %p354
        %s508 = sand.u32 %s344, 1
        %s509 = scalar_lea.sflag [#allocation6], %s508
        %s510 = sand.u32 %s344, 1
        %s511 = smul.addr %s510, 8
        %s512 = scalar_lea.vmem [#allocation5], %s511
        %p513 = pneg %p385
        %p514 = pneg %p382
        %s515 = sand.u32 %s372, 1
        %s516 = scalar_lea.sflag [#allocation8], %s515
        %s517 = sand.u32 %s372, 1
        %s518 = smul.addr %s517, 32
        %s519 = scalar_lea.vmem [#allocation7], %s518
        %p520 = scmp.lt.s32.totalorder %s36, 1
        %s521 = scalar_select %p520, %s36, 1
        %s522 = smul.addr %s521, 8
        %s523 = scalar_lea.vmem %s0, %s522
        %p524 = scmp.lt.s32.totalorder %s36, 1
        %s525 = scalar_select %p524, %s36, 1
        %s526 = smul.addr %s525, 8
        %s527 = scalar_lea.vmem %s1, %s526
        %p528 = scmp.lt.s32.totalorder %s36, 1
        %s529 = scalar_select %p528, %s36, 1
        %p530 = scmp.lt.s32.totalorder %s37, 0
        %s531 = scalar_select %p530, %s37, 0
        %s532 = sadd.s32 %s531, %s529
        %s533 = smul.addr %s532, 8
        %s534 = scalar_lea.vmem %s2, %s533
        %p535 = scmp.eq.s32.totalorder %s37, 0
        // Predicated region
        $region73: #{tpu_custom_call.1} parent=71 // pred_check
          %p536 = pneg %p535
        $region74: #{tpu_custom_call.1} parent=71 // pred_check_branch
          %538 = sbr.rel (%p536) target = $region76
        $region75: #{tpu_custom_call.1} parent=71 // pred_region
          %v539 = vld [vmem:[%s523] sm:$0xff]
          %v540 = vld [vmem:[%s527] sm:$0xff]
          %v541 = vld [vmem:[%s3] sm:$0xff]
          %v542 = vld [vmem:[%s3 + $0x8] sm:$0xff]
          %v543 = vld [vmem:[%s3 + $0x10] sm:$0xff]
          %v544 = vld [vmem:[%s3 + $0x18] sm:$0xff]
          %v545 = vld [vmem:[%s4] sm:$0x1]
          %v547 = vlaneseq
          %v548 = vshrl.u32 %v547, 7
          %v549 = vsub.s32 0, %v548
          %v550 = vrot.slane %v545, %v549
          %vm552 = vcmask 261120
          %v554 = vsel %vm552, %v539, 0
          %556 = vmatprep.subr.mxu0 0.0
          %557 = vmatpush1.msra.mxu0 0.0
          %558 = vmatprep.subr.mxu0 0.0
          %559 = vmatpush1.msra.mxu0 0.0
          %560 = vmatprep.subr.mxu0 0.0
          %561 = vmatpush1.msra.mxu0 0.0
          %562 = vmatprep.subr.mxu0 0.0
          %563 = vmatpush1.msra.mxu0 0.0
          %564 = vmatprep.subr.mxu0 0.0
          %565 = vmatpush1.msra.mxu0 0.0
          %566 = vmatprep.subr.mxu0 0.0
          %567 = vmatpush1.msra.mxu0 0.0
          %568 = vmatprep.subr.mxu0 0.0
          %569 = vmatpush1.msra.mxu0 0.0
          %570 = vmatprep.subr.mxu0 0.0
          %571 = vmatpush1.msra.mxu0 0.0
          %572 = vmatprep.subr.mxu0 0.0
          %573 = vmatpush1.msra.mxu0 0.0
          %574 = vmatprep.subr.mxu0 0.0
          %575 = vmatpush1.msra.mxu0 0.0
          %576 = vmatprep.subr.mxu0 0.0
          %577 = vmatpush1.msra.mxu0 0.0
          %578 = vmatprep.subr.mxu0 0.0
          %579 = vmatpush1.msra.mxu0 0.0
          %580 = vmatprep.subr.mxu0 0.0
          %581 = vmatpush1.msra.mxu0 %v544
          %582 = vmatprep.subr.mxu0 0.0
          %583 = vmatpush1.msra.mxu0 %v543
          %584 = vmatprep.subr.mxu0 0.0
          %585 = vmatpush1.msra.mxu0 %v542
          %586 = vmatprep.subr.mxu0 0.0
          %587 = vmatpush1.msra.mxu0 %v541
          %588 = vmatprep.subr.mxu0 0.0
          %589 = vmatpush2.msra.mxu0 0.0
          %590 = vmatprep.subr.mxu0 0.0
          %591 = vmatpush2.msra.mxu0 0.0
          %592 = vmatprep.subr.mxu0 0.0
          %593 = vmatpush2.msra.mxu0 0.0
          %594 = vmatprep.subr.mxu0 0.0
          %595 = vmatpush2.msra.mxu0 0.0
          %596 = vmatprep.subr.mxu0 0.0
          %597 = vmatpush2.msra.mxu0 0.0
          %598 = vmatprep.subr.mxu0 0.0
          %599 = vmatpush2.msra.mxu0 0.0
          %600 = vmatprep.subr.mxu0 0.0
          %601 = vmatpush2.msra.mxu0 0.0
          %602 = vmatprep.subr.mxu0 0.0
          %603 = vmatpush2.msra.mxu0 0.0
          %604 = vmatprep.subr.mxu0 0.0
          %605 = vmatpush2.msra.mxu0 0.0
          %606 = vmatprep.subr.mxu0 0.0
          %607 = vmatpush2.msra.mxu0 0.0
          %608 = vmatprep.subr.mxu0 0.0
          %609 = vmatpush2.msra.mxu0 0.0
          %610 = vmatprep.subr.mxu0 0.0
          %611 = vmatpush2.msra.mxu0 0.0
          %612 = vmatprep.subr.mxu0 0.0
          %613 = vmatpush2.msra.mxu0 0.0
          %614 = vmatprep.subr.mxu0 0.0
          %615 = vmatpush2.msra.mxu0 0.0
          %616 = vmatprep.subr.mxu0 0.0
          %617 = vmatpush2.msra.mxu0 0.0
          %618 = vmatprep.subr.mxu0 0.0
          %619 = vmatpush2.msra.mxu0 0.0
          %620 = vmatprep.mubr.f32.mxu0 0.0
          %621 = vmatmul.mubr.f32.gmra.mxu0 %v554
          %v622 = vpop.f32.mrf.mxu0
          %v623 = vadd.f32 %v550, %v622
          %v624 = vpop.f32.mrf.mxu0
          %625 = vdwg.mxu0
          %v626 = vld [vmem:[%s5] sm:$0xff]
          %v627 = vld [vmem:[%s5 + $0x8] sm:$0xff]
          %v628 = vld [vmem:[%s5 + $0x10] sm:$0xff]
          %v629 = vld [vmem:[%s5 + $0x18] sm:$0xff]
          %v630 = vld [vmem:[%s6] sm:$0x1]
          %v632 = vlaneseq
          %v633 = vshrl.u32 %v632, 7
          %v634 = vsub.s32 0, %v633
          %v635 = vrot.slane %v630, %v634
          %v638 = vsel %vm552, %v540, 0
          %640 = vmatprep.subr.mxu0 0.0
          %641 = vmatpush1.msra.mxu0 0.0
          %642 = vmatprep.subr.mxu0 0.0
          %643 = vmatpush1.msra.mxu0 0.0
          %644 = vmatprep.subr.mxu0 0.0
          %645 = vmatpush1.msra.mxu0 0.0
          %646 = vmatprep.subr.mxu0 0.0
          %647 = vmatpush1.msra.mxu0 0.0
          %648 = vmatprep.subr.mxu0 0.0
          %649 = vmatpush1.msra.mxu0 0.0
          %650 = vmatprep.subr.mxu0 0.0
          %651 = vmatpush1.msra.mxu0 0.0
          %652 = vmatprep.subr.mxu0 0.0
          %653 = vmatpush1.msra.mxu0 0.0
          %654 = vmatprep.subr.mxu0 0.0
          %655 = vmatpush1.msra.mxu0 0.0
          %656 = vmatprep.subr.mxu0 0.0
          %657 = vmatpush1.msra.mxu0 0.0
          %658 = vmatprep.subr.mxu0 0.0
          %659 = vmatpush1.msra.mxu0 0.0
          %660 = vmatprep.subr.mxu0 0.0
          %661 = vmatpush1.msra.mxu0 0.0
          %662 = vmatprep.subr.mxu0 0.0
          %663 = vmatpush1.msra.mxu0 0.0
          %664 = vmatprep.subr.mxu0 0.0
          %665 = vmatpush1.msra.mxu0 %v629
          %666 = vmatprep.subr.mxu0 0.0
          %667 = vmatpush1.msra.mxu0 %v628
          %668 = vmatprep.subr.mxu0 0.0
          %669 = vmatpush1.msra.mxu0 %v627
          %670 = vmatprep.subr.mxu0 0.0
          %671 = vmatpush1.msra.mxu0 %v626
          %672 = vmatprep.subr.mxu0 0.0
          %673 = vmatpush2.msra.mxu0 0.0
          %674 = vmatprep.subr.mxu0 0.0
          %675 = vmatpush2.msra.mxu0 0.0
          %676 = vmatprep.subr.mxu0 0.0
          %677 = vmatpush2.msra.mxu0 0.0
          %678 = vmatprep.subr.mxu0 0.0
          %679 = vmatpush2.msra.mxu0 0.0
          %680 = vmatprep.subr.mxu0 0.0
          %681 = vmatpush2.msra.mxu0 0.0
          %682 = vmatprep.subr.mxu0 0.0
          %683 = vmatpush2.msra.mxu0 0.0
          %684 = vmatprep.subr.mxu0 0.0
          %685 = vmatpush2.msra.mxu0 0.0
          %686 = vmatprep.subr.mxu0 0.0
          %687 = vmatpush2.msra.mxu0 0.0
          %688 = vmatprep.subr.mxu0 0.0
          %689 = vmatpush2.msra.mxu0 0.0
          %690 = vmatprep.subr.mxu0 0.0
          %691 = vmatpush2.msra.mxu0 0.0
          %692 = vmatprep.subr.mxu0 0.0
          %693 = vmatpush2.msra.mxu0 0.0
          %694 = vmatprep.subr.mxu0 0.0
          %695 = vmatpush2.msra.mxu0 0.0
          %696 = vmatprep.subr.mxu0 0.0
          %697 = vmatpush2.msra.mxu0 0.0
          %698 = vmatprep.subr.mxu0 0.0
          %699 = vmatpush2.msra.mxu0 0.0
          %700 = vmatprep.subr.mxu0 0.0
          %701 = vmatpush2.msra.mxu0 0.0
          %702 = vmatprep.subr.mxu0 0.0
          %703 = vmatpush2.msra.mxu0 0.0
          %704 = vmatprep.mubr.f32.mxu0 0.0
          %705 = vmatmul.mubr.f32.gmra.mxu0 %v638
          %v706 = vpop.f32.mrf.mxu0
          %v707 = vadd.f32 %v635, %v706
          %v708 = vpop.f32.mrf.mxu0
          %709 = vdwg.mxu0
          %vm710 = vcmask 64512
          %711 = vst.msk [vmem:[#allocation2] sm:$0xff] %vm710, %v623
          %712 = vst.msk [vmem:[#allocation3] sm:$0xff] %vm710, %v707
          %s713 = scalar_lea.vmem %s3, 32
          %v714 = vld [vmem:[%s713] sm:$0xff]
          %v715 = vld [vmem:[%s713 + $0x8] sm:$0xff]
          %v716 = vld [vmem:[%s713 + $0x10] sm:$0xff]
          %v717 = vld [vmem:[%s713 + $0x18] sm:$0xff]
          %s718 = scalar_lea.vmem %s4, 1
          %v719 = vld [vmem:[%s718] sm:$0x1]
          %v721 = vlaneseq
          %v722 = vshrl.u32 %v721, 7
          %v723 = vsub.s32 0, %v722
          %v724 = vrot.slane %v719, %v723
          %726 = vmatprep.subr.mxu0 0.0
          %727 = vmatpush1.msra.mxu0 0.0
          %728 = vmatprep.subr.mxu0 0.0
          %729 = vmatpush1.msra.mxu0 0.0
          %730 = vmatprep.subr.mxu0 0.0
          %731 = vmatpush1.msra.mxu0 0.0
          %732 = vmatprep.subr.mxu0 0.0
          %733 = vmatpush1.msra.mxu0 0.0
          %734 = vmatprep.subr.mxu0 0.0
          %735 = vmatpush1.msra.mxu0 0.0
          %736 = vmatprep.subr.mxu0 0.0
          %737 = vmatpush1.msra.mxu0 0.0
          %738 = vmatprep.subr.mxu0 0.0
          %739 = vmatpush1.msra.mxu0 0.0
          %740 = vmatprep.subr.mxu0 0.0
          %741 = vmatpush1.msra.mxu0 0.0
          %742 = vmatprep.subr.mxu0 0.0
          %743 = vmatpush1.msra.mxu0 0.0
          %744 = vmatprep.subr.mxu0 0.0
          %745 = vmatpush1.msra.mxu0 0.0
          %746 = vmatprep.subr.mxu0 0.0
          %747 = vmatpush1.msra.mxu0 0.0
          %748 = vmatprep.subr.mxu0 0.0
          %749 = vmatpush1.msra.mxu0 0.0
          %750 = vmatprep.subr.mxu0 0.0
          %751 = vmatpush1.msra.mxu0 %v717
          %752 = vmatprep.subr.mxu0 0.0
          %753 = vmatpush1.msra.mxu0 %v716
          %754 = vmatprep.subr.mxu0 0.0
          %755 = vmatpush1.msra.mxu0 %v715
          %756 = vmatprep.subr.mxu0 0.0
          %757 = vmatpush1.msra.mxu0 %v714
          %758 = vmatprep.subr.mxu0 0.0
          %759 = vmatpush2.msra.mxu0 0.0
          %760 = vmatprep.subr.mxu0 0.0
          %761 = vmatpush2.msra.mxu0 0.0
          %762 = vmatprep.subr.mxu0 0.0
          %763 = vmatpush2.msra.mxu0 0.0
          %764 = vmatprep.subr.mxu0 0.0
          %765 = vmatpush2.msra.mxu0 0.0
          %766 = vmatprep.subr.mxu0 0.0
          %767 = vmatpush2.msra.mxu0 0.0
          %768 = vmatprep.subr.mxu0 0.0
          %769 = vmatpush2.msra.mxu0 0.0
          %770 = vmatprep.subr.mxu0 0.0
          %771 = vmatpush2.msra.mxu0 0.0
          %772 = vmatprep.subr.mxu0 0.0
          %773 = vmatpush2.msra.mxu0 0.0
          %774 = vmatprep.subr.mxu0 0.0
          %775 = vmatpush2.msra.mxu0 0.0
          %776 = vmatprep.subr.mxu0 0.0
          %777 = vmatpush2.msra.mxu0 0.0
          %778 = vmatprep.subr.mxu0 0.0
          %779 = vmatpush2.msra.mxu0 0.0
          %780 = vmatprep.subr.mxu0 0.0
          %781 = vmatpush2.msra.mxu0 0.0
          %782 = vmatprep.subr.mxu0 0.0
          %783 = vmatpush2.msra.mxu0 0.0
          %784 = vmatprep.subr.mxu0 0.0
          %785 = vmatpush2.msra.mxu0 0.0
          %786 = vmatprep.subr.mxu0 0.0
          %787 = vmatpush2.msra.mxu0 0.0
          %788 = vmatprep.subr.mxu0 0.0
          %789 = vmatpush2.msra.mxu0 0.0
          %790 = vmatprep.mubr.f32.mxu0 0.0
          %791 = vmatmul.mubr.f32.gmra.mxu0 %v554
          %v792 = vpop.f32.mrf.mxu0
          %v793 = vadd.f32 %v724, %v792
          %v794 = vpop.f32.mrf.mxu0
          %795 = vdwg.mxu0
          %s796 = scalar_lea.vmem %s5, 32
          %v797 = vld [vmem:[%s796] sm:$0xff]
          %v798 = vld [vmem:[%s796 + $0x8] sm:$0xff]
          %v799 = vld [vmem:[%s796 + $0x10] sm:$0xff]
          %v800 = vld [vmem:[%s796 + $0x18] sm:$0xff]
          %s801 = scalar_lea.vmem %s6, 1
          %v802 = vld [vmem:[%s801] sm:$0x1]
          %v804 = vlaneseq
          %v805 = vshrl.u32 %v804, 7
          %v806 = vsub.s32 0, %v805
          %v807 = vrot.slane %v802, %v806
          %809 = vmatprep.subr.mxu0 0.0
          %810 = vmatpush1.msra.mxu0 0.0
          %811 = vmatprep.subr.mxu0 0.0
          %812 = vmatpush1.msra.mxu0 0.0
          %813 = vmatprep.subr.mxu0 0.0
          %814 = vmatpush1.msra.mxu0 0.0
          %815 = vmatprep.subr.mxu0 0.0
          %816 = vmatpush1.msra.mxu0 0.0
          %817 = vmatprep.subr.mxu0 0.0
          %818 = vmatpush1.msra.mxu0 0.0
          %819 = vmatprep.subr.mxu0 0.0
          %820 = vmatpush1.msra.mxu0 0.0
          %821 = vmatprep.subr.mxu0 0.0
          %822 = vmatpush1.msra.mxu0 0.0
          %823 = vmatprep.subr.mxu0 0.0
          %824 = vmatpush1.msra.mxu0 0.0
          %825 = vmatprep.subr.mxu0 0.0
          %826 = vmatpush1.msra.mxu0 0.0
          %827 = vmatprep.subr.mxu0 0.0
          %828 = vmatpush1.msra.mxu0 0.0
          %829 = vmatprep.subr.mxu0 0.0
          %830 = vmatpush1.msra.mxu0 0.0
          %831 = vmatprep.subr.mxu0 0.0
          %832 = vmatpush1.msra.mxu0 0.0
          %833 = vmatprep.subr.mxu0 0.0
          %834 = vmatpush1.msra.mxu0 %v800
          %835 = vmatprep.subr.mxu0 0.0
          %836 = vmatpush1.msra.mxu0 %v799
          %837 = vmatprep.subr.mxu0 0.0
          %838 = vmatpush1.msra.mxu0 %v798
          %839 = vmatprep.subr.mxu0 0.0
          %840 = vmatpush1.msra.mxu0 %v797
          %841 = vmatprep.subr.mxu0 0.0
          %842 = vmatpush2.msra.mxu0 0.0
          %843 = vmatprep.subr.mxu0 0.0
          %844 = vmatpush2.msra.mxu0 0.0
          %845 = vmatprep.subr.mxu0 0.0
          %846 = vmatpush2.msra.mxu0 0.0
          %847 = vmatprep.subr.mxu0 0.0
          %848 = vmatpush2.msra.mxu0 0.0
          %849 = vmatprep.subr.mxu0 0.0
          %850 = vmatpush2.msra.mxu0 0.0
          %851 = vmatprep.subr.mxu0 0.0
          %852 = vmatpush2.msra.mxu0 0.0
          %853 = vmatprep.subr.mxu0 0.0
          %854 = vmatpush2.msra.mxu0 0.0
          %855 = vmatprep.subr.mxu0 0.0
          %856 = vmatpush2.msra.mxu0 0.0
          %857 = vmatprep.subr.mxu0 0.0
          %858 = vmatpush2.msra.mxu0 0.0
          %859 = vmatprep.subr.mxu0 0.0
          %860 = vmatpush2.msra.mxu0 0.0
          %861 = vmatprep.subr.mxu0 0.0
          %862 = vmatpush2.msra.mxu0 0.0
          %863 = vmatprep.subr.mxu0 0.0
          %864 = vmatpush2.msra.mxu0 0.0
          %865 = vmatprep.subr.mxu0 0.0
          %866 = vmatpush2.msra.mxu0 0.0
          %867 = vmatprep.subr.mxu0 0.0
          %868 = vmatpush2.msra.mxu0 0.0
          %869 = vmatprep.subr.mxu0 0.0
          %870 = vmatpush2.msra.mxu0 0.0
          %871 = vmatprep.subr.mxu0 0.0
          %872 = vmatpush2.msra.mxu0 0.0
          %873 = vmatprep.mubr.f32.mxu0 0.0
          %874 = vmatmul.mubr.f32.gmra.mxu0 %v638
          %v875 = vpop.f32.mrf.mxu0
          %v876 = vadd.f32 %v807, %v875
          %v877 = vpop.f32.mrf.mxu0
          %878 = vdwg.mxu0
          %s879 = scalar_lea.vmem [#allocation2], 8
          %880 = vst.msk [vmem:[%s879] sm:$0xff] %vm710, %v793
          %s881 = scalar_lea.vmem [#allocation3], 8
          %882 = vst.msk [vmem:[%s881] sm:$0xff] %vm710, %v876
          %s883 = scalar_lea.vmem %s3, 64
          %v884 = vld [vmem:[%s883] sm:$0xff]
          %v885 = vld [vmem:[%s883 + $0x8] sm:$0xff]
          %v886 = vld [vmem:[%s883 + $0x10] sm:$0xff]
          %v887 = vld [vmem:[%s883 + $0x18] sm:$0xff]
          %s888 = scalar_lea.vmem %s4, 2
          %v889 = vld [vmem:[%s888] sm:$0x1]
          %v891 = vlaneseq
          %v892 = vshrl.u32 %v891, 7
          %v893 = vsub.s32 0, %v892
          %v894 = vrot.slane %v889, %v893
          %896 = vmatprep.subr.mxu0 0.0
          %897 = vmatpush1.msra.mxu0 0.0
          %898 = vmatprep.subr.mxu0 0.0
          %899 = vmatpush1.msra.mxu0 0.0
          %900 = vmatprep.subr.mxu0 0.0
          %901 = vmatpush1.msra.mxu0 0.0
          %902 = vmatprep.subr.mxu0 0.0
          %903 = vmatpush1.msra.mxu0 0.0
          %904 = vmatprep.subr.mxu0 0.0
          %905 = vmatpush1.msra.mxu0 0.0
          %906 = vmatprep.subr.mxu0 0.0
          %907 = vmatpush1.msra.mxu0 0.0
          %908 = vmatprep.subr.mxu0 0.0
          %909 = vmatpush1.msra.mxu0 0.0
          %910 = vmatprep.subr.mxu0 0.0
          %911 = vmatpush1.msra.mxu0 0.0
          %912 = vmatprep.subr.mxu0 0.0
          %913 = vmatpush1.msra.mxu0 0.0
          %914 = vmatprep.subr.mxu0 0.0
          %915 = vmatpush1.msra.mxu0 0.0
          %916 = vmatprep.subr.mxu0 0.0
          %917 = vmatpush1.msra.mxu0 0.0
          %918 = vmatprep.subr.mxu0 0.0
          %919 = vmatpush1.msra.mxu0 0.0
          %920 = vmatprep.subr.mxu0 0.0
          %921 = vmatpush1.msra.mxu0 %v887
          %922 = vmatprep.subr.mxu0 0.0
          %923 = vmatpush1.msra.mxu0 %v886
          %924 = vmatprep.subr.mxu0 0.0
          %925 = vmatpush1.msra.mxu0 %v885
          %926 = vmatprep.subr.mxu0 0.0
          %927 = vmatpush1.msra.mxu0 %v884
          %928 = vmatprep.subr.mxu0 0.0
          %929 = vmatpush2.msra.mxu0 0.0
          %930 = vmatprep.subr.mxu0 0.0
          %931 = vmatpush2.msra.mxu0 0.0
          %932 = vmatprep.subr.mxu0 0.0
          %933 = vmatpush2.msra.mxu0 0.0
          %934 = vmatprep.subr.mxu0 0.0
          %935 = vmatpush2.msra.mxu0 0.0
          %936 = vmatprep.subr.mxu0 0.0
          %937 = vmatpush2.msra.mxu0 0.0
          %938 = vmatprep.subr.mxu0 0.0
          %939 = vmatpush2.msra.mxu0 0.0
          %940 = vmatprep.subr.mxu0 0.0
          %941 = vmatpush2.msra.mxu0 0.0
          %942 = vmatprep.subr.mxu0 0.0
          %943 = vmatpush2.msra.mxu0 0.0
          %944 = vmatprep.subr.mxu0 0.0
          %945 = vmatpush2.msra.mxu0 0.0
          %946 = vmatprep.subr.mxu0 0.0
          %947 = vmatpush2.msra.mxu0 0.0
          %948 = vmatprep.subr.mxu0 0.0
          %949 = vmatpush2.msra.mxu0 0.0
          %950 = vmatprep.subr.mxu0 0.0
          %951 = vmatpush2.msra.mxu0 0.0
          %952 = vmatprep.subr.mxu0 0.0
          %953 = vmatpush2.msra.mxu0 0.0
          %954 = vmatprep.subr.mxu0 0.0
          %955 = vmatpush2.msra.mxu0 0.0
          %956 = vmatprep.subr.mxu0 0.0
          %957 = vmatpush2.msra.mxu0 0.0
          %958 = vmatprep.subr.mxu0 0.0
          %959 = vmatpush2.msra.mxu0 0.0
          %960 = vmatprep.mubr.f32.mxu0 0.0
          %961 = vmatmul.mubr.f32.gmra.mxu0 %v554
          %v962 = vpop.f32.mrf.mxu0
          %v963 = vadd.f32 %v894, %v962
          %v964 = vpop.f32.mrf.mxu0
          %965 = vdwg.mxu0
          %s966 = scalar_lea.vmem %s5, 64
          %v967 = vld [vmem:[%s966] sm:$0xff]
          %v968 = vld [vmem:[%s966 + $0x8] sm:$0xff]
          %v969 = vld [vmem:[%s966 + $0x10] sm:$0xff]
          %v970 = vld [vmem:[%s966 + $0x18] sm:$0xff]
          %s971 = scalar_lea.vmem %s6, 2
          %v972 = vld [vmem:[%s971] sm:$0x1]
          %v974 = vlaneseq
          %v975 = vshrl.u32 %v974, 7
          %v976 = vsub.s32 0, %v975
          %v977 = vrot.slane %v972, %v976
          %979 = vmatprep.subr.mxu0 0.0
          %980 = vmatpush1.msra.mxu0 0.0
          %981 = vmatprep.subr.mxu0 0.0
          %982 = vmatpush1.msra.mxu0 0.0
          %983 = vmatprep.subr.mxu0 0.0
          %984 = vmatpush1.msra.mxu0 0.0
          %985 = vmatprep.subr.mxu0 0.0
          %986 = vmatpush1.msra.mxu0 0.0
          %987 = vmatprep.subr.mxu0 0.0
          %988 = vmatpush1.msra.mxu0 0.0
          %989 = vmatprep.subr.mxu0 0.0
          %990 = vmatpush1.msra.mxu0 0.0
          %991 = vmatprep.subr.mxu0 0.0
          %992 = vmatpush1.msra.mxu0 0.0
          %993 = vmatprep.subr.mxu0 0.0
          %994 = vmatpush1.msra.mxu0 0.0
          %995 = vmatprep.subr.mxu0 0.0
          %996 = vmatpush1.msra.mxu0 0.0
          %997 = vmatprep.subr.mxu0 0.0
          %998 = vmatpush1.msra.mxu0 0.0
          %999 = vmatprep.subr.mxu0 0.0
          %1000 = vmatpush1.msra.mxu0 0.0
          %1001 = vmatprep.subr.mxu0 0.0
          %1002 = vmatpush1.msra.mxu0 0.0
          %1003 = vmatprep.subr.mxu0 0.0
          %1004 = vmatpush1.msra.mxu0 %v970
          %1005 = vmatprep.subr.mxu0 0.0
          %1006 = vmatpush1.msra.mxu0 %v969
          %1007 = vmatprep.subr.mxu0 0.0
          %1008 = vmatpush1.msra.mxu0 %v968
          %1009 = vmatprep.subr.mxu0 0.0
          %1010 = vmatpush1.msra.mxu0 %v967
          %1011 = vmatprep.subr.mxu0 0.0
          %1012 = vmatpush2.msra.mxu0 0.0
          %1013 = vmatprep.subr.mxu0 0.0
          %1014 = vmatpush2.msra.mxu0 0.0
          %1015 = vmatprep.subr.mxu0 0.0
          %1016 = vmatpush2.msra.mxu0 0.0
          %1017 = vmatprep.subr.mxu0 0.0
          %1018 = vmatpush2.msra.mxu0 0.0
          %1019 = vmatprep.subr.mxu0 0.0
          %1020 = vmatpush2.msra.mxu0 0.0
          %1021 = vmatprep.subr.mxu0 0.0
          %1022 = vmatpush2.msra.mxu0 0.0
          %1023 = vmatprep.subr.mxu0 0.0
          %1024 = vmatpush2.msra.mxu0 0.0
          %1025 = vmatprep.subr.mxu0 0.0
          %1026 = vmatpush2.msra.mxu0 0.0
          %1027 = vmatprep.subr.mxu0 0.0
          %1028 = vmatpush2.msra.mxu0 0.0
          %1029 = vmatprep.subr.mxu0 0.0
          %1030 = vmatpush2.msra.mxu0 0.0
          %1031 = vmatprep.subr.mxu0 0.0
          %1032 = vmatpush2.msra.mxu0 0.0
          %1033 = vmatprep.subr.mxu0 0.0
          %1034 = vmatpush2.msra.mxu0 0.0
          %1035 = vmatprep.subr.mxu0 0.0
          %1036 = vmatpush2.msra.mxu0 0.0
          %1037 = vmatprep.subr.mxu0 0.0
          %1038 = vmatpush2.msra.mxu0 0.0
          %1039 = vmatprep.subr.mxu0 0.0
          %1040 = vmatpush2.msra.mxu0 0.0
          %1041 = vmatprep.subr.mxu0 0.0
          %1042 = vmatpush2.msra.mxu0 0.0
          %1043 = vmatprep.mubr.f32.mxu0 0.0
          %1044 = vmatmul.mubr.f32.gmra.mxu0 %v638
          %v1045 = vpop.f32.mrf.mxu0
          %v1046 = vadd.f32 %v977, %v1045
          %v1047 = vpop.f32.mrf.mxu0
          %1048 = vdwg.mxu0
          %s1049 = scalar_lea.vmem [#allocation2], 16
          %1050 = vst.msk [vmem:[%s1049] sm:$0xff] %vm710, %v963
          %s1051 = scalar_lea.vmem [#allocation3], 16
          %1052 = vst.msk [vmem:[%s1051] sm:$0xff] %vm710, %v1046
          %s1053 = scalar_lea.vmem %s3, 96
          %v1054 = vld [vmem:[%s1053] sm:$0xff]
          %v1055 = vld [vmem:[%s1053 + $0x8] sm:$0xff]
          %v1056 = vld [vmem:[%s1053 + $0x10] sm:$0xff]
          %v1057 = vld [vmem:[%s1053 + $0x18] sm:$0xff]
          %s1058 = scalar_lea.vmem %s4, 3
          %v1059 = vld [vmem:[%s1058] sm:$0x1]
          %v1061 = vlaneseq
          %v1062 = vshrl.u32 %v1061, 7
          %v1063 = vsub.s32 0, %v1062
          %v1064 = vrot.slane %v1059, %v1063
          %1066 = vmatprep.subr.mxu0 0.0
          %1067 = vmatpush1.msra.mxu0 0.0
          %1068 = vmatprep.subr.mxu0 0.0
          %1069 = vmatpush1.msra.mxu0 0.0
          %1070 = vmatprep.subr.mxu0 0.0
          %1071 = vmatpush1.msra.mxu0 0.0
          %1072 = vmatprep.subr.mxu0 0.0
          %1073 = vmatpush1.msra.mxu0 0.0
          %1074 = vmatprep.subr.mxu0 0.0
          %1075 = vmatpush1.msra.mxu0 0.0
          %1076 = vmatprep.subr.mxu0 0.0
          %1077 = vmatpush1.msra.mxu0 0.0
          %1078 = vmatprep.subr.mxu0 0.0
          %1079 = vmatpush1.msra.mxu0 0.0
          %1080 = vmatprep.subr.mxu0 0.0
          %1081 = vmatpush1.msra.mxu0 0.0
          %1082 = vmatprep.subr.mxu0 0.0
          %1083 = vmatpush1.msra.mxu0 0.0
          %1084 = vmatprep.subr.mxu0 0.0
          %1085 = vmatpush1.msra.mxu0 0.0
          %1086 = vmatprep.subr.mxu0 0.0
          %1087 = vmatpush1.msra.mxu0 0.0
          %1088 = vmatprep.subr.mxu0 0.0
          %1089 = vmatpush1.msra.mxu0 0.0
          %1090 = vmatprep.subr.mxu0 0.0
          %1091 = vmatpush1.msra.mxu0 %v1057
          %1092 = vmatprep.subr.mxu0 0.0
          %1093 = vmatpush1.msra.mxu0 %v1056
          %1094 = vmatprep.subr.mxu0 0.0
          %1095 = vmatpush1.msra.mxu0 %v1055
          %1096 = vmatprep.subr.mxu0 0.0
          %1097 = vmatpush1.msra.mxu0 %v1054
          %1098 = vmatprep.subr.mxu0 0.0
          %1099 = vmatpush2.msra.mxu0 0.0
          %1100 = vmatprep.subr.mxu0 0.0
          %1101 = vmatpush2.msra.mxu0 0.0
          %1102 = vmatprep.subr.mxu0 0.0
          %1103 = vmatpush2.msra.mxu0 0.0
          %1104 = vmatprep.subr.mxu0 0.0
          %1105 = vmatpush2.msra.mxu0 0.0
          %1106 = vmatprep.subr.mxu0 0.0
          %1107 = vmatpush2.msra.mxu0 0.0
          %1108 = vmatprep.subr.mxu0 0.0
          %1109 = vmatpush2.msra.mxu0 0.0
          %1110 = vmatprep.subr.mxu0 0.0
          %1111 = vmatpush2.msra.mxu0 0.0
          %1112 = vmatprep.subr.mxu0 0.0
          %1113 = vmatpush2.msra.mxu0 0.0
          %1114 = vmatprep.subr.mxu0 0.0
          %1115 = vmatpush2.msra.mxu0 0.0
          %1116 = vmatprep.subr.mxu0 0.0
          %1117 = vmatpush2.msra.mxu0 0.0
          %1118 = vmatprep.subr.mxu0 0.0
          %1119 = vmatpush2.msra.mxu0 0.0
          %1120 = vmatprep.subr.mxu0 0.0
          %1121 = vmatpush2.msra.mxu0 0.0
          %1122 = vmatprep.subr.mxu0 0.0
          %1123 = vmatpush2.msra.mxu0 0.0
          %1124 = vmatprep.subr.mxu0 0.0
          %1125 = vmatpush2.msra.mxu0 0.0
          %1126 = vmatprep.subr.mxu0 0.0
          %1127 = vmatpush2.msra.mxu0 0.0
          %1128 = vmatprep.subr.mxu0 0.0
          %1129 = vmatpush2.msra.mxu0 0.0
          %1130 = vmatprep.mubr.f32.mxu0 0.0
          %1131 = vmatmul.mubr.f32.gmra.mxu0 %v554
          %v1132 = vpop.f32.mrf.mxu0
          %v1133 = vadd.f32 %v1064, %v1132
          %v1134 = vpop.f32.mrf.mxu0
          %1135 = vdwg.mxu0
          %s1136 = scalar_lea.vmem %s5, 96
          %v1137 = vld [vmem:[%s1136] sm:$0xff]
          %v1138 = vld [vmem:[%s1136 + $0x8] sm:$0xff]
          %v1139 = vld [vmem:[%s1136 + $0x10] sm:$0xff]
          %v1140 = vld [vmem:[%s1136 + $0x18] sm:$0xff]
          %s1141 = scalar_lea.vmem %s6, 3
          %v1142 = vld [vmem:[%s1141] sm:$0x1]
          %v1144 = vlaneseq
          %v1145 = vshrl.u32 %v1144, 7
          %v1146 = vsub.s32 0, %v1145
          %v1147 = vrot.slane %v1142, %v1146
          %1149 = vmatprep.subr.mxu0 0.0
          %1150 = vmatpush1.msra.mxu0 0.0
          %1151 = vmatprep.subr.mxu0 0.0
          %1152 = vmatpush1.msra.mxu0 0.0
          %1153 = vmatprep.subr.mxu0 0.0
          %1154 = vmatpush1.msra.mxu0 0.0
          %1155 = vmatprep.subr.mxu0 0.0
          %1156 = vmatpush1.msra.mxu0 0.0
          %1157 = vmatprep.subr.mxu0 0.0
          %1158 = vmatpush1.msra.mxu0 0.0
          %1159 = vmatprep.subr.mxu0 0.0
          %1160 = vmatpush1.msra.mxu0 0.0
          %1161 = vmatprep.subr.mxu0 0.0
          %1162 = vmatpush1.msra.mxu0 0.0
          %1163 = vmatprep.subr.mxu0 0.0
          %1164 = vmatpush1.msra.mxu0 0.0
          %1165 = vmatprep.subr.mxu0 0.0
          %1166 = vmatpush1.msra.mxu0 0.0
          %1167 = vmatprep.subr.mxu0 0.0
          %1168 = vmatpush1.msra.mxu0 0.0
          %1169 = vmatprep.subr.mxu0 0.0
          %1170 = vmatpush1.msra.mxu0 0.0
          %1171 = vmatprep.subr.mxu0 0.0
          %1172 = vmatpush1.msra.mxu0 0.0
          %1173 = vmatprep.subr.mxu0 0.0
          %1174 = vmatpush1.msra.mxu0 %v1140
          %1175 = vmatprep.subr.mxu0 0.0
          %1176 = vmatpush1.msra.mxu0 %v1139
          %1177 = vmatprep.subr.mxu0 0.0
          %1178 = vmatpush1.msra.mxu0 %v1138
          %1179 = vmatprep.subr.mxu0 0.0
          %1180 = vmatpush1.msra.mxu0 %v1137
          %1181 = vmatprep.subr.mxu0 0.0
          %1182 = vmatpush2.msra.mxu0 0.0
          %1183 = vmatprep.subr.mxu0 0.0
          %1184 = vmatpush2.msra.mxu0 0.0
          %1185 = vmatprep.subr.mxu0 0.0
          %1186 = vmatpush2.msra.mxu0 0.0
          %1187 = vmatprep.subr.mxu0 0.0
          %1188 = vmatpush2.msra.mxu0 0.0
          %1189 = vmatprep.subr.mxu0 0.0
          %1190 = vmatpush2.msra.mxu0 0.0
          %1191 = vmatprep.subr.mxu0 0.0
          %1192 = vmatpush2.msra.mxu0 0.0
          %1193 = vmatprep.subr.mxu0 0.0
          %1194 = vmatpush2.msra.mxu0 0.0
          %1195 = vmatprep.subr.mxu0 0.0
          %1196 = vmatpush2.msra.mxu0 0.0
          %1197 = vmatprep.subr.mxu0 0.0
          %1198 = vmatpush2.msra.mxu0 0.0
          %1199 = vmatprep.subr.mxu0 0.0
          %1200 = vmatpush2.msra.mxu0 0.0
          %1201 = vmatprep.subr.mxu0 0.0
          %1202 = vmatpush2.msra.mxu0 0.0
          %1203 = vmatprep.subr.mxu0 0.0
          %1204 = vmatpush2.msra.mxu0 0.0
          %1205 = vmatprep.subr.mxu0 0.0
          %1206 = vmatpush2.msra.mxu0 0.0
          %1207 = vmatprep.subr.mxu0 0.0
          %1208 = vmatpush2.msra.mxu0 0.0
          %1209 = vmatprep.subr.mxu0 0.0
          %1210 = vmatpush2.msra.mxu0 0.0
          %1211 = vmatprep.subr.mxu0 0.0
          %1212 = vmatpush2.msra.mxu0 0.0
          %1213 = vmatprep.mubr.f32.mxu0 0.0
          %1214 = vmatmul.mubr.f32.gmra.mxu0 %v638
          %v1215 = vpop.f32.mrf.mxu0
          %v1216 = vadd.f32 %v1147, %v1215
          %v1217 = vpop.f32.mrf.mxu0
          %1218 = vdwg.mxu0
          %s1219 = scalar_lea.vmem [#allocation2], 24
          %1220 = vst.msk [vmem:[%s1219] sm:$0xff] %vm710, %v1133
          %s1221 = scalar_lea.vmem [#allocation3], 24
          %1222 = vst.msk [vmem:[%s1221] sm:$0xff] %vm710, %v1216
        $region76: #{tpu_custom_call.1} parent=71 // pred_fallthru
          _
        %v1223 = vld [vmem:[%s534] sm:$0xff]
        %v1224 = vld [vmem:[%s7] sm:$0xff]
        %v1225 = vld [vmem:[%s7 + $0x8] sm:$0xff]
        %v1226 = vld [vmem:[%s7 + $0x10] sm:$0xff]
        %v1227 = vld [vmem:[%s7 + $0x18] sm:$0xff]
        %v1228 = vld [vmem:[%s8] sm:$0x1]
        %v1230 = vlaneseq
        %v1231 = vshrl.u32 %v1230, 7
        %v1232 = vsub.s32 0, %v1231
        %v1233 = vrot.slane %v1228, %v1232
        %vm1235 = vcmask 261120
        %v1237 = vsel %vm1235, %v1223, 0
        %1239 = vmatprep.subr.mxu0 0.0
        %1240 = vmatpush1.msra.mxu0 0.0
        %1241 = vmatprep.subr.mxu0 0.0
        %1242 = vmatpush1.msra.mxu0 0.0
        %1243 = vmatprep.subr.mxu0 0.0
        %1244 = vmatpush1.msra.mxu0 0.0
        %1245 = vmatprep.subr.mxu0 0.0
        %1246 = vmatpush1.msra.mxu0 0.0
        %1247 = vmatprep.subr.mxu0 0.0
        %1248 = vmatpush1.msra.mxu0 0.0
        %1249 = vmatprep.subr.mxu0 0.0
        %1250 = vmatpush1.msra.mxu0 0.0
        %1251 = vmatprep.subr.mxu0 0.0
        %1252 = vmatpush1.msra.mxu0 0.0
        %1253 = vmatprep.subr.mxu0 0.0
        %1254 = vmatpush1.msra.mxu0 0.0
        %1255 = vmatprep.subr.mxu0 0.0
        %1256 = vmatpush1.msra.mxu0 0.0
        %1257 = vmatprep.subr.mxu0 0.0
        %1258 = vmatpush1.msra.mxu0 0.0
        %1259 = vmatprep.subr.mxu0 0.0
        %1260 = vmatpush1.msra.mxu0 0.0
        %1261 = vmatprep.subr.mxu0 0.0
        %1262 = vmatpush1.msra.mxu0 0.0
        %1263 = vmatprep.subr.mxu0 0.0
        %1264 = vmatpush1.msra.mxu0 %v1227
        %1265 = vmatprep.subr.mxu0 0.0
        %1266 = vmatpush1.msra.mxu0 %v1226
        %1267 = vmatprep.subr.mxu0 0.0
        %1268 = vmatpush1.msra.mxu0 %v1225
        %1269 = vmatprep.subr.mxu0 0.0
        %1270 = vmatpush1.msra.mxu0 %v1224
        %1271 = vmatprep.subr.mxu0 0.0
        %1272 = vmatpush2.msra.mxu0 0.0
        %1273 = vmatprep.subr.mxu0 0.0
        %1274 = vmatpush2.msra.mxu0 0.0
        %1275 = vmatprep.subr.mxu0 0.0
        %1276 = vmatpush2.msra.mxu0 0.0
        %1277 = vmatprep.subr.mxu0 0.0
        %1278 = vmatpush2.msra.mxu0 0.0
        %1279 = vmatprep.subr.mxu0 0.0
        %1280 = vmatpush2.msra.mxu0 0.0
        %1281 = vmatprep.subr.mxu0 0.0
        %1282 = vmatpush2.msra.mxu0 0.0
        %1283 = vmatprep.subr.mxu0 0.0
        %1284 = vmatpush2.msra.mxu0 0.0
        %1285 = vmatprep.subr.mxu0 0.0
        %1286 = vmatpush2.msra.mxu0 0.0
        %1287 = vmatprep.subr.mxu0 0.0
        %1288 = vmatpush2.msra.mxu0 0.0
        %1289 = vmatprep.subr.mxu0 0.0
        %1290 = vmatpush2.msra.mxu0 0.0
        %1291 = vmatprep.subr.mxu0 0.0
        %1292 = vmatpush2.msra.mxu0 0.0
        %1293 = vmatprep.subr.mxu0 0.0
        %1294 = vmatpush2.msra.mxu0 0.0
        %1295 = vmatprep.subr.mxu0 0.0
        %1296 = vmatpush2.msra.mxu0 0.0
        %1297 = vmatprep.subr.mxu0 0.0
        %1298 = vmatpush2.msra.mxu0 0.0
        %1299 = vmatprep.subr.mxu0 0.0
        %1300 = vmatpush2.msra.mxu0 0.0
        %1301 = vmatprep.subr.mxu0 0.0
        %1302 = vmatpush2.msra.mxu0 0.0
        %1303 = vmatprep.mubr.f32.mxu0 0.0
        %1304 = vmatmul.mubr.f32.gmra.mxu0 %v1237
        %v1305 = vpop.f32.mrf.mxu0
        %v1306 = vadd.f32 %v1233, %v1305
        %v1307 = vpop.f32.mrf.mxu0
        %1308 = vdwg.mxu0
        %vm1309 = vcmask 64512
        %1310 = vst.msk [vmem:[#allocation4] sm:$0xff] %vm1309, %v1306
        %s1311 = scalar_lea.vmem %s7, 32
        %v1312 = vld [vmem:[%s1311] sm:$0xff]
        %v1313 = vld [vmem:[%s1311 + $0x8] sm:$0xff]
        %v1314 = vld [vmem:[%s1311 + $0x10] sm:$0xff]
        %v1315 = vld [vmem:[%s1311 + $0x18] sm:$0xff]
        %s1316 = scalar_lea.vmem %s8, 1
        %v1317 = vld [vmem:[%s1316] sm:$0x1]
        %v1319 = vlaneseq
        %v1320 = vshrl.u32 %v1319, 7
        %v1321 = vsub.s32 0, %v1320
        %v1322 = vrot.slane %v1317, %v1321
        %1324 = vmatprep.subr.mxu0 0.0
        %1325 = vmatpush1.msra.mxu0 0.0
        %1326 = vmatprep.subr.mxu0 0.0
        %1327 = vmatpush1.msra.mxu0 0.0
        %1328 = vmatprep.subr.mxu0 0.0
        %1329 = vmatpush1.msra.mxu0 0.0
        %1330 = vmatprep.subr.mxu0 0.0
        %1331 = vmatpush1.msra.mxu0 0.0
        %1332 = vmatprep.subr.mxu0 0.0
        %1333 = vmatpush1.msra.mxu0 0.0
        %1334 = vmatprep.subr.mxu0 0.0
        %1335 = vmatpush1.msra.mxu0 0.0
        %1336 = vmatprep.subr.mxu0 0.0
        %1337 = vmatpush1.msra.mxu0 0.0
        %1338 = vmatprep.subr.mxu0 0.0
        %1339 = vmatpush1.msra.mxu0 0.0
        %1340 = vmatprep.subr.mxu0 0.0
        %1341 = vmatpush1.msra.mxu0 0.0
        %1342 = vmatprep.subr.mxu0 0.0
        %1343 = vmatpush1.msra.mxu0 0.0
        %1344 = vmatprep.subr.mxu0 0.0
        %1345 = vmatpush1.msra.mxu0 0.0
        %1346 = vmatprep.subr.mxu0 0.0
        %1347 = vmatpush1.msra.mxu0 0.0
        %1348 = vmatprep.subr.mxu0 0.0
        %1349 = vmatpush1.msra.mxu0 %v1315
        %1350 = vmatprep.subr.mxu0 0.0
        %1351 = vmatpush1.msra.mxu0 %v1314
        %1352 = vmatprep.subr.mxu0 0.0
        %1353 = vmatpush1.msra.mxu0 %v1313
        %1354 = vmatprep.subr.mxu0 0.0
        %1355 = vmatpush1.msra.mxu0 %v1312
        %1356 = vmatprep.subr.mxu0 0.0
        %1357 = vmatpush2.msra.mxu0 0.0
        %1358 = vmatprep.subr.mxu0 0.0
        %1359 = vmatpush2.msra.mxu0 0.0
        %1360 = vmatprep.subr.mxu0 0.0
        %1361 = vmatpush2.msra.mxu0 0.0
        %1362 = vmatprep.subr.mxu0 0.0
        %1363 = vmatpush2.msra.mxu0 0.0
        %1364 = vmatprep.subr.mxu0 0.0
        %1365 = vmatpush2.msra.mxu0 0.0
        %1366 = vmatprep.subr.mxu0 0.0
        %1367 = vmatpush2.msra.mxu0 0.0
        %1368 = vmatprep.subr.mxu0 0.0
        %1369 = vmatpush2.msra.mxu0 0.0
        %1370 = vmatprep.subr.mxu0 0.0
        %1371 = vmatpush2.msra.mxu0 0.0
        %1372 = vmatprep.subr.mxu0 0.0
        %1373 = vmatpush2.msra.mxu0 0.0
        %1374 = vmatprep.subr.mxu0 0.0
        %1375 = vmatpush2.msra.mxu0 0.0
        %1376 = vmatprep.subr.mxu0 0.0
        %1377 = vmatpush2.msra.mxu0 0.0
        %1378 = vmatprep.subr.mxu0 0.0
        %1379 = vmatpush2.msra.mxu0 0.0
        %1380 = vmatprep.subr.mxu0 0.0
        %1381 = vmatpush2.msra.mxu0 0.0
        %1382 = vmatprep.subr.mxu0 0.0
        %1383 = vmatpush2.msra.mxu0 0.0
        %1384 = vmatprep.subr.mxu0 0.0
        %1385 = vmatpush2.msra.mxu0 0.0
        %1386 = vmatprep.subr.mxu0 0.0
        %1387 = vmatpush2.msra.mxu0 0.0
        %1388 = vmatprep.mubr.f32.mxu0 0.0
        %1389 = vmatmul.mubr.f32.gmra.mxu0 %v1237
        %v1390 = vpop.f32.mrf.mxu0
        %v1391 = vadd.f32 %v1322, %v1390
        %v1392 = vpop.f32.mrf.mxu0
        %1393 = vdwg.mxu0
        %s1394 = scalar_lea.vmem [#allocation4], 8
        %1395 = vst.msk [vmem:[%s1394] sm:$0xff] %vm1309, %v1391
        %s1396 = scalar_lea.vmem %s7, 64
        %v1397 = vld [vmem:[%s1396] sm:$0xff]
        %v1398 = vld [vmem:[%s1396 + $0x8] sm:$0xff]
        %v1399 = vld [vmem:[%s1396 + $0x10] sm:$0xff]
        %v1400 = vld [vmem:[%s1396 + $0x18] sm:$0xff]
        %s1401 = scalar_lea.vmem %s8, 2
        %v1402 = vld [vmem:[%s1401] sm:$0x1]
        %v1404 = vlaneseq
        %v1405 = vshrl.u32 %v1404, 7
        %v1406 = vsub.s32 0, %v1405
        %v1407 = vrot.slane %v1402, %v1406
        %1409 = vmatprep.subr.mxu0 0.0
        %1410 = vmatpush1.msra.mxu0 0.0
        %1411 = vmatprep.subr.mxu0 0.0
        %1412 = vmatpush1.msra.mxu0 0.0
        %1413 = vmatprep.subr.mxu0 0.0
        %1414 = vmatpush1.msra.mxu0 0.0
        %1415 = vmatprep.subr.mxu0 0.0
        %1416 = vmatpush1.msra.mxu0 0.0
        %1417 = vmatprep.subr.mxu0 0.0
        %1418 = vmatpush1.msra.mxu0 0.0
        %1419 = vmatprep.subr.mxu0 0.0
        %1420 = vmatpush1.msra.mxu0 0.0
        %1421 = vmatprep.subr.mxu0 0.0
        %1422 = vmatpush1.msra.mxu0 0.0
        %1423 = vmatprep.subr.mxu0 0.0
        %1424 = vmatpush1.msra.mxu0 0.0
        %1425 = vmatprep.subr.mxu0 0.0
        %1426 = vmatpush1.msra.mxu0 0.0
        %1427 = vmatprep.subr.mxu0 0.0
        %1428 = vmatpush1.msra.mxu0 0.0
        %1429 = vmatprep.subr.mxu0 0.0
        %1430 = vmatpush1.msra.mxu0 0.0
        %1431 = vmatprep.subr.mxu0 0.0
        %1432 = vmatpush1.msra.mxu0 0.0
        %1433 = vmatprep.subr.mxu0 0.0
        %1434 = vmatpush1.msra.mxu0 %v1400
        %1435 = vmatprep.subr.mxu0 0.0
        %1436 = vmatpush1.msra.mxu0 %v1399
        %1437 = vmatprep.subr.mxu0 0.0
        %1438 = vmatpush1.msra.mxu0 %v1398
        %1439 = vmatprep.subr.mxu0 0.0
        %1440 = vmatpush1.msra.mxu0 %v1397
        %1441 = vmatprep.subr.mxu0 0.0
        %1442 = vmatpush2.msra.mxu0 0.0
        %1443 = vmatprep.subr.mxu0 0.0
        %1444 = vmatpush2.msra.mxu0 0.0
        %1445 = vmatprep.subr.mxu0 0.0
        %1446 = vmatpush2.msra.mxu0 0.0
        %1447 = vmatprep.subr.mxu0 0.0
        %1448 = vmatpush2.msra.mxu0 0.0
        %1449 = vmatprep.subr.mxu0 0.0
        %1450 = vmatpush2.msra.mxu0 0.0
        %1451 = vmatprep.subr.mxu0 0.0
        %1452 = vmatpush2.msra.mxu0 0.0
        %1453 = vmatprep.subr.mxu0 0.0
        %1454 = vmatpush2.msra.mxu0 0.0
        %1455 = vmatprep.subr.mxu0 0.0
        %1456 = vmatpush2.msra.mxu0 0.0
        %1457 = vmatprep.subr.mxu0 0.0
        %1458 = vmatpush2.msra.mxu0 0.0
        %1459 = vmatprep.subr.mxu0 0.0
        %1460 = vmatpush2.msra.mxu0 0.0
        %1461 = vmatprep.subr.mxu0 0.0
        %1462 = vmatpush2.msra.mxu0 0.0
        %1463 = vmatprep.subr.mxu0 0.0
        %1464 = vmatpush2.msra.mxu0 0.0
        %1465 = vmatprep.subr.mxu0 0.0
        %1466 = vmatpush2.msra.mxu0 0.0
        %1467 = vmatprep.subr.mxu0 0.0
        %1468 = vmatpush2.msra.mxu0 0.0
        %1469 = vmatprep.subr.mxu0 0.0
        %1470 = vmatpush2.msra.mxu0 0.0
        %1471 = vmatprep.subr.mxu0 0.0
        %1472 = vmatpush2.msra.mxu0 0.0
        %1473 = vmatprep.mubr.f32.mxu0 0.0
        %1474 = vmatmul.mubr.f32.gmra.mxu0 %v1237
        %v1475 = vpop.f32.mrf.mxu0
        %v1476 = vadd.f32 %v1407, %v1475
        %v1477 = vpop.f32.mrf.mxu0
        %1478 = vdwg.mxu0
        %s1479 = scalar_lea.vmem [#allocation4], 16
        %1480 = vst.msk [vmem:[%s1479] sm:$0xff] %vm1309, %v1476
        %s1481 = scalar_lea.vmem %s7, 96
        %v1482 = vld [vmem:[%s1481] sm:$0xff]
        %v1483 = vld [vmem:[%s1481 + $0x8] sm:$0xff]
        %v1484 = vld [vmem:[%s1481 + $0x10] sm:$0xff]
        %v1485 = vld [vmem:[%s1481 + $0x18] sm:$0xff]
        %s1486 = scalar_lea.vmem %s8, 3
        %v1487 = vld [vmem:[%s1486] sm:$0x1]
        %v1489 = vlaneseq
        %v1490 = vshrl.u32 %v1489, 7
        %v1491 = vsub.s32 0, %v1490
        %v1492 = vrot.slane %v1487, %v1491
        %1494 = vmatprep.subr.mxu0 0.0
        %1495 = vmatpush1.msra.mxu0 0.0
        %1496 = vmatprep.subr.mxu0 0.0
        %1497 = vmatpush1.msra.mxu0 0.0
        %1498 = vmatprep.subr.mxu0 0.0
        %1499 = vmatpush1.msra.mxu0 0.0
        %1500 = vmatprep.subr.mxu0 0.0
        %1501 = vmatpush1.msra.mxu0 0.0
        %1502 = vmatprep.subr.mxu0 0.0
        %1503 = vmatpush1.msra.mxu0 0.0
        %1504 = vmatprep.subr.mxu0 0.0
        %1505 = vmatpush1.msra.mxu0 0.0
        %1506 = vmatprep.subr.mxu0 0.0
        %1507 = vmatpush1.msra.mxu0 0.0
        %1508 = vmatprep.subr.mxu0 0.0
        %1509 = vmatpush1.msra.mxu0 0.0
        %1510 = vmatprep.subr.mxu0 0.0
        %1511 = vmatpush1.msra.mxu0 0.0
        %1512 = vmatprep.subr.mxu0 0.0
        %1513 = vmatpush1.msra.mxu0 0.0
        %1514 = vmatprep.subr.mxu0 0.0
        %1515 = vmatpush1.msra.mxu0 0.0
        %1516 = vmatprep.subr.mxu0 0.0
        %1517 = vmatpush1.msra.mxu0 0.0
        %1518 = vmatprep.subr.mxu0 0.0
        %1519 = vmatpush1.msra.mxu0 %v1485
        %1520 = vmatprep.subr.mxu0 0.0
        %1521 = vmatpush1.msra.mxu0 %v1484
        %1522 = vmatprep.subr.mxu0 0.0
        %1523 = vmatpush1.msra.mxu0 %v1483
        %1524 = vmatprep.subr.mxu0 0.0
        %1525 = vmatpush1.msra.mxu0 %v1482
        %1526 = vmatprep.subr.mxu0 0.0
        %1527 = vmatpush2.msra.mxu0 0.0
        %1528 = vmatprep.subr.mxu0 0.0
        %1529 = vmatpush2.msra.mxu0 0.0
        %1530 = vmatprep.subr.mxu0 0.0
        %1531 = vmatpush2.msra.mxu0 0.0
        %1532 = vmatprep.subr.mxu0 0.0
        %1533 = vmatpush2.msra.mxu0 0.0
        %1534 = vmatprep.subr.mxu0 0.0
        %1535 = vmatpush2.msra.mxu0 0.0
        %1536 = vmatprep.subr.mxu0 0.0
        %1537 = vmatpush2.msra.mxu0 0.0
        %1538 = vmatprep.subr.mxu0 0.0
        %1539 = vmatpush2.msra.mxu0 0.0
        %1540 = vmatprep.subr.mxu0 0.0
        %1541 = vmatpush2.msra.mxu0 0.0
        %1542 = vmatprep.subr.mxu0 0.0
        %1543 = vmatpush2.msra.mxu0 0.0
        %1544 = vmatprep.subr.mxu0 0.0
        %1545 = vmatpush2.msra.mxu0 0.0
        %1546 = vmatprep.subr.mxu0 0.0
        %1547 = vmatpush2.msra.mxu0 0.0
        %1548 = vmatprep.subr.mxu0 0.0
        %1549 = vmatpush2.msra.mxu0 0.0
        %1550 = vmatprep.subr.mxu0 0.0
        %1551 = vmatpush2.msra.mxu0 0.0
        %1552 = vmatprep.subr.mxu0 0.0
        %1553 = vmatpush2.msra.mxu0 0.0
        %1554 = vmatprep.subr.mxu0 0.0
        %1555 = vmatpush2.msra.mxu0 0.0
        %1556 = vmatprep.subr.mxu0 0.0
        %1557 = vmatpush2.msra.mxu0 0.0
        %1558 = vmatprep.mubr.f32.mxu0 0.0
        %1559 = vmatmul.mubr.f32.gmra.mxu0 %v1237
        %v1560 = vpop.f32.mrf.mxu0
        %v1561 = vadd.f32 %v1492, %v1560
        %v1562 = vpop.f32.mrf.mxu0
        %1563 = vdwg.mxu0
        %s1564 = scalar_lea.vmem [#allocation4], 24
        %1565 = vst.msk [vmem:[%s1564] sm:$0xff] %vm1309, %v1561
        %v1566 = vld [vmem:[#allocation2] sm:$0xff]
        %v1567 = vld [vmem:[#allocation2 + $0x8] sm:$0xff]
        %v1568 = vld [vmem:[#allocation2 + $0x10] sm:$0xff]
        %v1569 = vld [vmem:[#allocation2 + $0x18] sm:$0xff]
        %v1570 = vld [vmem:[#allocation3] sm:$0xff]
        %v1571 = vld [vmem:[#allocation3 + $0x8] sm:$0xff]
        %v1572 = vld [vmem:[#allocation3 + $0x10] sm:$0xff]
        %v1573 = vld [vmem:[#allocation3 + $0x18] sm:$0xff]
        %v1574 = vld [vmem:[#allocation4] sm:$0xff]
        %v1575 = vld [vmem:[#allocation4 + $0x8] sm:$0xff]
        %v1576 = vld [vmem:[#allocation4 + $0x10] sm:$0xff]
        %v1577 = vld [vmem:[#allocation4 + $0x18] sm:$0xff]
        %v1579 = vsel %vm1309, %v1574, 0
        %v1582 = vsel %vm1309, %v1570, 0
        %1584 = vmatprep.subr.mxu0 0.0
        %1585 = vmatpush1.xpose.msra.mxu0 0.0
        %1586 = vmatprep.subr.mxu0 0.0
        %1587 = vmatpush1.xpose.msra.mxu0 0.0
        %1588 = vmatprep.subr.mxu0 0.0
        %1589 = vmatpush1.xpose.msra.mxu0 0.0
        %1590 = vmatprep.subr.mxu0 0.0
        %1591 = vmatpush1.xpose.msra.mxu0 0.0
        %1592 = vmatprep.subr.mxu0 0.0
        %1593 = vmatpush1.xpose.msra.mxu0 0.0
        %1594 = vmatprep.subr.mxu0 0.0
        %1595 = vmatpush1.xpose.msra.mxu0 0.0
        %1596 = vmatprep.subr.mxu0 0.0
        %1597 = vmatpush1.xpose.msra.mxu0 0.0
        %1598 = vmatprep.subr.mxu0 0.0
        %1599 = vmatpush1.xpose.msra.mxu0 0.0
        %1600 = vmatprep.subr.mxu0 0.0
        %1601 = vmatpush1.xpose.msra.mxu0 0.0
        %1602 = vmatprep.subr.mxu0 0.0
        %1603 = vmatpush1.xpose.msra.mxu0 0.0
        %1604 = vmatprep.subr.mxu0 0.0
        %1605 = vmatpush1.xpose.msra.mxu0 0.0
        %1606 = vmatprep.subr.mxu0 0.0
        %1607 = vmatpush1.xpose.msra.mxu0 0.0
        %1608 = vmatprep.subr.mxu0 0.0
        %1609 = vmatpush1.xpose.msra.mxu0 0.0
        %1610 = vmatprep.subr.mxu0 0.0
        %1611 = vmatpush1.xpose.msra.mxu0 0.0
        %1612 = vmatprep.subr.mxu0 0.0
        %1613 = vmatpush1.xpose.msra.mxu0 0.0
        %1614 = vmatprep.subr.mxu0 0.0
        %1615 = vmatpush1.xpose.msra.mxu0 %v1582
        %1616 = vmatprep.subr.mxu0 0.0
        %1617 = vmatpush2.xpose.msra.mxu0 0.0
        %1618 = vmatprep.subr.mxu0 0.0
        %1619 = vmatpush2.xpose.msra.mxu0 0.0
        %1620 = vmatprep.subr.mxu0 0.0
        %1621 = vmatpush2.xpose.msra.mxu0 0.0
        %1622 = vmatprep.subr.mxu0 0.0
        %1623 = vmatpush2.xpose.msra.mxu0 0.0
        %1624 = vmatprep.subr.mxu0 0.0
        %1625 = vmatpush2.xpose.msra.mxu0 0.0
        %1626 = vmatprep.subr.mxu0 0.0
        %1627 = vmatpush2.xpose.msra.mxu0 0.0
        %1628 = vmatprep.subr.mxu0 0.0
        %1629 = vmatpush2.xpose.msra.mxu0 0.0
        %1630 = vmatprep.subr.mxu0 0.0
        %1631 = vmatpush2.xpose.msra.mxu0 0.0
        %1632 = vmatprep.subr.mxu0 0.0
        %1633 = vmatpush2.xpose.msra.mxu0 0.0
        %1634 = vmatprep.subr.mxu0 0.0
        %1635 = vmatpush2.xpose.msra.mxu0 0.0
        %1636 = vmatprep.subr.mxu0 0.0
        %1637 = vmatpush2.xpose.msra.mxu0 0.0
        %1638 = vmatprep.subr.mxu0 0.0
        %1639 = vmatpush2.xpose.msra.mxu0 0.0
        %1640 = vmatprep.subr.mxu0 0.0
        %1641 = vmatpush2.xpose.msra.mxu0 0.0
        %1642 = vmatprep.subr.mxu0 0.0
        %1643 = vmatpush2.xpose.msra.mxu0 0.0
        %1644 = vmatprep.subr.mxu0 0.0
        %1645 = vmatpush2.xpose.msra.mxu0 0.0
        %1646 = vmatprep.subr.mxu0 0.0
        %1647 = vmatpush2.xpose.msra.mxu0 0.0
        %1648 = vmatprep.mubr.f32.mxu0 0.0
        %1649 = vmatmul.mubr.f32.gmra.mxu0 %v1579
        %v1650 = vpop.f32.mrf.mxu0
        %v1651 = vadd.f32 0.0, %v1650
        %v1652 = vpop.f32.mrf.mxu0
        %1653 = vdwg.mxu0
        %v1655 = vsel %vm1309, %v1575, 0
        %v1658 = vsel %vm1309, %v1571, 0
        %1660 = vmatprep.subr.mxu0 0.0
        %1661 = vmatpush1.xpose.msra.mxu0 0.0
        %1662 = vmatprep.subr.mxu0 0.0
        %1663 = vmatpush1.xpose.msra.mxu0 0.0
        %1664 = vmatprep.subr.mxu0 0.0
        %1665 = vmatpush1.xpose.msra.mxu0 0.0
        %1666 = vmatprep.subr.mxu0 0.0
        %1667 = vmatpush1.xpose.msra.mxu0 0.0
        %1668 = vmatprep.subr.mxu0 0.0
        %1669 = vmatpush1.xpose.msra.mxu0 0.0
        %1670 = vmatprep.subr.mxu0 0.0
        %1671 = vmatpush1.xpose.msra.mxu0 0.0
        %1672 = vmatprep.subr.mxu0 0.0
        %1673 = vmatpush1.xpose.msra.mxu0 0.0
        %1674 = vmatprep.subr.mxu0 0.0
        %1675 = vmatpush1.xpose.msra.mxu0 0.0
        %1676 = vmatprep.subr.mxu0 0.0
        %1677 = vmatpush1.xpose.msra.mxu0 0.0
        %1678 = vmatprep.subr.mxu0 0.0
        %1679 = vmatpush1.xpose.msra.mxu0 0.0
        %1680 = vmatprep.subr.mxu0 0.0
        %1681 = vmatpush1.xpose.msra.mxu0 0.0
        %1682 = vmatprep.subr.mxu0 0.0
        %1683 = vmatpush1.xpose.msra.mxu0 0.0
        %1684 = vmatprep.subr.mxu0 0.0
        %1685 = vmatpush1.xpose.msra.mxu0 0.0
        %1686 = vmatprep.subr.mxu0 0.0
        %1687 = vmatpush1.xpose.msra.mxu0 0.0
        %1688 = vmatprep.subr.mxu0 0.0
        %1689 = vmatpush1.xpose.msra.mxu0 0.0
        %1690 = vmatprep.subr.mxu0 0.0
        %1691 = vmatpush1.xpose.msra.mxu0 %v1658
        %1692 = vmatprep.subr.mxu0 0.0
        %1693 = vmatpush2.xpose.msra.mxu0 0.0
        %1694 = vmatprep.subr.mxu0 0.0
        %1695 = vmatpush2.xpose.msra.mxu0 0.0
        %1696 = vmatprep.subr.mxu0 0.0
        %1697 = vmatpush2.xpose.msra.mxu0 0.0
        %1698 = vmatprep.subr.mxu0 0.0
        %1699 = vmatpush2.xpose.msra.mxu0 0.0
        %1700 = vmatprep.subr.mxu0 0.0
        %1701 = vmatpush2.xpose.msra.mxu0 0.0
        %1702 = vmatprep.subr.mxu0 0.0
        %1703 = vmatpush2.xpose.msra.mxu0 0.0
        %1704 = vmatprep.subr.mxu0 0.0
        %1705 = vmatpush2.xpose.msra.mxu0 0.0
        %1706 = vmatprep.subr.mxu0 0.0
        %1707 = vmatpush2.xpose.msra.mxu0 0.0
        %1708 = vmatprep.subr.mxu0 0.0
        %1709 = vmatpush2.xpose.msra.mxu0 0.0
        %1710 = vmatprep.subr.mxu0 0.0
        %1711 = vmatpush2.xpose.msra.mxu0 0.0
        %1712 = vmatprep.subr.mxu0 0.0
        %1713 = vmatpush2.xpose.msra.mxu0 0.0
        %1714 = vmatprep.subr.mxu0 0.0
        %1715 = vmatpush2.xpose.msra.mxu0 0.0
        %1716 = vmatprep.subr.mxu0 0.0
        %1717 = vmatpush2.xpose.msra.mxu0 0.0
        %1718 = vmatprep.subr.mxu0 0.0
        %1719 = vmatpush2.xpose.msra.mxu0 0.0
        %1720 = vmatprep.subr.mxu0 0.0
        %1721 = vmatpush2.xpose.msra.mxu0 0.0
        %1722 = vmatprep.subr.mxu0 0.0
        %1723 = vmatpush2.xpose.msra.mxu0 0.0
        %1724 = vmatprep.mubr.f32.mxu0 0.0
        %1725 = vmatmul.mubr.f32.gmra.mxu0 %v1655
        %v1726 = vpop.f32.mrf.mxu0
        %v1727 = vadd.f32 0.0, %v1726
        %v1728 = vpop.f32.mrf.mxu0
        %1729 = vdwg.mxu0
        %v1731 = vsel %vm1309, %v1576, 0
        %v1734 = vsel %vm1309, %v1572, 0
        %1736 = vmatprep.subr.mxu0 0.0
        %1737 = vmatpush1.xpose.msra.mxu0 0.0
        %1738 = vmatprep.subr.mxu0 0.0
        %1739 = vmatpush1.xpose.msra.mxu0 0.0
        %1740 = vmatprep.subr.mxu0 0.0
        %1741 = vmatpush1.xpose.msra.mxu0 0.0
        %1742 = vmatprep.subr.mxu0 0.0
        %1743 = vmatpush1.xpose.msra.mxu0 0.0
        %1744 = vmatprep.subr.mxu0 0.0
        %1745 = vmatpush1.xpose.msra.mxu0 0.0
        %1746 = vmatprep.subr.mxu0 0.0
        %1747 = vmatpush1.xpose.msra.mxu0 0.0
        %1748 = vmatprep.subr.mxu0 0.0
        %1749 = vmatpush1.xpose.msra.mxu0 0.0
        %1750 = vmatprep.subr.mxu0 0.0
        %1751 = vmatpush1.xpose.msra.mxu0 0.0
        %1752 = vmatprep.subr.mxu0 0.0
        %1753 = vmatpush1.xpose.msra.mxu0 0.0
        %1754 = vmatprep.subr.mxu0 0.0
        %1755 = vmatpush1.xpose.msra.mxu0 0.0
        %1756 = vmatprep.subr.mxu0 0.0
        %1757 = vmatpush1.xpose.msra.mxu0 0.0
        %1758 = vmatprep.subr.mxu0 0.0
        %1759 = vmatpush1.xpose.msra.mxu0 0.0
        %1760 = vmatprep.subr.mxu0 0.0
        %1761 = vmatpush1.xpose.msra.mxu0 0.0
        %1762 = vmatprep.subr.mxu0 0.0
        %1763 = vmatpush1.xpose.msra.mxu0 0.0
        %1764 = vmatprep.subr.mxu0 0.0
        %1765 = vmatpush1.xpose.msra.mxu0 0.0
        %1766 = vmatprep.subr.mxu0 0.0
        %1767 = vmatpush1.xpose.msra.mxu0 %v1734
        %1768 = vmatprep.subr.mxu0 0.0
        %1769 = vmatpush2.xpose.msra.mxu0 0.0
        %1770 = vmatprep.subr.mxu0 0.0
        %1771 = vmatpush2.xpose.msra.mxu0 0.0
        %1772 = vmatprep.subr.mxu0 0.0
        %1773 = vmatpush2.xpose.msra.mxu0 0.0
        %1774 = vmatprep.subr.mxu0 0.0
        %1775 = vmatpush2.xpose.msra.mxu0 0.0
        %1776 = vmatprep.subr.mxu0 0.0
        %1777 = vmatpush2.xpose.msra.mxu0 0.0
        %1778 = vmatprep.subr.mxu0 0.0
        %1779 = vmatpush2.xpose.msra.mxu0 0.0
        %1780 = vmatprep.subr.mxu0 0.0
        %1781 = vmatpush2.xpose.msra.mxu0 0.0
        %1782 = vmatprep.subr.mxu0 0.0
        %1783 = vmatpush2.xpose.msra.mxu0 0.0
        %1784 = vmatprep.subr.mxu0 0.0
        %1785 = vmatpush2.xpose.msra.mxu0 0.0
        %1786 = vmatprep.subr.mxu0 0.0
        %1787 = vmatpush2.xpose.msra.mxu0 0.0
        %1788 = vmatprep.subr.mxu0 0.0
        %1789 = vmatpush2.xpose.msra.mxu0 0.0
        %1790 = vmatprep.subr.mxu0 0.0
        %1791 = vmatpush2.xpose.msra.mxu0 0.0
        %1792 = vmatprep.subr.mxu0 0.0
        %1793 = vmatpush2.xpose.msra.mxu0 0.0
        %1794 = vmatprep.subr.mxu0 0.0
        %1795 = vmatpush2.xpose.msra.mxu0 0.0
        %1796 = vmatprep.subr.mxu0 0.0
        %1797 = vmatpush2.xpose.msra.mxu0 0.0
        %1798 = vmatprep.subr.mxu0 0.0
        %1799 = vmatpush2.xpose.msra.mxu0 0.0
        %1800 = vmatprep.mubr.f32.mxu0 0.0
        %1801 = vmatmul.mubr.f32.gmra.mxu0 %v1731
        %v1802 = vpop.f32.mrf.mxu0
        %v1803 = vadd.f32 0.0, %v1802
        %v1804 = vpop.f32.mrf.mxu0
        %1805 = vdwg.mxu0
        %v1807 = vsel %vm1309, %v1577, 0
        %v1810 = vsel %vm1309, %v1573, 0
        %1812 = vmatprep.subr.mxu0 0.0
        %1813 = vmatpush1.xpose.msra.mxu0 0.0
        %1814 = vmatprep.subr.mxu0 0.0
        %1815 = vmatpush1.xpose.msra.mxu0 0.0
        %1816 = vmatprep.subr.mxu0 0.0
        %1817 = vmatpush1.xpose.msra.mxu0 0.0
        %1818 = vmatprep.subr.mxu0 0.0
        %1819 = vmatpush1.xpose.msra.mxu0 0.0
        %1820 = vmatprep.subr.mxu0 0.0
        %1821 = vmatpush1.xpose.msra.mxu0 0.0
        %1822 = vmatprep.subr.mxu0 0.0
        %1823 = vmatpush1.xpose.msra.mxu0 0.0
        %1824 = vmatprep.subr.mxu0 0.0
        %1825 = vmatpush1.xpose.msra.mxu0 0.0
        %1826 = vmatprep.subr.mxu0 0.0
        %1827 = vmatpush1.xpose.msra.mxu0 0.0
        %1828 = vmatprep.subr.mxu0 0.0
        %1829 = vmatpush1.xpose.msra.mxu0 0.0
        %1830 = vmatprep.subr.mxu0 0.0
        %1831 = vmatpush1.xpose.msra.mxu0 0.0
        %1832 = vmatprep.subr.mxu0 0.0
        %1833 = vmatpush1.xpose.msra.mxu0 0.0
        %1834 = vmatprep.subr.mxu0 0.0
        %1835 = vmatpush1.xpose.msra.mxu0 0.0
        %1836 = vmatprep.subr.mxu0 0.0
        %1837 = vmatpush1.xpose.msra.mxu0 0.0
        %1838 = vmatprep.subr.mxu0 0.0
        %1839 = vmatpush1.xpose.msra.mxu0 0.0
        %1840 = vmatprep.subr.mxu0 0.0
        %1841 = vmatpush1.xpose.msra.mxu0 0.0
        %1842 = vmatprep.subr.mxu0 0.0
        %1843 = vmatpush1.xpose.msra.mxu0 %v1810
        %1844 = vmatprep.subr.mxu0 0.0
        %1845 = vmatpush2.xpose.msra.mxu0 0.0
        %1846 = vmatprep.subr.mxu0 0.0
        %1847 = vmatpush2.xpose.msra.mxu0 0.0
        %1848 = vmatprep.subr.mxu0 0.0
        %1849 = vmatpush2.xpose.msra.mxu0 0.0
        %1850 = vmatprep.subr.mxu0 0.0
        %1851 = vmatpush2.xpose.msra.mxu0 0.0
        %1852 = vmatprep.subr.mxu0 0.0
        %1853 = vmatpush2.xpose.msra.mxu0 0.0
        %1854 = vmatprep.subr.mxu0 0.0
        %1855 = vmatpush2.xpose.msra.mxu0 0.0
        %1856 = vmatprep.subr.mxu0 0.0
        %1857 = vmatpush2.xpose.msra.mxu0 0.0
        %1858 = vmatprep.subr.mxu0 0.0
        %1859 = vmatpush2.xpose.msra.mxu0 0.0
        %1860 = vmatprep.subr.mxu0 0.0
        %1861 = vmatpush2.xpose.msra.mxu0 0.0
        %1862 = vmatprep.subr.mxu0 0.0
        %1863 = vmatpush2.xpose.msra.mxu0 0.0
        %1864 = vmatprep.subr.mxu0 0.0
        %1865 = vmatpush2.xpose.msra.mxu0 0.0
        %1866 = vmatprep.subr.mxu0 0.0
        %1867 = vmatpush2.xpose.msra.mxu0 0.0
        %1868 = vmatprep.subr.mxu0 0.0
        %1869 = vmatpush2.xpose.msra.mxu0 0.0
        %1870 = vmatprep.subr.mxu0 0.0
        %1871 = vmatpush2.xpose.msra.mxu0 0.0
        %1872 = vmatprep.subr.mxu0 0.0
        %1873 = vmatpush2.xpose.msra.mxu0 0.0
        %1874 = vmatprep.subr.mxu0 0.0
        %1875 = vmatpush2.xpose.msra.mxu0 0.0
        %1876 = vmatprep.mubr.f32.mxu0 0.0
        %1877 = vmatmul.mubr.f32.gmra.mxu0 %v1807
        %v1878 = vpop.f32.mrf.mxu0
        %v1879 = vadd.f32 0.0, %v1878
        %v1880 = vpop.f32.mrf.mxu0
        %1881 = vdwg.mxu0
        %v1882 = vmul.f32 %v1651, 0.35355338
        %v1883 = vmul.f32 %v1727, 0.35355338
        %v1884 = vmul.f32 %v1803, 0.35355338
        %v1885 = vmul.f32 %v1879, 0.35355338
        %v1886 = vsel %vm1309, %v1882, -inf
        %1887 = vmax.xlane.f32.xlu0 %v1886
        %v1888 = vpop.xlane.xlu0 %1887
        %v1889 = vsel %vm1309, %v1883, -inf
        %1890 = vmax.xlane.f32.xlu0 %v1889
        %v1891 = vpop.xlane.xlu0 %1890
        %v1892 = vsel %vm1309, %v1884, -inf
        %1893 = vmax.xlane.f32.xlu0 %v1892
        %v1894 = vpop.xlane.xlu0 %1893
        %v1895 = vsel %vm1309, %v1885, -inf
        %1896 = vmax.xlane.f32.xlu0 %v1895
        %v1897 = vpop.xlane.xlu0 %1896
        %v1898 = vsub.f32 %v1882, %v1888
        %v1899 = vsub.f32 %v1883, %v1891
        %v1900 = vsub.f32 %v1884, %v1894
        %v1901 = vsub.f32 %v1885, %v1897
        %v1902 = vmul.f32 %v1898, 1.442695
        %v1903 = vpow.pop %v1902
        %v1904 = vmul.f32 %v1899, 1.442695
        %v1905 = vpow.pop %v1904
        %v1906 = vmul.f32 %v1900, 1.442695
        %v1907 = vpow.pop %v1906
        %v1908 = vmul.f32 %v1901, 1.442695
        %v1909 = vpow.pop %v1908
        %v1910 = vsel %vm1309, %v1903, 0.0
        %1911 = vadd.xlane.f32.xlu0 %v1910
        %v1912 = vpop.xlane.xlu0 %1911
        %v1913 = vsel %vm1309, %v1905, 0.0
        %1914 = vadd.xlane.f32.xlu0 %v1913
        %v1915 = vpop.xlane.xlu0 %1914
        %v1916 = vsel %vm1309, %v1907, 0.0
        %1917 = vadd.xlane.f32.xlu0 %v1916
        %v1918 = vpop.xlane.xlu0 %1917
        %v1919 = vsel %vm1309, %v1909, 0.0
        %1920 = vadd.xlane.f32.xlu0 %v1919
        %v1921 = vpop.xlane.xlu0 %1920
        %v1922 = vrcp.pop %v1912
        %v1923 = vrcp.pop %v1915
        %v1924 = vrcp.pop %v1918
        %v1925 = vrcp.pop %v1921
        %v1926 = vmul.f32 %v1903, %v1922
        %v1927 = vmul.f32 %v1905, %v1923
        %v1928 = vmul.f32 %v1907, %v1924
        %v1929 = vmul.f32 %v1909, %v1925
        %1930 = vst.msk [vmem:[%s519] sm:$0xff] %vm1309, %v1926
        %1931 = vst.msk [vmem:[%s519 + $0x8] sm:$0xff] %vm1309, %v1927
        %1932 = vst.msk [vmem:[%s519 + $0x10] sm:$0xff] %vm1309, %v1928
        %1933 = vst.msk [vmem:[%s519 + $0x18] sm:$0xff] %vm1309, %v1929
        %v1935 = vsel %vm1309, %v1926, 0
        %1937 = vmatprep.subr.mxu0 0.0
        %1938 = vmatpush1.msra.mxu0 0.0
        %1939 = vmatprep.subr.mxu0 0.0
        %1940 = vmatpush1.msra.mxu0 0.0
        %1941 = vmatprep.subr.mxu0 0.0
        %1942 = vmatpush1.msra.mxu0 0.0
        %1943 = vmatprep.subr.mxu0 0.0
        %1944 = vmatpush1.msra.mxu0 0.0
        %1945 = vmatprep.subr.mxu0 0.0
        %1946 = vmatpush1.msra.mxu0 0.0
        %1947 = vmatprep.subr.mxu0 0.0
        %1948 = vmatpush1.msra.mxu0 0.0
        %1949 = vmatprep.subr.mxu0 0.0
        %1950 = vmatpush1.msra.mxu0 0.0
        %1951 = vmatprep.subr.mxu0 0.0
        %1952 = vmatpush1.msra.mxu0 0.0
        %1953 = vmatprep.subr.mxu0 0.0
        %1954 = vmatpush1.msra.mxu0 0.0
        %1955 = vmatprep.subr.mxu0 0.0
        %1956 = vmatpush1.msra.mxu0 0.0
        %1957 = vmatprep.subr.mxu0 0.0
        %1958 = vmatpush1.msra.mxu0 0.0
        %1959 = vmatprep.subr.mxu0 0.0
        %1960 = vmatpush1.msra.mxu0 0.0
        %1961 = vmatprep.subr.mxu0 0.0
        %1962 = vmatpush1.msra.mxu0 0.0
        %1963 = vmatprep.subr.mxu0 0.0
        %1964 = vmatpush1.msra.mxu0 0.0
        %1965 = vmatprep.subr.mxu0 0.0
        %1966 = vmatpush1.msra.mxu0 0.0
        %1967 = vmatprep.subr.mxu0 0.0
        %1968 = vmatpush1.msra.mxu0 %v1566
        %1969 = vmatprep.subr.mxu0 0.0
        %1970 = vmatpush2.msra.mxu0 0.0
        %1971 = vmatprep.subr.mxu0 0.0
        %1972 = vmatpush2.msra.mxu0 0.0
        %1973 = vmatprep.subr.mxu0 0.0
        %1974 = vmatpush2.msra.mxu0 0.0
        %1975 = vmatprep.subr.mxu0 0.0
        %1976 = vmatpush2.msra.mxu0 0.0
        %1977 = vmatprep.subr.mxu0 0.0
        %1978 = vmatpush2.msra.mxu0 0.0
        %1979 = vmatprep.subr.mxu0 0.0
        %1980 = vmatpush2.msra.mxu0 0.0
        %1981 = vmatprep.subr.mxu0 0.0
        %1982 = vmatpush2.msra.mxu0 0.0
        %1983 = vmatprep.subr.mxu0 0.0
        %1984 = vmatpush2.msra.mxu0 0.0
        %1985 = vmatprep.subr.mxu0 0.0
        %1986 = vmatpush2.msra.mxu0 0.0
        %1987 = vmatprep.subr.mxu0 0.0
        %1988 = vmatpush2.msra.mxu0 0.0
        %1989 = vmatprep.subr.mxu0 0.0
        %1990 = vmatpush2.msra.mxu0 0.0
        %1991 = vmatprep.subr.mxu0 0.0
        %1992 = vmatpush2.msra.mxu0 0.0
        %1993 = vmatprep.subr.mxu0 0.0
        %1994 = vmatpush2.msra.mxu0 0.0
        %1995 = vmatprep.subr.mxu0 0.0
        %1996 = vmatpush2.msra.mxu0 0.0
        %1997 = vmatprep.subr.mxu0 0.0
        %1998 = vmatpush2.msra.mxu0 0.0
        %1999 = vmatprep.subr.mxu0 0.0
        %2000 = vmatpush2.msra.mxu0 0.0
        %2001 = vmatprep.mubr.f32.mxu0 0.0
        %2002 = vmatmul.mubr.f32.gmra.mxu0 %v1935
        %v2003 = vpop.f32.mrf.mxu0
        %v2004 = vadd.f32 0.0, %v2003
        %v2005 = vpop.f32.mrf.mxu0
        %2006 = vdwg.mxu0
        %v2008 = vsel %vm1309, %v1927, 0
        %2010 = vmatprep.subr.mxu0 0.0
        %2011 = vmatpush1.msra.mxu0 0.0
        %2012 = vmatprep.subr.mxu0 0.0
        %2013 = vmatpush1.msra.mxu0 0.0
        %2014 = vmatprep.subr.mxu0 0.0
        %2015 = vmatpush1.msra.mxu0 0.0
        %2016 = vmatprep.subr.mxu0 0.0
        %2017 = vmatpush1.msra.mxu0 0.0
        %2018 = vmatprep.subr.mxu0 0.0
        %2019 = vmatpush1.msra.mxu0 0.0
        %2020 = vmatprep.subr.mxu0 0.0
        %2021 = vmatpush1.msra.mxu0 0.0
        %2022 = vmatprep.subr.mxu0 0.0
        %2023 = vmatpush1.msra.mxu0 0.0
        %2024 = vmatprep.subr.mxu0 0.0
        %2025 = vmatpush1.msra.mxu0 0.0
        %2026 = vmatprep.subr.mxu0 0.0
        %2027 = vmatpush1.msra.mxu0 0.0
        %2028 = vmatprep.subr.mxu0 0.0
        %2029 = vmatpush1.msra.mxu0 0.0
        %2030 = vmatprep.subr.mxu0 0.0
        %2031 = vmatpush1.msra.mxu0 0.0
        %2032 = vmatprep.subr.mxu0 0.0
        %2033 = vmatpush1.msra.mxu0 0.0
        %2034 = vmatprep.subr.mxu0 0.0
        %2035 = vmatpush1.msra.mxu0 0.0
        %2036 = vmatprep.subr.mxu0 0.0
        %2037 = vmatpush1.msra.mxu0 0.0
        %2038 = vmatprep.subr.mxu0 0.0
        %2039 = vmatpush1.msra.mxu0 0.0
        %2040 = vmatprep.subr.mxu0 0.0
        %2041 = vmatpush1.msra.mxu0 %v1567
        %2042 = vmatprep.subr.mxu0 0.0
        %2043 = vmatpush2.msra.mxu0 0.0
        %2044 = vmatprep.subr.mxu0 0.0
        %2045 = vmatpush2.msra.mxu0 0.0
        %2046 = vmatprep.subr.mxu0 0.0
        %2047 = vmatpush2.msra.mxu0 0.0
        %2048 = vmatprep.subr.mxu0 0.0
        %2049 = vmatpush2.msra.mxu0 0.0
        %2050 = vmatprep.subr.mxu0 0.0
        %2051 = vmatpush2.msra.mxu0 0.0
        %2052 = vmatprep.subr.mxu0 0.0
        %2053 = vmatpush2.msra.mxu0 0.0
        %2054 = vmatprep.subr.mxu0 0.0
        %2055 = vmatpush2.msra.mxu0 0.0
        %2056 = vmatprep.subr.mxu0 0.0
        %2057 = vmatpush2.msra.mxu0 0.0
        %2058 = vmatprep.subr.mxu0 0.0
        %2059 = vmatpush2.msra.mxu0 0.0
        %2060 = vmatprep.subr.mxu0 0.0
        %2061 = vmatpush2.msra.mxu0 0.0
        %2062 = vmatprep.subr.mxu0 0.0
        %2063 = vmatpush2.msra.mxu0 0.0
        %2064 = vmatprep.subr.mxu0 0.0
        %2065 = vmatpush2.msra.mxu0 0.0
        %2066 = vmatprep.subr.mxu0 0.0
        %2067 = vmatpush2.msra.mxu0 0.0
        %2068 = vmatprep.subr.mxu0 0.0
        %2069 = vmatpush2.msra.mxu0 0.0
        %2070 = vmatprep.subr.mxu0 0.0
        %2071 = vmatpush2.msra.mxu0 0.0
        %2072 = vmatprep.subr.mxu0 0.0
        %2073 = vmatpush2.msra.mxu0 0.0
        %2074 = vmatprep.mubr.f32.mxu0 0.0
        %2075 = vmatmul.mubr.f32.gmra.mxu0 %v2008
        %v2076 = vpop.f32.mrf.mxu0
        %v2077 = vadd.f32 0.0, %v2076
        %v2078 = vpop.f32.mrf.mxu0
        %2079 = vdwg.mxu0
        %v2081 = vsel %vm1309, %v1928, 0
        %2083 = vmatprep.subr.mxu0 0.0
        %2084 = vmatpush1.msra.mxu0 0.0
        %2085 = vmatprep.subr.mxu0 0.0
        %2086 = vmatpush1.msra.mxu0 0.0
        %2087 = vmatprep.subr.mxu0 0.0
        %2088 = vmatpush1.msra.mxu0 0.0
        %2089 = vmatprep.subr.mxu0 0.0
        %2090 = vmatpush1.msra.mxu0 0.0
        %2091 = vmatprep.subr.mxu0 0.0
        %2092 = vmatpush1.msra.mxu0 0.0
        %2093 = vmatprep.subr.mxu0 0.0
        %2094 = vmatpush1.msra.mxu0 0.0
        %2095 = vmatprep.subr.mxu0 0.0
        %2096 = vmatpush1.msra.mxu0 0.0
        %2097 = vmatprep.subr.mxu0 0.0
        %2098 = vmatpush1.msra.mxu0 0.0
        %2099 = vmatprep.subr.mxu0 0.0
        %2100 = vmatpush1.msra.mxu0 0.0
        %2101 = vmatprep.subr.mxu0 0.0
        %2102 = vmatpush1.msra.mxu0 0.0
        %2103 = vmatprep.subr.mxu0 0.0
        %2104 = vmatpush1.msra.mxu0 0.0
        %2105 = vmatprep.subr.mxu0 0.0
        %2106 = vmatpush1.msra.mxu0 0.0
        %2107 = vmatprep.subr.mxu0 0.0
        %2108 = vmatpush1.msra.mxu0 0.0
        %2109 = vmatprep.subr.mxu0 0.0
        %2110 = vmatpush1.msra.mxu0 0.0
        %2111 = vmatprep.subr.mxu0 0.0
        %2112 = vmatpush1.msra.mxu0 0.0
        %2113 = vmatprep.subr.mxu0 0.0
        %2114 = vmatpush1.msra.mxu0 %v1568
        %2115 = vmatprep.subr.mxu0 0.0
        %2116 = vmatpush2.msra.mxu0 0.0
        %2117 = vmatprep.subr.mxu0 0.0
        %2118 = vmatpush2.msra.mxu0 0.0
        %2119 = vmatprep.subr.mxu0 0.0
        %2120 = vmatpush2.msra.mxu0 0.0
        %2121 = vmatprep.subr.mxu0 0.0
        %2122 = vmatpush2.msra.mxu0 0.0
        %2123 = vmatprep.subr.mxu0 0.0
        %2124 = vmatpush2.msra.mxu0 0.0
        %2125 = vmatprep.subr.mxu0 0.0
        %2126 = vmatpush2.msra.mxu0 0.0
        %2127 = vmatprep.subr.mxu0 0.0
        %2128 = vmatpush2.msra.mxu0 0.0
        %2129 = vmatprep.subr.mxu0 0.0
        %2130 = vmatpush2.msra.mxu0 0.0
        %2131 = vmatprep.subr.mxu0 0.0
        %2132 = vmatpush2.msra.mxu0 0.0
        %2133 = vmatprep.subr.mxu0 0.0
        %2134 = vmatpush2.msra.mxu0 0.0
        %2135 = vmatprep.subr.mxu0 0.0
        %2136 = vmatpush2.msra.mxu0 0.0
        %2137 = vmatprep.subr.mxu0 0.0
        %2138 = vmatpush2.msra.mxu0 0.0
        %2139 = vmatprep.subr.mxu0 0.0
        %2140 = vmatpush2.msra.mxu0 0.0
        %2141 = vmatprep.subr.mxu0 0.0
        %2142 = vmatpush2.msra.mxu0 0.0
        %2143 = vmatprep.subr.mxu0 0.0
        %2144 = vmatpush2.msra.mxu0 0.0
        %2145 = vmatprep.subr.mxu0 0.0
        %2146 = vmatpush2.msra.mxu0 0.0
        %2147 = vmatprep.mubr.f32.mxu0 0.0
        %2148 = vmatmul.mubr.f32.gmra.mxu0 %v2081
        %v2149 = vpop.f32.mrf.mxu0
        %v2150 = vadd.f32 0.0, %v2149
        %v2151 = vpop.f32.mrf.mxu0
        %2152 = vdwg.mxu0
        %v2154 = vsel %vm1309, %v1929, 0
        %2156 = vmatprep.subr.mxu0 0.0
        %2157 = vmatpush1.msra.mxu0 0.0
        %2158 = vmatprep.subr.mxu0 0.0
        %2159 = vmatpush1.msra.mxu0 0.0
        %2160 = vmatprep.subr.mxu0 0.0
        %2161 = vmatpush1.msra.mxu0 0.0
        %2162 = vmatprep.subr.mxu0 0.0
        %2163 = vmatpush1.msra.mxu0 0.0
        %2164 = vmatprep.subr.mxu0 0.0
        %2165 = vmatpush1.msra.mxu0 0.0
        %2166 = vmatprep.subr.mxu0 0.0
        %2167 = vmatpush1.msra.mxu0 0.0
        %2168 = vmatprep.subr.mxu0 0.0
        %2169 = vmatpush1.msra.mxu0 0.0
        %2170 = vmatprep.subr.mxu0 0.0
        %2171 = vmatpush1.msra.mxu0 0.0
        %2172 = vmatprep.subr.mxu0 0.0
        %2173 = vmatpush1.msra.mxu0 0.0
        %2174 = vmatprep.subr.mxu0 0.0
        %2175 = vmatpush1.msra.mxu0 0.0
        %2176 = vmatprep.subr.mxu0 0.0
        %2177 = vmatpush1.msra.mxu0 0.0
        %2178 = vmatprep.subr.mxu0 0.0
        %2179 = vmatpush1.msra.mxu0 0.0
        %2180 = vmatprep.subr.mxu0 0.0
        %2181 = vmatpush1.msra.mxu0 0.0
        %2182 = vmatprep.subr.mxu0 0.0
        %2183 = vmatpush1.msra.mxu0 0.0
        %2184 = vmatprep.subr.mxu0 0.0
        %2185 = vmatpush1.msra.mxu0 0.0
        %2186 = vmatprep.subr.mxu0 0.0
        %2187 = vmatpush1.msra.mxu0 %v1569
        %2188 = vmatprep.subr.mxu0 0.0
        %2189 = vmatpush2.msra.mxu0 0.0
        %2190 = vmatprep.subr.mxu0 0.0
        %2191 = vmatpush2.msra.mxu0 0.0
        %2192 = vmatprep.subr.mxu0 0.0
        %2193 = vmatpush2.msra.mxu0 0.0
        %2194 = vmatprep.subr.mxu0 0.0
        %2195 = vmatpush2.msra.mxu0 0.0
        %2196 = vmatprep.subr.mxu0 0.0
        %2197 = vmatpush2.msra.mxu0 0.0
        %2198 = vmatprep.subr.mxu0 0.0
        %2199 = vmatpush2.msra.mxu0 0.0
        %2200 = vmatprep.subr.mxu0 0.0
        %2201 = vmatpush2.msra.mxu0 0.0
        %2202 = vmatprep.subr.mxu0 0.0
        %2203 = vmatpush2.msra.mxu0 0.0
        %2204 = vmatprep.subr.mxu0 0.0
        %2205 = vmatpush2.msra.mxu0 0.0
        %2206 = vmatprep.subr.mxu0 0.0
        %2207 = vmatpush2.msra.mxu0 0.0
        %2208 = vmatprep.subr.mxu0 0.0
        %2209 = vmatpush2.msra.mxu0 0.0
        %2210 = vmatprep.subr.mxu0 0.0
        %2211 = vmatpush2.msra.mxu0 0.0
        %2212 = vmatprep.subr.mxu0 0.0
        %2213 = vmatpush2.msra.mxu0 0.0
        %2214 = vmatprep.subr.mxu0 0.0
        %2215 = vmatpush2.msra.mxu0 0.0
        %2216 = vmatprep.subr.mxu0 0.0
        %2217 = vmatpush2.msra.mxu0 0.0
        %2218 = vmatprep.subr.mxu0 0.0
        %2219 = vmatpush2.msra.mxu0 0.0
        %2220 = vmatprep.mubr.f32.mxu0 0.0
        %2221 = vmatmul.mubr.f32.gmra.mxu0 %v2154
        %v2222 = vpop.f32.mrf.mxu0
        %v2223 = vadd.f32 0.0, %v2222
        %v2224 = vpop.f32.mrf.mxu0
        %2225 = vdwg.mxu0
        %v2226 = vld [vmem:[%s9] sm:$0xff]
        %v2227 = vld [vmem:[%s9 + $0x8] sm:$0xff]
        %v2228 = vld [vmem:[%s9 + $0x10] sm:$0xff]
        %v2229 = vld [vmem:[%s9 + $0x18] sm:$0xff]
        %v2231 = vsel %vm1309, %v2004, 0
        %2233 = vmatprep.subr.mxu0 0.0
        %2234 = vmatpush1.msra.mxu0 0.0
        %2235 = vmatprep.subr.mxu0 0.0
        %2236 = vmatpush1.msra.mxu0 0.0
        %2237 = vmatprep.subr.mxu0 0.0
        %2238 = vmatpush1.msra.mxu0 0.0
        %2239 = vmatprep.subr.mxu0 0.0
        %2240 = vmatpush1.msra.mxu0 0.0
        %2241 = vmatprep.subr.mxu0 0.0
        %2242 = vmatpush1.msra.mxu0 0.0
        %2243 = vmatprep.subr.mxu0 0.0
        %2244 = vmatpush1.msra.mxu0 0.0
        %2245 = vmatprep.subr.mxu0 0.0
        %2246 = vmatpush1.msra.mxu0 0.0
        %2247 = vmatprep.subr.mxu0 0.0
        %2248 = vmatpush1.msra.mxu0 0.0
        %2249 = vmatprep.subr.mxu0 0.0
        %2250 = vmatpush1.msra.mxu0 0.0
        %2251 = vmatprep.subr.mxu0 0.0
        %2252 = vmatpush1.msra.mxu0 0.0
        %2253 = vmatprep.subr.mxu0 0.0
        %2254 = vmatpush1.msra.mxu0 0.0
        %2255 = vmatprep.subr.mxu0 0.0
        %2256 = vmatpush1.msra.mxu0 0.0
        %2257 = vmatprep.subr.mxu0 0.0
        %2258 = vmatpush1.msra.mxu0 0.0
        %2259 = vmatprep.subr.mxu0 0.0
        %2260 = vmatpush1.msra.mxu0 0.0
        %2261 = vmatprep.subr.mxu0 0.0
        %2262 = vmatpush1.msra.mxu0 0.0
        %2263 = vmatprep.subr.mxu0 0.0
        %2264 = vmatpush1.msra.mxu0 %v2226
        %2265 = vmatprep.subr.mxu0 0.0
        %2266 = vmatpush2.msra.mxu0 0.0
        %2267 = vmatprep.subr.mxu0 0.0
        %2268 = vmatpush2.msra.mxu0 0.0
        %2269 = vmatprep.subr.mxu0 0.0
        %2270 = vmatpush2.msra.mxu0 0.0
        %2271 = vmatprep.subr.mxu0 0.0
        %2272 = vmatpush2.msra.mxu0 0.0
        %2273 = vmatprep.subr.mxu0 0.0
        %2274 = vmatpush2.msra.mxu0 0.0
        %2275 = vmatprep.subr.mxu0 0.0
        %2276 = vmatpush2.msra.mxu0 0.0
        %2277 = vmatprep.subr.mxu0 0.0
        %2278 = vmatpush2.msra.mxu0 0.0
        %2279 = vmatprep.subr.mxu0 0.0
        %2280 = vmatpush2.msra.mxu0 0.0
        %2281 = vmatprep.subr.mxu0 0.0
        %2282 = vmatpush2.msra.mxu0 0.0
        %2283 = vmatprep.subr.mxu0 0.0
        %2284 = vmatpush2.msra.mxu0 0.0
        %2285 = vmatprep.subr.mxu0 0.0
        %2286 = vmatpush2.msra.mxu0 0.0
        %2287 = vmatprep.subr.mxu0 0.0
        %2288 = vmatpush2.msra.mxu0 0.0
        %2289 = vmatprep.subr.mxu0 0.0
        %2290 = vmatpush2.msra.mxu0 0.0
        %2291 = vmatprep.subr.mxu0 0.0
        %2292 = vmatpush2.msra.mxu0 0.0
        %2293 = vmatprep.subr.mxu0 0.0
        %2294 = vmatpush2.msra.mxu0 0.0
        %2295 = vmatprep.subr.mxu0 0.0
        %2296 = vmatpush2.msra.mxu0 0.0
        %2297 = vmatprep.mubr.f32.mxu0 0.0
        %2298 = vmatmul.mubr.f32.gmra.mxu0 %v2231
        %v2299 = vpop.f32.mrf.mxu0
        %v2300 = vadd.f32 0.0, %v2299
        %v2301 = vpop.f32.mrf.mxu0
        %2302 = vdwg.mxu0
        %v2304 = vsel %vm1309, %v2077, 0
        %2306 = vmatprep.subr.mxu0 0.0
        %2307 = vmatpush1.msra.mxu0 0.0
        %2308 = vmatprep.subr.mxu0 0.0
        %2309 = vmatpush1.msra.mxu0 0.0
        %2310 = vmatprep.subr.mxu0 0.0
        %2311 = vmatpush1.msra.mxu0 0.0
        %2312 = vmatprep.subr.mxu0 0.0
        %2313 = vmatpush1.msra.mxu0 0.0
        %2314 = vmatprep.subr.mxu0 0.0
        %2315 = vmatpush1.msra.mxu0 0.0
        %2316 = vmatprep.subr.mxu0 0.0
        %2317 = vmatpush1.msra.mxu0 0.0
        %2318 = vmatprep.subr.mxu0 0.0
        %2319 = vmatpush1.msra.mxu0 0.0
        %2320 = vmatprep.subr.mxu0 0.0
        %2321 = vmatpush1.msra.mxu0 0.0
        %2322 = vmatprep.subr.mxu0 0.0
        %2323 = vmatpush1.msra.mxu0 0.0
        %2324 = vmatprep.subr.mxu0 0.0
        %2325 = vmatpush1.msra.mxu0 0.0
        %2326 = vmatprep.subr.mxu0 0.0
        %2327 = vmatpush1.msra.mxu0 0.0
        %2328 = vmatprep.subr.mxu0 0.0
        %2329 = vmatpush1.msra.mxu0 0.0
        %2330 = vmatprep.subr.mxu0 0.0
        %2331 = vmatpush1.msra.mxu0 0.0
        %2332 = vmatprep.subr.mxu0 0.0
        %2333 = vmatpush1.msra.mxu0 0.0
        %2334 = vmatprep.subr.mxu0 0.0
        %2335 = vmatpush1.msra.mxu0 0.0
        %2336 = vmatprep.subr.mxu0 0.0
        %2337 = vmatpush1.msra.mxu0 %v2227
        %2338 = vmatprep.subr.mxu0 0.0
        %2339 = vmatpush2.msra.mxu0 0.0
        %2340 = vmatprep.subr.mxu0 0.0
        %2341 = vmatpush2.msra.mxu0 0.0
        %2342 = vmatprep.subr.mxu0 0.0
        %2343 = vmatpush2.msra.mxu0 0.0
        %2344 = vmatprep.subr.mxu0 0.0
        %2345 = vmatpush2.msra.mxu0 0.0
        %2346 = vmatprep.subr.mxu0 0.0
        %2347 = vmatpush2.msra.mxu0 0.0
        %2348 = vmatprep.subr.mxu0 0.0
        %2349 = vmatpush2.msra.mxu0 0.0
        %2350 = vmatprep.subr.mxu0 0.0
        %2351 = vmatpush2.msra.mxu0 0.0
        %2352 = vmatprep.subr.mxu0 0.0
        %2353 = vmatpush2.msra.mxu0 0.0
        %2354 = vmatprep.subr.mxu0 0.0
        %2355 = vmatpush2.msra.mxu0 0.0
        %2356 = vmatprep.subr.mxu0 0.0
        %2357 = vmatpush2.msra.mxu0 0.0
        %2358 = vmatprep.subr.mxu0 0.0
        %2359 = vmatpush2.msra.mxu0 0.0
        %2360 = vmatprep.subr.mxu0 0.0
        %2361 = vmatpush2.msra.mxu0 0.0
        %2362 = vmatprep.subr.mxu0 0.0
        %2363 = vmatpush2.msra.mxu0 0.0
        %2364 = vmatprep.subr.mxu0 0.0
        %2365 = vmatpush2.msra.mxu0 0.0
        %2366 = vmatprep.subr.mxu0 0.0
        %2367 = vmatpush2.msra.mxu0 0.0
        %2368 = vmatprep.subr.mxu0 0.0
        %2369 = vmatpush2.msra.mxu0 0.0
        %2370 = vmatprep.mubr.f32.mxu0 0.0
        %2371 = vmatmul.mubr.f32.gmra.mxu0 %v2304
        %v2372 = vpop.f32.mrf.mxu0
        %v2373 = vadd.f32 0.0, %v2372
        %v2374 = vpop.f32.mrf.mxu0
        %2375 = vdwg.mxu0
        %v2377 = vsel %vm1309, %v2150, 0
        %2379 = vmatprep.subr.mxu0 0.0
        %2380 = vmatpush1.msra.mxu0 0.0
        %2381 = vmatprep.subr.mxu0 0.0
        %2382 = vmatpush1.msra.mxu0 0.0
        %2383 = vmatprep.subr.mxu0 0.0
        %2384 = vmatpush1.msra.mxu0 0.0
        %2385 = vmatprep.subr.mxu0 0.0
        %2386 = vmatpush1.msra.mxu0 0.0
        %2387 = vmatprep.subr.mxu0 0.0
        %2388 = vmatpush1.msra.mxu0 0.0
        %2389 = vmatprep.subr.mxu0 0.0
        %2390 = vmatpush1.msra.mxu0 0.0
        %2391 = vmatprep.subr.mxu0 0.0
        %2392 = vmatpush1.msra.mxu0 0.0
        %2393 = vmatprep.subr.mxu0 0.0
        %2394 = vmatpush1.msra.mxu0 0.0
        %2395 = vmatprep.subr.mxu0 0.0
        %2396 = vmatpush1.msra.mxu0 0.0
        %2397 = vmatprep.subr.mxu0 0.0
        %2398 = vmatpush1.msra.mxu0 0.0
        %2399 = vmatprep.subr.mxu0 0.0
        %2400 = vmatpush1.msra.mxu0 0.0
        %2401 = vmatprep.subr.mxu0 0.0
        %2402 = vmatpush1.msra.mxu0 0.0
        %2403 = vmatprep.subr.mxu0 0.0
        %2404 = vmatpush1.msra.mxu0 0.0
        %2405 = vmatprep.subr.mxu0 0.0
        %2406 = vmatpush1.msra.mxu0 0.0
        %2407 = vmatprep.subr.mxu0 0.0
        %2408 = vmatpush1.msra.mxu0 0.0
        %2409 = vmatprep.subr.mxu0 0.0
        %2410 = vmatpush1.msra.mxu0 %v2228
        %2411 = vmatprep.subr.mxu0 0.0
        %2412 = vmatpush2.msra.mxu0 0.0
        %2413 = vmatprep.subr.mxu0 0.0
        %2414 = vmatpush2.msra.mxu0 0.0
        %2415 = vmatprep.subr.mxu0 0.0
        %2416 = vmatpush2.msra.mxu0 0.0
        %2417 = vmatprep.subr.mxu0 0.0
        %2418 = vmatpush2.msra.mxu0 0.0
        %2419 = vmatprep.subr.mxu0 0.0
        %2420 = vmatpush2.msra.mxu0 0.0
        %2421 = vmatprep.subr.mxu0 0.0
        %2422 = vmatpush2.msra.mxu0 0.0
        %2423 = vmatprep.subr.mxu0 0.0
        %2424 = vmatpush2.msra.mxu0 0.0
        %2425 = vmatprep.subr.mxu0 0.0
        %2426 = vmatpush2.msra.mxu0 0.0
        %2427 = vmatprep.subr.mxu0 0.0
        %2428 = vmatpush2.msra.mxu0 0.0
        %2429 = vmatprep.subr.mxu0 0.0
        %2430 = vmatpush2.msra.mxu0 0.0
        %2431 = vmatprep.subr.mxu0 0.0
        %2432 = vmatpush2.msra.mxu0 0.0
        %2433 = vmatprep.subr.mxu0 0.0
        %2434 = vmatpush2.msra.mxu0 0.0
        %2435 = vmatprep.subr.mxu0 0.0
        %2436 = vmatpush2.msra.mxu0 0.0
        %2437 = vmatprep.subr.mxu0 0.0
        %2438 = vmatpush2.msra.mxu0 0.0
        %2439 = vmatprep.subr.mxu0 0.0
        %2440 = vmatpush2.msra.mxu0 0.0
        %2441 = vmatprep.subr.mxu0 0.0
        %2442 = vmatpush2.msra.mxu0 0.0
        %2443 = vmatprep.mubr.f32.mxu0 0.0
        %2444 = vmatmul.mubr.f32.gmra.mxu0 %v2377
        %v2445 = vpop.f32.mrf.mxu0
        %v2446 = vadd.f32 0.0, %v2445
        %v2447 = vpop.f32.mrf.mxu0
        %2448 = vdwg.mxu0
        %v2450 = vsel %vm1309, %v2223, 0
        %2452 = vmatprep.subr.mxu0 0.0
        %2453 = vmatpush1.msra.mxu0 0.0
        %2454 = vmatprep.subr.mxu0 0.0
        %2455 = vmatpush1.msra.mxu0 0.0
        %2456 = vmatprep.subr.mxu0 0.0
        %2457 = vmatpush1.msra.mxu0 0.0
        %2458 = vmatprep.subr.mxu0 0.0
        %2459 = vmatpush1.msra.mxu0 0.0
        %2460 = vmatprep.subr.mxu0 0.0
        %2461 = vmatpush1.msra.mxu0 0.0
        %2462 = vmatprep.subr.mxu0 0.0
        %2463 = vmatpush1.msra.mxu0 0.0
        %2464 = vmatprep.subr.mxu0 0.0
        %2465 = vmatpush1.msra.mxu0 0.0
        %2466 = vmatprep.subr.mxu0 0.0
        %2467 = vmatpush1.msra.mxu0 0.0
        %2468 = vmatprep.subr.mxu0 0.0
        %2469 = vmatpush1.msra.mxu0 0.0
        %2470 = vmatprep.subr.mxu0 0.0
        %2471 = vmatpush1.msra.mxu0 0.0
        %2472 = vmatprep.subr.mxu0 0.0
        %2473 = vmatpush1.msra.mxu0 0.0
        %2474 = vmatprep.subr.mxu0 0.0
        %2475 = vmatpush1.msra.mxu0 0.0
        %2476 = vmatprep.subr.mxu0 0.0
        %2477 = vmatpush1.msra.mxu0 0.0
        %2478 = vmatprep.subr.mxu0 0.0
        %2479 = vmatpush1.msra.mxu0 0.0
        %2480 = vmatprep.subr.mxu0 0.0
        %2481 = vmatpush1.msra.mxu0 0.0
        %2482 = vmatprep.subr.mxu0 0.0
        %2483 = vmatpush1.msra.mxu0 %v2229
        %2484 = vmatprep.subr.mxu0 0.0
        %2485 = vmatpush2.msra.mxu0 0.0
        %2486 = vmatprep.subr.mxu0 0.0
        %2487 = vmatpush2.msra.mxu0 0.0
        %2488 = vmatprep.subr.mxu0 0.0
        %2489 = vmatpush2.msra.mxu0 0.0
        %2490 = vmatprep.subr.mxu0 0.0
        %2491 = vmatpush2.msra.mxu0 0.0
        %2492 = vmatprep.subr.mxu0 0.0
        %2493 = vmatpush2.msra.mxu0 0.0
        %2494 = vmatprep.subr.mxu0 0.0
        %2495 = vmatpush2.msra.mxu0 0.0
        %2496 = vmatprep.subr.mxu0 0.0
        %2497 = vmatpush2.msra.mxu0 0.0
        %2498 = vmatprep.subr.mxu0 0.0
        %2499 = vmatpush2.msra.mxu0 0.0
        %2500 = vmatprep.subr.mxu0 0.0
        %2501 = vmatpush2.msra.mxu0 0.0
        %2502 = vmatprep.subr.mxu0 0.0
        %2503 = vmatpush2.msra.mxu0 0.0
        %2504 = vmatprep.subr.mxu0 0.0
        %2505 = vmatpush2.msra.mxu0 0.0
        %2506 = vmatprep.subr.mxu0 0.0
        %2507 = vmatpush2.msra.mxu0 0.0
        %2508 = vmatprep.subr.mxu0 0.0
        %2509 = vmatpush2.msra.mxu0 0.0
        %2510 = vmatprep.subr.mxu0 0.0
        %2511 = vmatpush2.msra.mxu0 0.0
        %2512 = vmatprep.subr.mxu0 0.0
        %2513 = vmatpush2.msra.mxu0 0.0
        %2514 = vmatprep.subr.mxu0 0.0
        %2515 = vmatpush2.msra.mxu0 0.0
        %2516 = vmatprep.mubr.f32.mxu0 0.0
        %2517 = vmatmul.mubr.f32.gmra.mxu0 %v2450
        %v2518 = vpop.f32.mrf.mxu0
        %v2519 = vadd.f32 0.0, %v2518
        %v2520 = vpop.f32.mrf.mxu0
        %2521 = vdwg.mxu0
        %v2522 = vsel %vm1235, %v2300, 0.0
        %v2523 = vsel %vm1235, %v2373, 0.0
        %v2524 = vadd.f32 %v2522, %v2523
        %v2525 = vsel %vm1235, %v2446, 0.0
        %v2526 = vadd.f32 %v2524, %v2525
        %v2527 = vsel %vm1235, %v2519, 0.0
        %v2528 = vadd.f32 %v2526, %v2527
        %v2529 = vld [vmem:[%s10] sm:$0x1]
        %v2531 = vlaneseq
        %v2532 = vshrl.u32 %v2531, 7
        %v2533 = vsub.s32 0, %v2532
        %v2534 = vrot.slane %v2529, %v2533
        %v2536 = vadd.f32 %v2528, %v2534
        %v2537 = vld [vmem:[%s523] sm:$0xff]
        %v2538 = vadd.f32 %v2537, %v2536
        %v2539 = vsel %vm1235, %v2538, 0.0
        %2540 = vadd.xlane.f32.xlu0 %v2539
        %v2541 = vpop.xlane.xlu0 %2540
        %v2542 = vrcp.pop 32.0
        %v2543 = vmul.f32 %v2541, %v2542
        %v2544 = vsub.f32 %v2538, %v2543
        %v2545 = vmul.f32 %v2544, %v2544
        %v2546 = vsel %vm1235, %v2545, 0.0
        %2547 = vadd.xlane.f32.xlu0 %v2546
        %v2548 = vpop.xlane.xlu0 %2547
        %v2549 = vmul.f32 %v2548, %v2542
        %v2550 = vadd.f32 %v2549, 1e-05
        %v2551 = vrsqrt.pop %v2550
        %v2552 = vmul.f32 %v2544, %v2551
        %v2553 = vld [vmem:[%s11] sm:$0x1]
        %v2555 = vlaneseq
        %v2556 = vshrl.u32 %v2555, 7
        %v2557 = vsub.s32 0, %v2556
        %v2558 = vrot.slane %v2553, %v2557
        %v2560 = vmul.f32 %v2552, %v2558
        %v2561 = vld [vmem:[%s12] sm:$0x1]
        %v2563 = vlaneseq
        %v2564 = vshrl.u32 %v2563, 7
        %v2565 = vsub.s32 0, %v2564
        %v2566 = vrot.slane %v2561, %v2565
        %v2568 = vadd.f32 %v2560, %v2566
        %2569 = vst.msk [vmem:[%s512] sm:$0xff] %vm1235, %v2568
        %s2570 = sand.u32 %s344, 1
        %s2571 = scalar_lea.sflag [#allocation6], %s2570
        %s2572 = sand.u32 %s344, 1
        %s2573 = smul.addr %s2572, 8
        %s2574 = scalar_lea.vmem [#allocation5], %s2573
        %s2575 = sand.u32 %s372, 1
        %s2576 = scalar_lea.sflag [#allocation8], %s2575
        %s2577 = sand.u32 %s372, 1
        %s2578 = smul.addr %s2577, 32
        %s2579 = scalar_lea.vmem [#allocation7], %s2578
        // Predicated region
        $region77: #{tpu_custom_call.1} parent=71 // pred_check
          %p2580 = pneg %p354
        $region78: #{tpu_custom_call.1} parent=71 // pred_check_branch
          %2582 = sbr.rel (%p2580) target = $region80
        $region79: #{tpu_custom_call.1} parent=71 // pred_region
          %s2584 = ssub.s32 128, 128
          %2585 = vsyncadd %s2571, %s2584
          %s2586 = sadd.s32 %s37, %s36
          %s2587 = smul.addr %s2586, 128
          %s2588 = scalar_lea.hbm %s13, %s2587
          %s2590 = sshll.u32 %s2574, 4
          %s2591 = int_to_ptr.vmem [resolvable:$true] %s2590
          %2593 = dma.vmem_to_hbm [thread:$0]  %s2591, 128, %s2588, %s2571
        $region80: #{tpu_custom_call.1} parent=71 // pred_fallthru
          _
        // Predicated region
        $region81: #{tpu_custom_call.1} parent=71 // pred_check
          %p2594 = pneg %p382
        $region82: #{tpu_custom_call.1} parent=71 // pred_check_branch
          %2596 = sbr.rel (%p2594) target = $region84
        $region83: #{tpu_custom_call.1} parent=71 // pred_region
          %s2598 = ssub.s32 512, 512
          %2599 = vsyncadd %s2576, %s2598
          %s2600 = smul.addr %s36, 4
          %s2601 = sadd.s32 %s37, %s2600
          %s2602 = smul.addr %s2601, 128
          %s2603 = scalar_lea.hbm %s14, %s2602
          %s2604 = sshll.u32 %s2579, 4
          %s2605 = int_to_ptr.vmem [resolvable:$true] %s2604
          %2610 = dma.vmem_to_hbm [thread:$0]  %s2605, 512, %s2603, %s2576, 128, 128, 8
        $region84: #{tpu_custom_call.1} parent=71 // pred_fallthru
          _
      $region72: #{tpu_custom_call.1} parent=5 // pred_fallthru
        _
      %p2611 = scmp.le.s32.totalorder 2, %s27
      // Predicated region
      $region85: #{tpu_custom_call.1} parent=5 // pred_check
        %p2612 = pneg %p2611
      $region86: #{tpu_custom_call.1} parent=5 // pred_check_branch
        %2614 = sbr.rel (%p2612) target = $region88
      $region87: #{tpu_custom_call.1} parent=5 // pred_region
        %s2615 = ssub.s32 %s27, 2
        // Predicated region
        $region89: #{tpu_custom_call.1} parent=87 // pred_check
          %p2616 = pneg %p360
        $region90: #{tpu_custom_call.1} parent=87 // pred_check_branch
          %2618 = sbr.rel (%p2616) target = $region92
        $region91: #{tpu_custom_call.1} parent=87 // pred_region
          %s2619 = sand.u32 %s345, 1
          %s2620 = scalar_lea.sflag [#allocation6], %s2619
          %s2621 = sand.u32 %s345, 1
          %s2622 = smul.addr %s2621, 8
          %s2623 = scalar_lea.vmem [#allocation5], %s2622
          %2624 = dma.done %s2620, 128
        $region92: #{tpu_custom_call.1} parent=87 // pred_fallthru
          _
        // Predicated region
        $region93: #{tpu_custom_call.1} parent=87 // pred_check
          %p2625 = pneg %p388
        $region94: #{tpu_custom_call.1} parent=87 // pred_check_branch
          %2627 = sbr.rel (%p2625) target = $region96
        $region95: #{tpu_custom_call.1} parent=87 // pred_region
          %s2628 = sand.u32 %s373, 1
          %s2629 = scalar_lea.sflag [#allocation8], %s2628
          %s2630 = sand.u32 %s373, 1
          %s2631 = smul.addr %s2630, 32
          %s2632 = scalar_lea.vmem [#allocation7], %s2631
          %2633 = dma.done %s2629, 512
        $region96: #{tpu_custom_call.1} parent=87 // pred_fallthru
          _
      $region88: #{tpu_custom_call.1} parent=5 // pred_fallthru
        _
    $region6: #{tpu_custom_call.1} parent=1 // loop_footer
      %s31 = sadd.s32 1, %s27
    $region7: #{tpu_custom_call.1} parent=1 // loop_footer_branch
      %26 = sbr.rel target = $region3
    $region8: #{tpu_custom_call.1} parent=1 // loop_exit
      _
    %2634 = vsyncpa [#allocation6], 1
    %s2635 = scalar_lea.sflag [#allocation6], 1
    %2636 = vsyncpa %s2635, 1
    %2637 = vsyncpa [#allocation8], 1
    %s2638 = scalar_lea.sflag [#allocation8], 1
    %2639 = vsyncpa %s2638, 1

</llo_original>
